<compile_context>
chip_gen: v7x
topology: tpu7x:2x2x1
jax: 0.10.0
libtpu: 0.0.40
codegen_flags: <defaults>
</compile_context>

<pallas_src>
import math

import jax
import jax.numpy as jnp
from jax.experimental import pallas as pl
from jax.experimental.pallas import tpu as pltpu


# ----------------------------------------------------------------------------
# Pallas kernel: out = neg_coeff * g   (memory-bound elementwise scale)
# ----------------------------------------------------------------------------
def _neg_scale_kernel(neg_coeff_ref, g_ref, o_ref):
    # neg_coeff_ref: (1,) f32 in SMEM (scalar prefetch), already negated on
    # the host. Cast once to the grad dtype so bf16 tiles stay packed.
    c = neg_coeff_ref[0].astype(o_ref.dtype)
    o_ref[...] = g_ref[...] * c


_PALLAS_MIN_BYTES = 1 << 20   # below this, fused XLA multiply wins
_TILE_BYTES = 4 << 20         # per-block DMA budget (dtype-aware rows)


def _choose_lane_width(total):
    """Widest 128-multiple lane width dividing `total`; prefer >= 8 rows."""
    for lanes in (1024, 512, 256, 128):
        if total % lanes == 0 and total // lanes >= 8:
            return lanes
    for lanes in (1024, 512, 256, 128):
        if total % lanes == 0:
            return lanes
    return None


def _grid_semantics(n_blocks):
    # v7x has 2 TensorCores/chip: CORE_PARALLEL actually splits the row grid
    # across them (plain "parallel" barely changes codegen). On 1-TC chips
    # (v5e/v6e) stay on the portable "parallel" path.
    try:
        kind = jax.devices()[0].device_kind.lower()
    except Exception:  # pragma: no cover - best effort detection
        kind = ""
    if n_blocks >= 2 and "v7" in kind:
        return (pltpu.CORE_PARALLEL,)
    return ("parallel",)


def _pallas_neg_scale(g, coeff):
    """-coeff * g via a tiled, pipelined Pallas TPU kernel (lane-dense view)."""
    orig_shape = g.shape
    dtype = g.dtype
    total = int(g.size)
    itemsize = jnp.dtype(dtype).itemsize

    L = _choose_lane_width(total)
    assert L is not None and total % L == 0
    R = total // L
    g2d = g.reshape(R, L)

    # dtype-aware row tile: ~_TILE_BYTES per block, multiple of 8 sublanes.
    tr = max(8, (_TILE_BYTES // (L * itemsize)) // 8 * 8)
    TR = R if R <= tr else tr
    n_blocks = -(-R // TR)

    neg_coeff = (-jnp.asarray(coeff, jnp.float32)).reshape(1)

    out2d = pl.pallas_call(
        _neg_scale_kernel,
        out_shape=jax.ShapeDtypeStruct((R, L), dtype),
        grid_spec=pltpu.PrefetchScalarGridSpec(
            num_scalar_prefetch=1,                       # neg_coeff -> SMEM
            grid=(n_blocks,),
            in_specs=[pl.BlockSpec((TR, L), lambda i, c: (i, 0))],
            out_specs=pl.BlockSpec((TR, L), lambda i, c: (i, 0)),
        ),
        compiler_params=pltpu.CompilerParams(
            dimension_semantics=_grid_semantics(n_blocks),
            vmem_limit_bytes=48 << 20,
        ),
        cost_estimate=pl.CostEstimate(
            flops=total,
            transcendentals=0,
            bytes_accessed=2 * total * itemsize,
        ),
    )(neg_coeff, g2d)

    return out2d.reshape(orig_shape)


def _neg_scale(g, coeff):
    """Dispatch: fused XLA multiply for small/ragged grads, Pallas otherwise."""
    total = int(g.size)
    itemsize = jnp.dtype(g.dtype).itemsize
    if total * itemsize < _PALLAS_MIN_BYTES or _choose_lane_width(total) is None:
        # Let XLA fuse the trivial scale into adjacent backward ops; keep the
        # cotangent dtype (no f32 promotion for bf16 grads).
        return (-jnp.asarray(coeff, jnp.float32)).astype(g.dtype) * g
    return _pallas_neg_scale(g, coeff)


# ----------------------------------------------------------------------------
# Gradient reversal: fwd = identity (no kernel), bwd = -coeff * g.
# coeff is a runtime scalar -> compiled once, reused every step.
# ----------------------------------------------------------------------------
@jax.custom_vjp
def grad_reverse(coeff, x):
    del coeff
    return x


def _grad_reverse_fwd(coeff, x):
    return x, coeff


def _grad_reverse_bwd(coeff, g):
    # PyTorch returns None for coeff; JAX needs a zero cotangent whose aval
    # matches the primal coeff exactly (zeros_like on the residual does that).
    return jnp.zeros_like(coeff), _neg_scale(g, coeff)


grad_reverse.defvjp(_grad_reverse_fwd, _grad_reverse_bwd)


# Zero-coeff fast path (warm-up, first 25k steps): identity forward,
# zero cotangent backward — no kernel, g never read.
@jax.custom_vjp
def grad_reverse_zero(x):
    return x


def _grad_reverse_zero_fwd(x):
    return x, None


def _grad_reverse_zero_bwd(_res, g):
    return (jnp.zeros_like(g),)


grad_reverse_zero.defvjp(_grad_reverse_zero_fwd, _grad_reverse_zero_bwd)


# ----------------------------------------------------------------------------
# Module wrapper (mirrors MyGradientReverseModule)
# ----------------------------------------------------------------------------
def a_to_b_scheduler(step, a=0.0, b=1.0, gamma=10.0, max_iter=10000.0):
    # standard DANN-style ramp from a to b
    ans = a + (b - a) * (2.0 / (1.0 + math.exp(-gamma * step / max_iter)) - 1.0)
    return float(ans)


class MyGradientReverseModule:
    # TODO(synk): global_step/coeff are Python-side state (like the PyTorch
    # buffer); if __call__ is traced inside jit/scan the schedule is baked in
    # at trace time instead of advancing per step.
    def __init__(self, scheduler):
        self.scheduler = scheduler
        self.global_step = 0.0   # buffer 'global_step' (scalar)
        self.coeff = 0.0
        self.training = True

    def __call__(self, x):
        if self.global_step < 25000:
            self.coeff = 0.0
        else:
            self.coeff = float(self.scheduler(self.global_step - 25000))
        if self.training:
            self.global_step += 1.0
        if self.coeff == 0.0:
            return grad_reverse_zero(x)
        # Pass coeff as a traced runtime scalar so the backward kernel is
        # compiled once and reused every step after the warm-up.
        return grad_reverse(jnp.asarray(self.coeff, dtype=jnp.float32), x)


# ----------------------------------------------------------------------------
if __name__ == "__main__":
    key = jax.random.PRNGKey(0)
    # NCHW input, small shapes (module-level example)
    x = jax.random.normal(key, (2, 4, 16, 16), dtype=jnp.float32)

    module = MyGradientReverseModule(a_to_b_scheduler)

    # Forward pass (identity, no kernel)
    y = module(x)
    y = jax.block_until_ready(y)
    assert y.shape == x.shape and y.dtype == x.dtype
    assert jnp.allclose(y, x), "forward of GRL must be identity"

    # Warm-up phase: coeff == 0 -> zero gradient via fast path (no kernel)
    g0 = jax.grad(lambda xx: jnp.sum(grad_reverse_zero(xx)))(x)
    g0 = jax.block_until_ready(g0)
    assert jnp.allclose(g0, jnp.zeros_like(x)), "warm-up grad must be zero"

    # Post-warm-up, small grad: fused XLA path (-coeff * g), no Pallas launch.
    coeff2 = a_to_b_scheduler(5000.0)
    coeff_arr = jnp.asarray(coeff2, jnp.float32)
    g_small = jax.grad(lambda xx: jnp.sum(grad_reverse(coeff_arr, xx)))(x)
    g_small = jax.block_until_ready(g_small)
    assert jnp.allclose(g_small, -coeff2 * jnp.ones_like(x), atol=1e-6), \
        "backward must be -coeff * g (fused path)"

    # Post-warm-up, large grad: exercises the Pallas kernel path (8 MiB f32,
    # lane width 1024, two row blocks).
    x_big = jax.random.normal(jax.random.PRNGKey(0), (16, 32, 64, 64),
                              dtype=jnp.float32)
    g_big = jax.grad(lambda xx: jnp.sum(grad_reverse(coeff_arr, xx)))(x_big)
    g_big = jax.block_until_ready(g_big)
    assert g_big.shape == x_big.shape and g_big.dtype == x_big.dtype
    assert jnp.allclose(g_big, -coeff2 * jnp.ones_like(x_big), atol=1e-6), \
        "backward must be -coeff * g (Pallas path)"

    # bf16 cotangent: dtype-aware tile sizing + native-dtype multiply.
    x_bf = jnp.ones((16, 32, 64, 64), dtype=jnp.bfloat16)
    g_bf = jax.grad(lambda xx: jnp.sum(grad_reverse(coeff_arr, xx)))(x_bf)
    g_bf = jax.block_until_ready(g_bf)
    expected_bf = (-jnp.float32(coeff2)).astype(jnp.bfloat16)
    assert g_bf.dtype == jnp.bfloat16
    assert jnp.allclose(g_bf.astype(jnp.float32),
                        jnp.full(x_bf.shape, expected_bf, jnp.float32),
                        atol=1e-2), "bf16 backward must be -coeff * g"

    # Odd-size input: no pad/slice copies — falls back to the fused XLA path.
    x_odd = jax.random.normal(jax.random.PRNGKey(1), (3, 5, 7), dtype=jnp.float32)
    g_odd = jax.grad(lambda xx: jnp.sum(grad_reverse(coeff_arr, xx)))(x_odd)
    g_odd = jax.block_until_ready(g_odd)
    assert jnp.allclose(g_odd, -coeff2 * jnp.ones_like(x_odd), atol=1e-6)

    print("KERNEL_OK")
</pallas_src>

<mosaic_0001>
module attributes {stable_mosaic.version = 11 : i64} {
  func.func @_neg_scale_kernel(%arg0: i32, %arg1: memref<1xf32, #tpu.memory_space<smem>>, %arg2: memref<1024x1024xf32, #tpu.memory_space<vmem>>, %arg3: memref<1024x1024xf32, #tpu.memory_space<vmem>>) attributes {dimension_semantics = [#tpu.dimension_semantics<parallel>], iteration_bounds = array<i64: 2>, scalar_prefetch = 1 : i64, scratch_operands = 0 : i64, tpu.core_type = #tpu.core_type<tc>, window_params = [{transform_indices = @transform_0, window_bounds = array<i64: 1024, 1024>}, {transform_indices = @transform_1, window_bounds = array<i64: 1024, 1024>}]} {
    %c0 = arith.constant 0 : index
    %0 = memref.load %arg1[%c0] : memref<1xf32, #tpu.memory_space<smem>>
    %c0_0 = arith.constant 0 : index
    %c0_1 = arith.constant 0 : index
    %1 = vector.load %arg2[%c0_0, %c0_1] : memref<1024x1024xf32, #tpu.memory_space<vmem>>, vector<1024x1024xf32>
    %2 = vector.broadcast %0 : f32 to vector<1024x1024xf32>
    %3 = arith.mulf %1, %2 : vector<1024x1024xf32>
    %c0_2 = arith.constant 0 : index
    %c0_3 = arith.constant 0 : index
    %4 = vector.load %arg3[%c0_2, %c0_3] : memref<1024x1024xf32, #tpu.memory_space<vmem>>, vector<1024x1024xf32>
    tpu.vector_store %arg3[%c0_2, %c0_3], %3 {strides = array<i32>} : memref<1024x1024xf32, #tpu.memory_space<vmem>>, vector<1024x1024xf32>,
    return
  }
  func.func @transform_0(%arg0: i32, %arg1: memref<1xf32, #tpu.memory_space<smem>>) -> (i32, i32) {
    %c0_i32 = arith.constant 0 : i32
    %c0_i32_0 = arith.constant 0 : i32
    return %arg0, %c0_i32 : i32, i32
  }
  func.func @transform_1(%arg0: i32, %arg1: memref<1xf32, #tpu.memory_space<smem>>) -> (i32, i32) {
    %c0_i32 = arith.constant 0 : i32
    %c0_i32_0 = arith.constant 0 : i32
    return %arg0, %c0_i32 : i32, i32
  }
}

</mosaic_0001>

<llo_original>
// kernel: tpu_custom_call.1
$region0: #{tpu_custom_call.1}
  #allocation0 [shape = 'u32[]', space=smem, size = 0x4, offset = 0x4, fixed_abs, tag = 'smem constant byte address 0x4 - core index']
  #allocation1 [shape = 'u32[144,128]{1,0:T(1,128)}', space=vmem, size = 0x12000, scoped, tag = 'internal scratch']
  #allocation2 [shape = 's32[1]{0}', space=sflag, size = 0x4, scoped, tag = 'scoped memory for tpu_custom_call.1']
  #allocation3 [shape = 'f32[1]{0:T(128)S(6)}', space=smem, size = 0x200, scoped, tag = 'prefetched SMEM operand 0']
  %s0 = inlined_call_operand.<no memory space> [shape: f32[1], index: 0, kind: input, shape index: {}]
  %s1 = inlined_call_operand.hbm [shape: f32[2048,1024], index: 1, kind: input, shape index: {}]
  %s2 = inlined_call_operand.hbm [shape: f32[2048,1024], index: 2, kind: output, shape index: {}]
  %s3 = sld [smem:[#allocation0]]
  $region41: #{tpu_custom_call.1} parent=0
    _
  %s5 = ssub.s32 1, %s3
  %s6 = scalar_select 0, %s5, %s3
  %7 = sst [smem:[#allocation3]] %s0
  $region1: #{tpu_custom_call.1} parent=0
    #allocation4 [shape = 'u8[8388608]{0}', space=vmem, size = 0x800000, scoped, tag = 'input window, operand 1']
    #allocation5 [shape = 's32[2]{0}', space=sflag, size = 0x8, scoped, tag = 'scoped memory for tpu_custom_call.1']
    #allocation6 [shape = 's32[2]{0}', space=sflag, size = 0x8, scoped, tag = 'scoped memory for tpu_custom_call.1']
    #allocation7 [shape = 'u8[8388608]{0}', space=vmem, size = 0x800000, scoped, tag = 'output window, operand 0']
    %8 = vsyncpa [#allocation5], 0
    %s9 = scalar_lea.sflag [#allocation5], 1
    %10 = vsyncpa %s9, 0
    %11 = vsyncpa [#allocation6], 0
    %s12 = scalar_lea.sflag [#allocation6], 1
    %13 = vsyncpa %s12, 0
    loop: start=0, step=1, limit=4
    $region2: #{tpu_custom_call.1} parent=1 // loop_pre_header
      _
    $region3: #{tpu_custom_call.1} parent=1 // loop_header
      %s15 = sphi 0, %s19
      %p16 = scmp.ge.s32.totalorder %s15, 4
      %s25 = sphi 0, %s27
      %s28 = sphi 0, %s25
      %s29 = sphi 0, %s28
      %s45 = sphi 0, %s29
      %s51 = sphi 0, %s53
      %s54 = sphi 0, %s51
      %s55 = sphi 0, %s54
      %s71 = sphi 0, %s55
    $region4: #{tpu_custom_call.1} parent=1 // loop_header_branch
      %18 = sbr.rel (%p16) target = $region8
    $region5: #{tpu_custom_call.1} parent=1 // loop_body
      %s20 = ssub.s32 %s15, 1
      %s21 = ssub.s32 %s15, 2
      %s22 = sadd.s32 %s15, 1
      %s23 = ssub.s32 %s15, %s22
      %p24 = scmp.eq.s32.totalorder %s23, 0
      %s26 = sadd.s32 %s25, 1
      %s27 = scalar_select %p24, %s25, %s26
      %p30 = pneg %p24
      %p31 = scmp.eq.s32.totalorder %s15, 1
      %p32 = por %p30, %p31
      %p33 = scmp.ne.s32.totalorder %s25, %s28
      %p34 = scmp.eq.s32.totalorder %s15, 0
      %p35 = por %p33, %p34
      %p36 = scmp.ne.s32.totalorder %s25, %s28
      %p37 = scmp.eq.s32.totalorder %s20, 1
      %p38 = por %p36, %p37
      %p39 = scmp.ne.s32.totalorder %s28, %s29
      %p40 = scmp.eq.s32.totalorder %s20, 0
      %p41 = por %p39, %p40
      %p42 = scmp.ne.s32.totalorder %s28, %s29
      %p43 = scmp.eq.s32.totalorder %s21, 1
      %p44 = por %p42, %p43
      %p46 = scmp.ne.s32.totalorder %s29, %s45
      %p47 = scmp.eq.s32.totalorder %s21, 0
      %p48 = por %p46, %p47
      %s49 = ssub.s32 %s15, %s22
      %p50 = scmp.eq.s32.totalorder %s49, 0
      %s52 = sadd.s32 %s51, 1
      %s53 = scalar_select %p50, %s51, %s52
      %p56 = pneg %p50
      %p57 = scmp.eq.s32.totalorder %s15, 1
      %p58 = por %p56, %p57
      %p59 = scmp.ne.s32.totalorder %s51, %s54
      %p60 = scmp.eq.s32.totalorder %s15, 0
      %p61 = por %p59, %p60
      %p62 = scmp.ne.s32.totalorder %s51, %s54
      %p63 = scmp.eq.s32.totalorder %s20, 1
      %p64 = por %p62, %p63
      %p65 = scmp.ne.s32.totalorder %s54, %s55
      %p66 = scmp.eq.s32.totalorder %s20, 0
      %p67 = por %p65, %p66
      %p68 = scmp.ne.s32.totalorder %s54, %s55
      %p69 = scmp.eq.s32.totalorder %s21, 1
      %p70 = por %p68, %p69
      %p72 = scmp.ne.s32.totalorder %s55, %s71
      %p73 = scmp.eq.s32.totalorder %s21, 0
      %p74 = por %p72, %p73
      %p75 = scmp.le.s32.totalorder 1, %s15
      %p76 = scmp.lt.s32.totalorder %s15, 3
      %p77 = pnand %p75, %p76
      %p78 = pneg %p77
      // Predicated region
      $region9: #{tpu_custom_call.1} parent=5 // pred_check
        _
      $region10: #{tpu_custom_call.1} parent=5 // pred_check_branch
        %80 = sbr.rel (%p77) target = $region12
      $region11: #{tpu_custom_call.1} parent=5 // pred_region
        %s81 = ssub.s32 %s15, 1
      $region12: #{tpu_custom_call.1} parent=5 // pred_fallthru
        _
      %p82 = scmp.lt.s32.totalorder %s15, 2
      // Predicated region
      $region13: #{tpu_custom_call.1} parent=5 // pred_check
        %p83 = pneg %p82
      $region14: #{tpu_custom_call.1} parent=5 // pred_check_branch
        %85 = sbr.rel (%p83) target = $region16
      $region15: #{tpu_custom_call.1} parent=5 // pred_region
        // Predicated region
        $region17: #{tpu_custom_call.1} parent=15 // pred_check
          %p86 = pneg %p35
        $region18: #{tpu_custom_call.1} parent=15 // pred_check_branch
          %88 = sbr.rel (%p86) target = $region20
        $region19: #{tpu_custom_call.1} parent=15 // pred_region
          %s89 = sand.u32 %s25, 1
          %s90 = scalar_lea.sflag [#allocation5], %s89
          %s91 = sand.u32 %s25, 1
          %s92 = smul.addr %s91, 8192
          %s93 = scalar_lea.vmem [#allocation4], %s92
          %s94 = smul.u32 128, %s15
          %s96 = ssub.s32 131072, 131072
          %97 = vsyncadd %s90, %s96
          %s98 = smul.addr %s94, 8
          %s99 = smul.addr %s98, 128
          %s100 = scalar_lea.hbm %s1, %s99
          %s101 = sshll.u32 %s93, 4
          %s102 = int_to_ptr.vmem [resolvable:$true] %s101
          %107 = dma.hbm_to_vmem [thread:$0]  %s100, 131072, %s102, %s90, 1024, 1024, 64
        $region20: #{tpu_custom_call.1} parent=15 // pred_fallthru
          _
      $region16: #{tpu_custom_call.1} parent=5 // pred_fallthru
        _
      %p108 = scmp.le.s32.totalorder 1, %s15
      %p109 = scmp.lt.s32.totalorder %s15, 3
      %p110 = pnand %p108, %p109
      %p111 = pneg %p110
      // Predicated region
      $region21: #{tpu_custom_call.1} parent=5 // pred_check
        _
      $region22: #{tpu_custom_call.1} parent=5 // pred_check_branch
        %113 = sbr.rel (%p110) target = $region24
      $region23: #{tpu_custom_call.1} parent=5 // pred_region
        %s114 = ssub.s32 %s15, 1
        %s115 = sand.u32 %s28, 1
        %s116 = scalar_lea.sflag [#allocation5], %s115
        %s117 = sand.u32 %s28, 1
        %s118 = smul.addr %s117, 8192
        %s119 = scalar_lea.vmem [#allocation4], %s118
        // Predicated region
        $region25: #{tpu_custom_call.1} parent=23 // pred_check
          %p120 = pneg %p41
        $region26: #{tpu_custom_call.1} parent=23 // pred_check_branch
          %122 = sbr.rel (%p120) target = $region28
        $region27: #{tpu_custom_call.1} parent=23 // pred_region
          %123 = dma.done %s116, 131072
        $region28: #{tpu_custom_call.1} parent=23 // pred_fallthru
          _
        %s124 = sand.u32 %s28, 1
        %s125 = scalar_lea.sflag [#allocation5], %s124
        %s126 = sand.u32 %s28, 1
        %s127 = smul.addr %s126, 8192
        %s128 = scalar_lea.vmem [#allocation4], %s127
        %p129 = pneg %p41
        %p130 = pneg %p38
        %p131 = pneg %p67
        %p132 = pneg %p64
        %s133 = sand.u32 %s54, 1
        %s134 = scalar_lea.sflag [#allocation6], %s133
        %s135 = sand.u32 %s54, 1
        %s136 = smul.addr %s135, 8192
        %s137 = scalar_lea.vmem [#allocation7], %s136
        %s138 = smul.u32 128, %s20
        %s139 = smul.u32 128, %s20
        %s140 = sld [smem:[#allocation3]]
        %v141 = vld [vmem:[%s119] sm:$0xff]
        %v142 = vld [vmem:[%s119 + $0x8] sm:$0xff]
        %v143 = vld [vmem:[%s119 + $0x10] sm:$0xff]
        %v144 = vld [vmem:[%s119 + $0x18] sm:$0xff]
        %v145 = vld [vmem:[%s119 + $0x20] sm:$0xff]
        %v146 = vld [vmem:[%s119 + $0x28] sm:$0xff]
        %v147 = vld [vmem:[%s119 + $0x30] sm:$0xff]
        %v148 = vld [vmem:[%s119 + $0x38] sm:$0xff]
        %v149 = vld [vmem:[%s119 + $0x40] sm:$0xff]
        %v150 = vld [vmem:[%s119 + $0x48] sm:$0xff]
        %v151 = vld [vmem:[%s119 + $0x50] sm:$0xff]
        %v152 = vld [vmem:[%s119 + $0x58] sm:$0xff]
        %v153 = vld [vmem:[%s119 + $0x60] sm:$0xff]
        %v154 = vld [vmem:[%s119 + $0x68] sm:$0xff]
        %v155 = vld [vmem:[%s119 + $0x70] sm:$0xff]
        %v156 = vld [vmem:[%s119 + $0x78] sm:$0xff]
        %v157 = vld [vmem:[%s119 + $0x80] sm:$0xff]
        %v158 = vld [vmem:[%s119 + $0x88] sm:$0xff]
        %v159 = vld [vmem:[%s119 + $0x90] sm:$0xff]
        %v160 = vld [vmem:[%s119 + $0x98] sm:$0xff]
        %v161 = vld [vmem:[%s119 + $0xa0] sm:$0xff]
        %v162 = vld [vmem:[%s119 + $0xa8] sm:$0xff]
        %v163 = vld [vmem:[%s119 + $0xb0] sm:$0xff]
        %v164 = vld [vmem:[%s119 + $0xb8] sm:$0xff]
        %v165 = vld [vmem:[%s119 + $0xc0] sm:$0xff]
        %v166 = vld [vmem:[%s119 + $0xc8] sm:$0xff]
        %v167 = vld [vmem:[%s119 + $0xd0] sm:$0xff]
        %v168 = vld [vmem:[%s119 + $0xd8] sm:$0xff]
        %v169 = vld [vmem:[%s119 + $0xe0] sm:$0xff]
        %v170 = vld [vmem:[%s119 + $0xe8] sm:$0xff]
        %v171 = vld [vmem:[%s119 + $0xf0] sm:$0xff]
        %v172 = vld [vmem:[%s119 + $0xf8] sm:$0xff]
        %v173 = vld [vmem:[%s119 + $0x100] sm:$0xff]
        %v174 = vld [vmem:[%s119 + $0x108] sm:$0xff]
        %v175 = vld [vmem:[%s119 + $0x110] sm:$0xff]
        %v176 = vld [vmem:[%s119 + $0x118] sm:$0xff]
        %v177 = vld [vmem:[%s119 + $0x120] sm:$0xff]
        %v178 = vld [vmem:[%s119 + $0x128] sm:$0xff]
        %v179 = vld [vmem:[%s119 + $0x130] sm:$0xff]
        %v180 = vld [vmem:[%s119 + $0x138] sm:$0xff]
        %v181 = vld [vmem:[%s119 + $0x140] sm:$0xff]
        %v182 = vld [vmem:[%s119 + $0x148] sm:$0xff]
        %v183 = vld [vmem:[%s119 + $0x150] sm:$0xff]
        %v184 = vld [vmem:[%s119 + $0x158] sm:$0xff]
        %v185 = vld [vmem:[%s119 + $0x160] sm:$0xff]
        %v186 = vld [vmem:[%s119 + $0x168] sm:$0xff]
        %v187 = vld [vmem:[%s119 + $0x170] sm:$0xff]
        %v188 = vld [vmem:[%s119 + $0x178] sm:$0xff]
        %v189 = vld [vmem:[%s119 + $0x180] sm:$0xff]
        %v190 = vld [vmem:[%s119 + $0x188] sm:$0xff]
        %v191 = vld [vmem:[%s119 + $0x190] sm:$0xff]
        %v192 = vld [vmem:[%s119 + $0x198] sm:$0xff]
        %v193 = vld [vmem:[%s119 + $0x1a0] sm:$0xff]
        %v194 = vld [vmem:[%s119 + $0x1a8] sm:$0xff]
        %v195 = vld [vmem:[%s119 + $0x1b0] sm:$0xff]
        %v196 = vld [vmem:[%s119 + $0x1b8] sm:$0xff]
        %v197 = vld [vmem:[%s119 + $0x1c0] sm:$0xff]
        %v198 = vld [vmem:[%s119 + $0x1c8] sm:$0xff]
        %v199 = vld [vmem:[%s119 + $0x1d0] sm:$0xff]
        %v200 = vld [vmem:[%s119 + $0x1d8] sm:$0xff]
        %v201 = vld [vmem:[%s119 + $0x1e0] sm:$0xff]
        %v202 = vld [vmem:[%s119 + $0x1e8] sm:$0xff]
        %v203 = vld [vmem:[%s119 + $0x1f0] sm:$0xff]
        %v204 = vld [vmem:[%s119 + $0x1f8] sm:$0xff]
        %v205 = vld [vmem:[%s119 + $0x200] sm:$0xff]
        %v206 = vld [vmem:[%s119 + $0x208] sm:$0xff]
        %v207 = vld [vmem:[%s119 + $0x210] sm:$0xff]
        %v208 = vld [vmem:[%s119 + $0x218] sm:$0xff]
        %v209 = vld [vmem:[%s119 + $0x220] sm:$0xff]
        %v210 = vld [vmem:[%s119 + $0x228] sm:$0xff]
        %v211 = vld [vmem:[%s119 + $0x230] sm:$0xff]
        %v212 = vld [vmem:[%s119 + $0x238] sm:$0xff]
        %v213 = vld [vmem:[%s119 + $0x240] sm:$0xff]
        %v214 = vld [vmem:[%s119 + $0x248] sm:$0xff]
        %v215 = vld [vmem:[%s119 + $0x250] sm:$0xff]
        %v216 = vld [vmem:[%s119 + $0x258] sm:$0xff]
        %v217 = vld [vmem:[%s119 + $0x260] sm:$0xff]
        %v218 = vld [vmem:[%s119 + $0x268] sm:$0xff]
        %v219 = vld [vmem:[%s119 + $0x270] sm:$0xff]
        %v220 = vld [vmem:[%s119 + $0x278] sm:$0xff]
        %v221 = vld [vmem:[%s119 + $0x280] sm:$0xff]
        %v222 = vld [vmem:[%s119 + $0x288] sm:$0xff]
        %v223 = vld [vmem:[%s119 + $0x290] sm:$0xff]
        %v224 = vld [vmem:[%s119 + $0x298] sm:$0xff]
        %v225 = vld [vmem:[%s119 + $0x2a0] sm:$0xff]
        %v226 = vld [vmem:[%s119 + $0x2a8] sm:$0xff]
        %v227 = vld [vmem:[%s119 + $0x2b0] sm:$0xff]
        %v228 = vld [vmem:[%s119 + $0x2b8] sm:$0xff]
        %v229 = vld [vmem:[%s119 + $0x2c0] sm:$0xff]
        %v230 = vld [vmem:[%s119 + $0x2c8] sm:$0xff]
        %v231 = vld [vmem:[%s119 + $0x2d0] sm:$0xff]
        %v232 = vld [vmem:[%s119 + $0x2d8] sm:$0xff]
        %v233 = vld [vmem:[%s119 + $0x2e0] sm:$0xff]
        %v234 = vld [vmem:[%s119 + $0x2e8] sm:$0xff]
        %v235 = vld [vmem:[%s119 + $0x2f0] sm:$0xff]
        %v236 = vld [vmem:[%s119 + $0x2f8] sm:$0xff]
        %v237 = vld [vmem:[%s119 + $0x300] sm:$0xff]
        %v238 = vld [vmem:[%s119 + $0x308] sm:$0xff]
        %v239 = vld [vmem:[%s119 + $0x310] sm:$0xff]
        %v240 = vld [vmem:[%s119 + $0x318] sm:$0xff]
        %v241 = vld [vmem:[%s119 + $0x320] sm:$0xff]
        %v242 = vld [vmem:[%s119 + $0x328] sm:$0xff]
        %v243 = vld [vmem:[%s119 + $0x330] sm:$0xff]
        %v244 = vld [vmem:[%s119 + $0x338] sm:$0xff]
        %v245 = vld [vmem:[%s119 + $0x340] sm:$0xff]
        %v246 = vld [vmem:[%s119 + $0x348] sm:$0xff]
        %v247 = vld [vmem:[%s119 + $0x350] sm:$0xff]
        %v248 = vld [vmem:[%s119 + $0x358] sm:$0xff]
        %v249 = vld [vmem:[%s119 + $0x360] sm:$0xff]
        %v250 = vld [vmem:[%s119 + $0x368] sm:$0xff]
        %v251 = vld [vmem:[%s119 + $0x370] sm:$0xff]
        %v252 = vld [vmem:[%s119 + $0x378] sm:$0xff]
        %v253 = vld [vmem:[%s119 + $0x380] sm:$0xff]
        %v254 = vld [vmem:[%s119 + $0x388] sm:$0xff]
        %v255 = vld [vmem:[%s119 + $0x390] sm:$0xff]
        %v256 = vld [vmem:[%s119 + $0x398] sm:$0xff]
        %v257 = vld [vmem:[%s119 + $0x3a0] sm:$0xff]
        %v258 = vld [vmem:[%s119 + $0x3a8] sm:$0xff]
        %v259 = vld [vmem:[%s119 + $0x3b0] sm:$0xff]
        %v260 = vld [vmem:[%s119 + $0x3b8] sm:$0xff]
        %v261 = vld [vmem:[%s119 + $0x3c0] sm:$0xff]
        %v262 = vld [vmem:[%s119 + $0x3c8] sm:$0xff]
        %v263 = vld [vmem:[%s119 + $0x3d0] sm:$0xff]
        %v264 = vld [vmem:[%s119 + $0x3d8] sm:$0xff]
        %v265 = vld [vmem:[%s119 + $0x3e0] sm:$0xff]
        %v266 = vld [vmem:[%s119 + $0x3e8] sm:$0xff]
        %v267 = vld [vmem:[%s119 + $0x3f0] sm:$0xff]
        %v268 = vld [vmem:[%s119 + $0x3f8] sm:$0xff]
        %v269 = vld [vmem:[%s119 + $0x400] sm:$0xff]
        %v270 = vld [vmem:[%s119 + $0x408] sm:$0xff]
        %v271 = vld [vmem:[%s119 + $0x410] sm:$0xff]
        %v272 = vld [vmem:[%s119 + $0x418] sm:$0xff]
        %v273 = vld [vmem:[%s119 + $0x420] sm:$0xff]
        %v274 = vld [vmem:[%s119 + $0x428] sm:$0xff]
        %v275 = vld [vmem:[%s119 + $0x430] sm:$0xff]
        %v276 = vld [vmem:[%s119 + $0x438] sm:$0xff]
        %v277 = vld [vmem:[%s119 + $0x440] sm:$0xff]
        %v278 = vld [vmem:[%s119 + $0x448] sm:$0xff]
        %v279 = vld [vmem:[%s119 + $0x450] sm:$0xff]
        %v280 = vld [vmem:[%s119 + $0x458] sm:$0xff]
        %v281 = vld [vmem:[%s119 + $0x460] sm:$0xff]
        %v282 = vld [vmem:[%s119 + $0x468] sm:$0xff]
        %v283 = vld [vmem:[%s119 + $0x470] sm:$0xff]
        %v284 = vld [vmem:[%s119 + $0x478] sm:$0xff]
        %v285 = vld [vmem:[%s119 + $0x480] sm:$0xff]
        %v286 = vld [vmem:[%s119 + $0x488] sm:$0xff]
        %v287 = vld [vmem:[%s119 + $0x490] sm:$0xff]
        %v288 = vld [vmem:[%s119 + $0x498] sm:$0xff]
        %v289 = vld [vmem:[%s119 + $0x4a0] sm:$0xff]
        %v290 = vld [vmem:[%s119 + $0x4a8] sm:$0xff]
        %v291 = vld [vmem:[%s119 + $0x4b0] sm:$0xff]
        %v292 = vld [vmem:[%s119 + $0x4b8] sm:$0xff]
        %v293 = vld [vmem:[%s119 + $0x4c0] sm:$0xff]
        %v294 = vld [vmem:[%s119 + $0x4c8] sm:$0xff]
        %v295 = vld [vmem:[%s119 + $0x4d0] sm:$0xff]
        %v296 = vld [vmem:[%s119 + $0x4d8] sm:$0xff]
        %v297 = vld [vmem:[%s119 + $0x4e0] sm:$0xff]
        %v298 = vld [vmem:[%s119 + $0x4e8] sm:$0xff]
        %v299 = vld [vmem:[%s119 + $0x4f0] sm:$0xff]
        %v300 = vld [vmem:[%s119 + $0x4f8] sm:$0xff]
        %v301 = vld [vmem:[%s119 + $0x500] sm:$0xff]
        %v302 = vld [vmem:[%s119 + $0x508] sm:$0xff]
        %v303 = vld [vmem:[%s119 + $0x510] sm:$0xff]
        %v304 = vld [vmem:[%s119 + $0x518] sm:$0xff]
        %v305 = vld [vmem:[%s119 + $0x520] sm:$0xff]
        %v306 = vld [vmem:[%s119 + $0x528] sm:$0xff]
        %v307 = vld [vmem:[%s119 + $0x530] sm:$0xff]
        %v308 = vld [vmem:[%s119 + $0x538] sm:$0xff]
        %v309 = vld [vmem:[%s119 + $0x540] sm:$0xff]
        %v310 = vld [vmem:[%s119 + $0x548] sm:$0xff]
        %v311 = vld [vmem:[%s119 + $0x550] sm:$0xff]
        %v312 = vld [vmem:[%s119 + $0x558] sm:$0xff]
        %v313 = vld [vmem:[%s119 + $0x560] sm:$0xff]
        %v314 = vld [vmem:[%s119 + $0x568] sm:$0xff]
        %v315 = vld [vmem:[%s119 + $0x570] sm:$0xff]
        %v316 = vld [vmem:[%s119 + $0x578] sm:$0xff]
        %v317 = vld [vmem:[%s119 + $0x580] sm:$0xff]
        %v318 = vld [vmem:[%s119 + $0x588] sm:$0xff]
        %v319 = vld [vmem:[%s119 + $0x590] sm:$0xff]
        %v320 = vld [vmem:[%s119 + $0x598] sm:$0xff]
        %v321 = vld [vmem:[%s119 + $0x5a0] sm:$0xff]
        %v322 = vld [vmem:[%s119 + $0x5a8] sm:$0xff]
        %v323 = vld [vmem:[%s119 + $0x5b0] sm:$0xff]
        %v324 = vld [vmem:[%s119 + $0x5b8] sm:$0xff]
        %v325 = vld [vmem:[%s119 + $0x5c0] sm:$0xff]
        %v326 = vld [vmem:[%s119 + $0x5c8] sm:$0xff]
        %v327 = vld [vmem:[%s119 + $0x5d0] sm:$0xff]
        %v328 = vld [vmem:[%s119 + $0x5d8] sm:$0xff]
        %v329 = vld [vmem:[%s119 + $0x5e0] sm:$0xff]
        %v330 = vld [vmem:[%s119 + $0x5e8] sm:$0xff]
        %v331 = vld [vmem:[%s119 + $0x5f0] sm:$0xff]
        %v332 = vld [vmem:[%s119 + $0x5f8] sm:$0xff]
        %v333 = vld [vmem:[%s119 + $0x600] sm:$0xff]
        %v334 = vld [vmem:[%s119 + $0x608] sm:$0xff]
        %v335 = vld [vmem:[%s119 + $0x610] sm:$0xff]
        %v336 = vld [vmem:[%s119 + $0x618] sm:$0xff]
        %v337 = vld [vmem:[%s119 + $0x620] sm:$0xff]
        %v338 = vld [vmem:[%s119 + $0x628] sm:$0xff]
        %v339 = vld [vmem:[%s119 + $0x630] sm:$0xff]
        %v340 = vld [vmem:[%s119 + $0x638] sm:$0xff]
        %v341 = vld [vmem:[%s119 + $0x640] sm:$0xff]
        %v342 = vld [vmem:[%s119 + $0x648] sm:$0xff]
        %v343 = vld [vmem:[%s119 + $0x650] sm:$0xff]
        %v344 = vld [vmem:[%s119 + $0x658] sm:$0xff]
        %v345 = vld [vmem:[%s119 + $0x660] sm:$0xff]
        %v346 = vld [vmem:[%s119 + $0x668] sm:$0xff]
        %v347 = vld [vmem:[%s119 + $0x670] sm:$0xff]
        %v348 = vld [vmem:[%s119 + $0x678] sm:$0xff]
        %v349 = vld [vmem:[%s119 + $0x680] sm:$0xff]
        %v350 = vld [vmem:[%s119 + $0x688] sm:$0xff]
        %v351 = vld [vmem:[%s119 + $0x690] sm:$0xff]
        %v352 = vld [vmem:[%s119 + $0x698] sm:$0xff]
        %v353 = vld [vmem:[%s119 + $0x6a0] sm:$0xff]
        %v354 = vld [vmem:[%s119 + $0x6a8] sm:$0xff]
        %v355 = vld [vmem:[%s119 + $0x6b0] sm:$0xff]
        %v356 = vld [vmem:[%s119 + $0x6b8] sm:$0xff]
        %v357 = vld [vmem:[%s119 + $0x6c0] sm:$0xff]
        %v358 = vld [vmem:[%s119 + $0x6c8] sm:$0xff]
        %v359 = vld [vmem:[%s119 + $0x6d0] sm:$0xff]
        %v360 = vld [vmem:[%s119 + $0x6d8] sm:$0xff]
        %v361 = vld [vmem:[%s119 + $0x6e0] sm:$0xff]
        %v362 = vld [vmem:[%s119 + $0x6e8] sm:$0xff]
        %v363 = vld [vmem:[%s119 + $0x6f0] sm:$0xff]
        %v364 = vld [vmem:[%s119 + $0x6f8] sm:$0xff]
        %v365 = vld [vmem:[%s119 + $0x700] sm:$0xff]
        %v366 = vld [vmem:[%s119 + $0x708] sm:$0xff]
        %v367 = vld [vmem:[%s119 + $0x710] sm:$0xff]
        %v368 = vld [vmem:[%s119 + $0x718] sm:$0xff]
        %v369 = vld [vmem:[%s119 + $0x720] sm:$0xff]
        %v370 = vld [vmem:[%s119 + $0x728] sm:$0xff]
        %v371 = vld [vmem:[%s119 + $0x730] sm:$0xff]
        %v372 = vld [vmem:[%s119 + $0x738] sm:$0xff]
        %v373 = vld [vmem:[%s119 + $0x740] sm:$0xff]
        %v374 = vld [vmem:[%s119 + $0x748] sm:$0xff]
        %v375 = vld [vmem:[%s119 + $0x750] sm:$0xff]
        %v376 = vld [vmem:[%s119 + $0x758] sm:$0xff]
        %v377 = vld [vmem:[%s119 + $0x760] sm:$0xff]
        %v378 = vld [vmem:[%s119 + $0x768] sm:$0xff]
        %v379 = vld [vmem:[%s119 + $0x770] sm:$0xff]
        %v380 = vld [vmem:[%s119 + $0x778] sm:$0xff]
        %v381 = vld [vmem:[%s119 + $0x780] sm:$0xff]
        %v382 = vld [vmem:[%s119 + $0x788] sm:$0xff]
        %v383 = vld [vmem:[%s119 + $0x790] sm:$0xff]
        %v384 = vld [vmem:[%s119 + $0x798] sm:$0xff]
        %v385 = vld [vmem:[%s119 + $0x7a0] sm:$0xff]
        %v386 = vld [vmem:[%s119 + $0x7a8] sm:$0xff]
        %v387 = vld [vmem:[%s119 + $0x7b0] sm:$0xff]
        %v388 = vld [vmem:[%s119 + $0x7b8] sm:$0xff]
        %v389 = vld [vmem:[%s119 + $0x7c0] sm:$0xff]
        %v390 = vld [vmem:[%s119 + $0x7c8] sm:$0xff]
        %v391 = vld [vmem:[%s119 + $0x7d0] sm:$0xff]
        %v392 = vld [vmem:[%s119 + $0x7d8] sm:$0xff]
        %v393 = vld [vmem:[%s119 + $0x7e0] sm:$0xff]
        %v394 = vld [vmem:[%s119 + $0x7e8] sm:$0xff]
        %v395 = vld [vmem:[%s119 + $0x7f0] sm:$0xff]
        %v396 = vld [vmem:[%s119 + $0x7f8] sm:$0xff]
        %v397 = vld [vmem:[%s119 + $0x800] sm:$0xff]
        %v398 = vld [vmem:[%s119 + $0x808] sm:$0xff]
        %v399 = vld [vmem:[%s119 + $0x810] sm:$0xff]
        %v400 = vld [vmem:[%s119 + $0x818] sm:$0xff]
        %v401 = vld [vmem:[%s119 + $0x820] sm:$0xff]
        %v402 = vld [vmem:[%s119 + $0x828] sm:$0xff]
        %v403 = vld [vmem:[%s119 + $0x830] sm:$0xff]
        %v404 = vld [vmem:[%s119 + $0x838] sm:$0xff]
        %v405 = vld [vmem:[%s119 + $0x840] sm:$0xff]
        %v406 = vld [vmem:[%s119 + $0x848] sm:$0xff]
        %v407 = vld [vmem:[%s119 + $0x850] sm:$0xff]
        %v408 = vld [vmem:[%s119 + $0x858] sm:$0xff]
        %v409 = vld [vmem:[%s119 + $0x860] sm:$0xff]
        %v410 = vld [vmem:[%s119 + $0x868] sm:$0xff]
        %v411 = vld [vmem:[%s119 + $0x870] sm:$0xff]
        %v412 = vld [vmem:[%s119 + $0x878] sm:$0xff]
        %v413 = vld [vmem:[%s119 + $0x880] sm:$0xff]
        %v414 = vld [vmem:[%s119 + $0x888] sm:$0xff]
        %v415 = vld [vmem:[%s119 + $0x890] sm:$0xff]
        %v416 = vld [vmem:[%s119 + $0x898] sm:$0xff]
        %v417 = vld [vmem:[%s119 + $0x8a0] sm:$0xff]
        %v418 = vld [vmem:[%s119 + $0x8a8] sm:$0xff]
        %v419 = vld [vmem:[%s119 + $0x8b0] sm:$0xff]
        %v420 = vld [vmem:[%s119 + $0x8b8] sm:$0xff]
        %v421 = vld [vmem:[%s119 + $0x8c0] sm:$0xff]
        %v422 = vld [vmem:[%s119 + $0x8c8] sm:$0xff]
        %v423 = vld [vmem:[%s119 + $0x8d0] sm:$0xff]
        %v424 = vld [vmem:[%s119 + $0x8d8] sm:$0xff]
        %v425 = vld [vmem:[%s119 + $0x8e0] sm:$0xff]
        %v426 = vld [vmem:[%s119 + $0x8e8] sm:$0xff]
        %v427 = vld [vmem:[%s119 + $0x8f0] sm:$0xff]
        %v428 = vld [vmem:[%s119 + $0x8f8] sm:$0xff]
        %v429 = vld [vmem:[%s119 + $0x900] sm:$0xff]
        %v430 = vld [vmem:[%s119 + $0x908] sm:$0xff]
        %v431 = vld [vmem:[%s119 + $0x910] sm:$0xff]
        %v432 = vld [vmem:[%s119 + $0x918] sm:$0xff]
        %v433 = vld [vmem:[%s119 + $0x920] sm:$0xff]
        %v434 = vld [vmem:[%s119 + $0x928] sm:$0xff]
        %v435 = vld [vmem:[%s119 + $0x930] sm:$0xff]
        %v436 = vld [vmem:[%s119 + $0x938] sm:$0xff]
        %v437 = vld [vmem:[%s119 + $0x940] sm:$0xff]
        %v438 = vld [vmem:[%s119 + $0x948] sm:$0xff]
        %v439 = vld [vmem:[%s119 + $0x950] sm:$0xff]
        %v440 = vld [vmem:[%s119 + $0x958] sm:$0xff]
        %v441 = vld [vmem:[%s119 + $0x960] sm:$0xff]
        %v442 = vld [vmem:[%s119 + $0x968] sm:$0xff]
        %v443 = vld [vmem:[%s119 + $0x970] sm:$0xff]
        %v444 = vld [vmem:[%s119 + $0x978] sm:$0xff]
        %v445 = vld [vmem:[%s119 + $0x980] sm:$0xff]
        %v446 = vld [vmem:[%s119 + $0x988] sm:$0xff]
        %v447 = vld [vmem:[%s119 + $0x990] sm:$0xff]
        %v448 = vld [vmem:[%s119 + $0x998] sm:$0xff]
        %v449 = vld [vmem:[%s119 + $0x9a0] sm:$0xff]
        %v450 = vld [vmem:[%s119 + $0x9a8] sm:$0xff]
        %v451 = vld [vmem:[%s119 + $0x9b0] sm:$0xff]
        %v452 = vld [vmem:[%s119 + $0x9b8] sm:$0xff]
        %v453 = vld [vmem:[%s119 + $0x9c0] sm:$0xff]
        %v454 = vld [vmem:[%s119 + $0x9c8] sm:$0xff]
        %v455 = vld [vmem:[%s119 + $0x9d0] sm:$0xff]
        %v456 = vld [vmem:[%s119 + $0x9d8] sm:$0xff]
        %v457 = vld [vmem:[%s119 + $0x9e0] sm:$0xff]
        %v458 = vld [vmem:[%s119 + $0x9e8] sm:$0xff]
        %v459 = vld [vmem:[%s119 + $0x9f0] sm:$0xff]
        %v460 = vld [vmem:[%s119 + $0x9f8] sm:$0xff]
        %v461 = vld [vmem:[%s119 + $0xa00] sm:$0xff]
        %v462 = vld [vmem:[%s119 + $0xa08] sm:$0xff]
        %v463 = vld [vmem:[%s119 + $0xa10] sm:$0xff]
        %v464 = vld [vmem:[%s119 + $0xa18] sm:$0xff]
        %v465 = vld [vmem:[%s119 + $0xa20] sm:$0xff]
        %v466 = vld [vmem:[%s119 + $0xa28] sm:$0xff]
        %v467 = vld [vmem:[%s119 + $0xa30] sm:$0xff]
        %v468 = vld [vmem:[%s119 + $0xa38] sm:$0xff]
        %v469 = vld [vmem:[%s119 + $0xa40] sm:$0xff]
        %v470 = vld [vmem:[%s119 + $0xa48] sm:$0xff]
        %v471 = vld [vmem:[%s119 + $0xa50] sm:$0xff]
        %v472 = vld [vmem:[%s119 + $0xa58] sm:$0xff]
        %v473 = vld [vmem:[%s119 + $0xa60] sm:$0xff]
        %v474 = vld [vmem:[%s119 + $0xa68] sm:$0xff]
        %v475 = vld [vmem:[%s119 + $0xa70] sm:$0xff]
        %v476 = vld [vmem:[%s119 + $0xa78] sm:$0xff]
        %v477 = vld [vmem:[%s119 + $0xa80] sm:$0xff]
        %v478 = vld [vmem:[%s119 + $0xa88] sm:$0xff]
        %v479 = vld [vmem:[%s119 + $0xa90] sm:$0xff]
        %v480 = vld [vmem:[%s119 + $0xa98] sm:$0xff]
        %v481 = vld [vmem:[%s119 + $0xaa0] sm:$0xff]
        %v482 = vld [vmem:[%s119 + $0xaa8] sm:$0xff]
        %v483 = vld [vmem:[%s119 + $0xab0] sm:$0xff]
        %v484 = vld [vmem:[%s119 + $0xab8] sm:$0xff]
        %v485 = vld [vmem:[%s119 + $0xac0] sm:$0xff]
        %v486 = vld [vmem:[%s119 + $0xac8] sm:$0xff]
        %v487 = vld [vmem:[%s119 + $0xad0] sm:$0xff]
        %v488 = vld [vmem:[%s119 + $0xad8] sm:$0xff]
        %v489 = vld [vmem:[%s119 + $0xae0] sm:$0xff]
        %v490 = vld [vmem:[%s119 + $0xae8] sm:$0xff]
        %v491 = vld [vmem:[%s119 + $0xaf0] sm:$0xff]
        %v492 = vld [vmem:[%s119 + $0xaf8] sm:$0xff]
        %v493 = vld [vmem:[%s119 + $0xb00] sm:$0xff]
        %v494 = vld [vmem:[%s119 + $0xb08] sm:$0xff]
        %v495 = vld [vmem:[%s119 + $0xb10] sm:$0xff]
        %v496 = vld [vmem:[%s119 + $0xb18] sm:$0xff]
        %v497 = vld [vmem:[%s119 + $0xb20] sm:$0xff]
        %v498 = vld [vmem:[%s119 + $0xb28] sm:$0xff]
        %v499 = vld [vmem:[%s119 + $0xb30] sm:$0xff]
        %v500 = vld [vmem:[%s119 + $0xb38] sm:$0xff]
        %v501 = vld [vmem:[%s119 + $0xb40] sm:$0xff]
        %v502 = vld [vmem:[%s119 + $0xb48] sm:$0xff]
        %v503 = vld [vmem:[%s119 + $0xb50] sm:$0xff]
        %v504 = vld [vmem:[%s119 + $0xb58] sm:$0xff]
        %v505 = vld [vmem:[%s119 + $0xb60] sm:$0xff]
        %v506 = vld [vmem:[%s119 + $0xb68] sm:$0xff]
        %v507 = vld [vmem:[%s119 + $0xb70] sm:$0xff]
        %v508 = vld [vmem:[%s119 + $0xb78] sm:$0xff]
        %v509 = vld [vmem:[%s119 + $0xb80] sm:$0xff]
        %v510 = vld [vmem:[%s119 + $0xb88] sm:$0xff]
        %v511 = vld [vmem:[%s119 + $0xb90] sm:$0xff]
        %v512 = vld [vmem:[%s119 + $0xb98] sm:$0xff]
        %v513 = vld [vmem:[%s119 + $0xba0] sm:$0xff]
        %v514 = vld [vmem:[%s119 + $0xba8] sm:$0xff]
        %v515 = vld [vmem:[%s119 + $0xbb0] sm:$0xff]
        %v516 = vld [vmem:[%s119 + $0xbb8] sm:$0xff]
        %v517 = vld [vmem:[%s119 + $0xbc0] sm:$0xff]
        %v518 = vld [vmem:[%s119 + $0xbc8] sm:$0xff]
        %v519 = vld [vmem:[%s119 + $0xbd0] sm:$0xff]
        %v520 = vld [vmem:[%s119 + $0xbd8] sm:$0xff]
        %v521 = vld [vmem:[%s119 + $0xbe0] sm:$0xff]
        %v522 = vld [vmem:[%s119 + $0xbe8] sm:$0xff]
        %v523 = vld [vmem:[%s119 + $0xbf0] sm:$0xff]
        %v524 = vld [vmem:[%s119 + $0xbf8] sm:$0xff]
        %v525 = vld [vmem:[%s119 + $0xc00] sm:$0xff]
        %v526 = vld [vmem:[%s119 + $0xc08] sm:$0xff]
        %v527 = vld [vmem:[%s119 + $0xc10] sm:$0xff]
        %v528 = vld [vmem:[%s119 + $0xc18] sm:$0xff]
        %v529 = vld [vmem:[%s119 + $0xc20] sm:$0xff]
        %v530 = vld [vmem:[%s119 + $0xc28] sm:$0xff]
        %v531 = vld [vmem:[%s119 + $0xc30] sm:$0xff]
        %v532 = vld [vmem:[%s119 + $0xc38] sm:$0xff]
        %v533 = vld [vmem:[%s119 + $0xc40] sm:$0xff]
        %v534 = vld [vmem:[%s119 + $0xc48] sm:$0xff]
        %v535 = vld [vmem:[%s119 + $0xc50] sm:$0xff]
        %v536 = vld [vmem:[%s119 + $0xc58] sm:$0xff]
        %v537 = vld [vmem:[%s119 + $0xc60] sm:$0xff]
        %v538 = vld [vmem:[%s119 + $0xc68] sm:$0xff]
        %v539 = vld [vmem:[%s119 + $0xc70] sm:$0xff]
        %v540 = vld [vmem:[%s119 + $0xc78] sm:$0xff]
        %v541 = vld [vmem:[%s119 + $0xc80] sm:$0xff]
        %v542 = vld [vmem:[%s119 + $0xc88] sm:$0xff]
        %v543 = vld [vmem:[%s119 + $0xc90] sm:$0xff]
        %v544 = vld [vmem:[%s119 + $0xc98] sm:$0xff]
        %v545 = vld [vmem:[%s119 + $0xca0] sm:$0xff]
        %v546 = vld [vmem:[%s119 + $0xca8] sm:$0xff]
        %v547 = vld [vmem:[%s119 + $0xcb0] sm:$0xff]
        %v548 = vld [vmem:[%s119 + $0xcb8] sm:$0xff]
        %v549 = vld [vmem:[%s119 + $0xcc0] sm:$0xff]
        %v550 = vld [vmem:[%s119 + $0xcc8] sm:$0xff]
        %v551 = vld [vmem:[%s119 + $0xcd0] sm:$0xff]
        %v552 = vld [vmem:[%s119 + $0xcd8] sm:$0xff]
        %v553 = vld [vmem:[%s119 + $0xce0] sm:$0xff]
        %v554 = vld [vmem:[%s119 + $0xce8] sm:$0xff]
        %v555 = vld [vmem:[%s119 + $0xcf0] sm:$0xff]
        %v556 = vld [vmem:[%s119 + $0xcf8] sm:$0xff]
        %v557 = vld [vmem:[%s119 + $0xd00] sm:$0xff]
        %v558 = vld [vmem:[%s119 + $0xd08] sm:$0xff]
        %v559 = vld [vmem:[%s119 + $0xd10] sm:$0xff]
        %v560 = vld [vmem:[%s119 + $0xd18] sm:$0xff]
        %v561 = vld [vmem:[%s119 + $0xd20] sm:$0xff]
        %v562 = vld [vmem:[%s119 + $0xd28] sm:$0xff]
        %v563 = vld [vmem:[%s119 + $0xd30] sm:$0xff]
        %v564 = vld [vmem:[%s119 + $0xd38] sm:$0xff]
        %v565 = vld [vmem:[%s119 + $0xd40] sm:$0xff]
        %v566 = vld [vmem:[%s119 + $0xd48] sm:$0xff]
        %v567 = vld [vmem:[%s119 + $0xd50] sm:$0xff]
        %v568 = vld [vmem:[%s119 + $0xd58] sm:$0xff]
        %v569 = vld [vmem:[%s119 + $0xd60] sm:$0xff]
        %v570 = vld [vmem:[%s119 + $0xd68] sm:$0xff]
        %v571 = vld [vmem:[%s119 + $0xd70] sm:$0xff]
        %v572 = vld [vmem:[%s119 + $0xd78] sm:$0xff]
        %v573 = vld [vmem:[%s119 + $0xd80] sm:$0xff]
        %v574 = vld [vmem:[%s119 + $0xd88] sm:$0xff]
        %v575 = vld [vmem:[%s119 + $0xd90] sm:$0xff]
        %v576 = vld [vmem:[%s119 + $0xd98] sm:$0xff]
        %v577 = vld [vmem:[%s119 + $0xda0] sm:$0xff]
        %v578 = vld [vmem:[%s119 + $0xda8] sm:$0xff]
        %v579 = vld [vmem:[%s119 + $0xdb0] sm:$0xff]
        %v580 = vld [vmem:[%s119 + $0xdb8] sm:$0xff]
        %v581 = vld [vmem:[%s119 + $0xdc0] sm:$0xff]
        %v582 = vld [vmem:[%s119 + $0xdc8] sm:$0xff]
        %v583 = vld [vmem:[%s119 + $0xdd0] sm:$0xff]
        %v584 = vld [vmem:[%s119 + $0xdd8] sm:$0xff]
        %v585 = vld [vmem:[%s119 + $0xde0] sm:$0xff]
        %v586 = vld [vmem:[%s119 + $0xde8] sm:$0xff]
        %v587 = vld [vmem:[%s119 + $0xdf0] sm:$0xff]
        %v588 = vld [vmem:[%s119 + $0xdf8] sm:$0xff]
        %v589 = vld [vmem:[%s119 + $0xe00] sm:$0xff]
        %v590 = vld [vmem:[%s119 + $0xe08] sm:$0xff]
        %v591 = vld [vmem:[%s119 + $0xe10] sm:$0xff]
        %v592 = vld [vmem:[%s119 + $0xe18] sm:$0xff]
        %v593 = vld [vmem:[%s119 + $0xe20] sm:$0xff]
        %v594 = vld [vmem:[%s119 + $0xe28] sm:$0xff]
        %v595 = vld [vmem:[%s119 + $0xe30] sm:$0xff]
        %v596 = vld [vmem:[%s119 + $0xe38] sm:$0xff]
        %v597 = vld [vmem:[%s119 + $0xe40] sm:$0xff]
        %v598 = vld [vmem:[%s119 + $0xe48] sm:$0xff]
        %v599 = vld [vmem:[%s119 + $0xe50] sm:$0xff]
        %v600 = vld [vmem:[%s119 + $0xe58] sm:$0xff]
        %v601 = vld [vmem:[%s119 + $0xe60] sm:$0xff]
        %v602 = vld [vmem:[%s119 + $0xe68] sm:$0xff]
        %v603 = vld [vmem:[%s119 + $0xe70] sm:$0xff]
        %v604 = vld [vmem:[%s119 + $0xe78] sm:$0xff]
        %v605 = vld [vmem:[%s119 + $0xe80] sm:$0xff]
        %v606 = vld [vmem:[%s119 + $0xe88] sm:$0xff]
        %v607 = vld [vmem:[%s119 + $0xe90] sm:$0xff]
        %v608 = vld [vmem:[%s119 + $0xe98] sm:$0xff]
        %v609 = vld [vmem:[%s119 + $0xea0] sm:$0xff]
        %v610 = vld [vmem:[%s119 + $0xea8] sm:$0xff]
        %v611 = vld [vmem:[%s119 + $0xeb0] sm:$0xff]
        %v612 = vld [vmem:[%s119 + $0xeb8] sm:$0xff]
        %v613 = vld [vmem:[%s119 + $0xec0] sm:$0xff]
        %v614 = vld [vmem:[%s119 + $0xec8] sm:$0xff]
        %v615 = vld [vmem:[%s119 + $0xed0] sm:$0xff]
        %v616 = vld [vmem:[%s119 + $0xed8] sm:$0xff]
        %v617 = vld [vmem:[%s119 + $0xee0] sm:$0xff]
        %v618 = vld [vmem:[%s119 + $0xee8] sm:$0xff]
        %v619 = vld [vmem:[%s119 + $0xef0] sm:$0xff]
        %v620 = vld [vmem:[%s119 + $0xef8] sm:$0xff]
        %v621 = vld [vmem:[%s119 + $0xf00] sm:$0xff]
        %v622 = vld [vmem:[%s119 + $0xf08] sm:$0xff]
        %v623 = vld [vmem:[%s119 + $0xf10] sm:$0xff]
        %v624 = vld [vmem:[%s119 + $0xf18] sm:$0xff]
        %v625 = vld [vmem:[%s119 + $0xf20] sm:$0xff]
        %v626 = vld [vmem:[%s119 + $0xf28] sm:$0xff]
        %v627 = vld [vmem:[%s119 + $0xf30] sm:$0xff]
        %v628 = vld [vmem:[%s119 + $0xf38] sm:$0xff]
        %v629 = vld [vmem:[%s119 + $0xf40] sm:$0xff]
        %v630 = vld [vmem:[%s119 + $0xf48] sm:$0xff]
        %v631 = vld [vmem:[%s119 + $0xf50] sm:$0xff]
        %v632 = vld [vmem:[%s119 + $0xf58] sm:$0xff]
        %v633 = vld [vmem:[%s119 + $0xf60] sm:$0xff]
        %v634 = vld [vmem:[%s119 + $0xf68] sm:$0xff]
        %v635 = vld [vmem:[%s119 + $0xf70] sm:$0xff]
        %v636 = vld [vmem:[%s119 + $0xf78] sm:$0xff]
        %v637 = vld [vmem:[%s119 + $0xf80] sm:$0xff]
        %v638 = vld [vmem:[%s119 + $0xf88] sm:$0xff]
        %v639 = vld [vmem:[%s119 + $0xf90] sm:$0xff]
        %v640 = vld [vmem:[%s119 + $0xf98] sm:$0xff]
        %v641 = vld [vmem:[%s119 + $0xfa0] sm:$0xff]
        %v642 = vld [vmem:[%s119 + $0xfa8] sm:$0xff]
        %v643 = vld [vmem:[%s119 + $0xfb0] sm:$0xff]
        %v644 = vld [vmem:[%s119 + $0xfb8] sm:$0xff]
        %v645 = vld [vmem:[%s119 + $0xfc0] sm:$0xff]
        %v646 = vld [vmem:[%s119 + $0xfc8] sm:$0xff]
        %v647 = vld [vmem:[%s119 + $0xfd0] sm:$0xff]
        %v648 = vld [vmem:[%s119 + $0xfd8] sm:$0xff]
        %v649 = vld [vmem:[%s119 + $0xfe0] sm:$0xff]
        %v650 = vld [vmem:[%s119 + $0xfe8] sm:$0xff]
        %v651 = vld [vmem:[%s119 + $0xff0] sm:$0xff]
        %v652 = vld [vmem:[%s119 + $0xff8] sm:$0xff]
        %v653 = vld [vmem:[%s119 + $0x1000] sm:$0xff]
        %v654 = vld [vmem:[%s119 + $0x1008] sm:$0xff]
        %v655 = vld [vmem:[%s119 + $0x1010] sm:$0xff]
        %v656 = vld [vmem:[%s119 + $0x1018] sm:$0xff]
        %v657 = vld [vmem:[%s119 + $0x1020] sm:$0xff]
        %v658 = vld [vmem:[%s119 + $0x1028] sm:$0xff]
        %v659 = vld [vmem:[%s119 + $0x1030] sm:$0xff]
        %v660 = vld [vmem:[%s119 + $0x1038] sm:$0xff]
        %v661 = vld [vmem:[%s119 + $0x1040] sm:$0xff]
        %v662 = vld [vmem:[%s119 + $0x1048] sm:$0xff]
        %v663 = vld [vmem:[%s119 + $0x1050] sm:$0xff]
        %v664 = vld [vmem:[%s119 + $0x1058] sm:$0xff]
        %v665 = vld [vmem:[%s119 + $0x1060] sm:$0xff]
        %v666 = vld [vmem:[%s119 + $0x1068] sm:$0xff]
        %v667 = vld [vmem:[%s119 + $0x1070] sm:$0xff]
        %v668 = vld [vmem:[%s119 + $0x1078] sm:$0xff]
        %v669 = vld [vmem:[%s119 + $0x1080] sm:$0xff]
        %v670 = vld [vmem:[%s119 + $0x1088] sm:$0xff]
        %v671 = vld [vmem:[%s119 + $0x1090] sm:$0xff]
        %v672 = vld [vmem:[%s119 + $0x1098] sm:$0xff]
        %v673 = vld [vmem:[%s119 + $0x10a0] sm:$0xff]
        %v674 = vld [vmem:[%s119 + $0x10a8] sm:$0xff]
        %v675 = vld [vmem:[%s119 + $0x10b0] sm:$0xff]
        %v676 = vld [vmem:[%s119 + $0x10b8] sm:$0xff]
        %v677 = vld [vmem:[%s119 + $0x10c0] sm:$0xff]
        %v678 = vld [vmem:[%s119 + $0x10c8] sm:$0xff]
        %v679 = vld [vmem:[%s119 + $0x10d0] sm:$0xff]
        %v680 = vld [vmem:[%s119 + $0x10d8] sm:$0xff]
        %v681 = vld [vmem:[%s119 + $0x10e0] sm:$0xff]
        %v682 = vld [vmem:[%s119 + $0x10e8] sm:$0xff]
        %v683 = vld [vmem:[%s119 + $0x10f0] sm:$0xff]
        %v684 = vld [vmem:[%s119 + $0x10f8] sm:$0xff]
        %v685 = vld [vmem:[%s119 + $0x1100] sm:$0xff]
        %v686 = vld [vmem:[%s119 + $0x1108] sm:$0xff]
        %v687 = vld [vmem:[%s119 + $0x1110] sm:$0xff]
        %v688 = vld [vmem:[%s119 + $0x1118] sm:$0xff]
        %v689 = vld [vmem:[%s119 + $0x1120] sm:$0xff]
        %v690 = vld [vmem:[%s119 + $0x1128] sm:$0xff]
        %v691 = vld [vmem:[%s119 + $0x1130] sm:$0xff]
        %v692 = vld [vmem:[%s119 + $0x1138] sm:$0xff]
        %v693 = vld [vmem:[%s119 + $0x1140] sm:$0xff]
        %v694 = vld [vmem:[%s119 + $0x1148] sm:$0xff]
        %v695 = vld [vmem:[%s119 + $0x1150] sm:$0xff]
        %v696 = vld [vmem:[%s119 + $0x1158] sm:$0xff]
        %v697 = vld [vmem:[%s119 + $0x1160] sm:$0xff]
        %v698 = vld [vmem:[%s119 + $0x1168] sm:$0xff]
        %v699 = vld [vmem:[%s119 + $0x1170] sm:$0xff]
        %v700 = vld [vmem:[%s119 + $0x1178] sm:$0xff]
        %v701 = vld [vmem:[%s119 + $0x1180] sm:$0xff]
        %v702 = vld [vmem:[%s119 + $0x1188] sm:$0xff]
        %v703 = vld [vmem:[%s119 + $0x1190] sm:$0xff]
        %v704 = vld [vmem:[%s119 + $0x1198] sm:$0xff]
        %v705 = vld [vmem:[%s119 + $0x11a0] sm:$0xff]
        %v706 = vld [vmem:[%s119 + $0x11a8] sm:$0xff]
        %v707 = vld [vmem:[%s119 + $0x11b0] sm:$0xff]
        %v708 = vld [vmem:[%s119 + $0x11b8] sm:$0xff]
        %v709 = vld [vmem:[%s119 + $0x11c0] sm:$0xff]
        %v710 = vld [vmem:[%s119 + $0x11c8] sm:$0xff]
        %v711 = vld [vmem:[%s119 + $0x11d0] sm:$0xff]
        %v712 = vld [vmem:[%s119 + $0x11d8] sm:$0xff]
        %v713 = vld [vmem:[%s119 + $0x11e0] sm:$0xff]
        %v714 = vld [vmem:[%s119 + $0x11e8] sm:$0xff]
        %v715 = vld [vmem:[%s119 + $0x11f0] sm:$0xff]
        %v716 = vld [vmem:[%s119 + $0x11f8] sm:$0xff]
        %v717 = vld [vmem:[%s119 + $0x1200] sm:$0xff]
        %v718 = vld [vmem:[%s119 + $0x1208] sm:$0xff]
        %v719 = vld [vmem:[%s119 + $0x1210] sm:$0xff]
        %v720 = vld [vmem:[%s119 + $0x1218] sm:$0xff]
        %v721 = vld [vmem:[%s119 + $0x1220] sm:$0xff]
        %v722 = vld [vmem:[%s119 + $0x1228] sm:$0xff]
        %v723 = vld [vmem:[%s119 + $0x1230] sm:$0xff]
        %v724 = vld [vmem:[%s119 + $0x1238] sm:$0xff]
        %v725 = vld [vmem:[%s119 + $0x1240] sm:$0xff]
        %v726 = vld [vmem:[%s119 + $0x1248] sm:$0xff]
        %v727 = vld [vmem:[%s119 + $0x1250] sm:$0xff]
        %v728 = vld [vmem:[%s119 + $0x1258] sm:$0xff]
        %v729 = vld [vmem:[%s119 + $0x1260] sm:$0xff]
        %v730 = vld [vmem:[%s119 + $0x1268] sm:$0xff]
        %v731 = vld [vmem:[%s119 + $0x1270] sm:$0xff]
        %v732 = vld [vmem:[%s119 + $0x1278] sm:$0xff]
        %v733 = vld [vmem:[%s119 + $0x1280] sm:$0xff]
        %v734 = vld [vmem:[%s119 + $0x1288] sm:$0xff]
        %v735 = vld [vmem:[%s119 + $0x1290] sm:$0xff]
        %v736 = vld [vmem:[%s119 + $0x1298] sm:$0xff]
        %v737 = vld [vmem:[%s119 + $0x12a0] sm:$0xff]
        %v738 = vld [vmem:[%s119 + $0x12a8] sm:$0xff]
        %v739 = vld [vmem:[%s119 + $0x12b0] sm:$0xff]
        %v740 = vld [vmem:[%s119 + $0x12b8] sm:$0xff]
        %v741 = vld [vmem:[%s119 + $0x12c0] sm:$0xff]
        %v742 = vld [vmem:[%s119 + $0x12c8] sm:$0xff]
        %v743 = vld [vmem:[%s119 + $0x12d0] sm:$0xff]
        %v744 = vld [vmem:[%s119 + $0x12d8] sm:$0xff]
        %v745 = vld [vmem:[%s119 + $0x12e0] sm:$0xff]
        %v746 = vld [vmem:[%s119 + $0x12e8] sm:$0xff]
        %v747 = vld [vmem:[%s119 + $0x12f0] sm:$0xff]
        %v748 = vld [vmem:[%s119 + $0x12f8] sm:$0xff]
        %v749 = vld [vmem:[%s119 + $0x1300] sm:$0xff]
        %v750 = vld [vmem:[%s119 + $0x1308] sm:$0xff]
        %v751 = vld [vmem:[%s119 + $0x1310] sm:$0xff]
        %v752 = vld [vmem:[%s119 + $0x1318] sm:$0xff]
        %v753 = vld [vmem:[%s119 + $0x1320] sm:$0xff]
        %v754 = vld [vmem:[%s119 + $0x1328] sm:$0xff]
        %v755 = vld [vmem:[%s119 + $0x1330] sm:$0xff]
        %v756 = vld [vmem:[%s119 + $0x1338] sm:$0xff]
        %v757 = vld [vmem:[%s119 + $0x1340] sm:$0xff]
        %v758 = vld [vmem:[%s119 + $0x1348] sm:$0xff]
        %v759 = vld [vmem:[%s119 + $0x1350] sm:$0xff]
        %v760 = vld [vmem:[%s119 + $0x1358] sm:$0xff]
        %v761 = vld [vmem:[%s119 + $0x1360] sm:$0xff]
        %v762 = vld [vmem:[%s119 + $0x1368] sm:$0xff]
        %v763 = vld [vmem:[%s119 + $0x1370] sm:$0xff]
        %v764 = vld [vmem:[%s119 + $0x1378] sm:$0xff]
        %v765 = vld [vmem:[%s119 + $0x1380] sm:$0xff]
        %v766 = vld [vmem:[%s119 + $0x1388] sm:$0xff]
        %v767 = vld [vmem:[%s119 + $0x1390] sm:$0xff]
        %v768 = vld [vmem:[%s119 + $0x1398] sm:$0xff]
        %v769 = vld [vmem:[%s119 + $0x13a0] sm:$0xff]
        %v770 = vld [vmem:[%s119 + $0x13a8] sm:$0xff]
        %v771 = vld [vmem:[%s119 + $0x13b0] sm:$0xff]
        %v772 = vld [vmem:[%s119 + $0x13b8] sm:$0xff]
        %v773 = vld [vmem:[%s119 + $0x13c0] sm:$0xff]
        %v774 = vld [vmem:[%s119 + $0x13c8] sm:$0xff]
        %v775 = vld [vmem:[%s119 + $0x13d0] sm:$0xff]
        %v776 = vld [vmem:[%s119 + $0x13d8] sm:$0xff]
        %v777 = vld [vmem:[%s119 + $0x13e0] sm:$0xff]
        %v778 = vld [vmem:[%s119 + $0x13e8] sm:$0xff]
        %v779 = vld [vmem:[%s119 + $0x13f0] sm:$0xff]
        %v780 = vld [vmem:[%s119 + $0x13f8] sm:$0xff]
        %v781 = vld [vmem:[%s119 + $0x1400] sm:$0xff]
        %v782 = vld [vmem:[%s119 + $0x1408] sm:$0xff]
        %v783 = vld [vmem:[%s119 + $0x1410] sm:$0xff]
        %v784 = vld [vmem:[%s119 + $0x1418] sm:$0xff]
        %v785 = vld [vmem:[%s119 + $0x1420] sm:$0xff]
        %v786 = vld [vmem:[%s119 + $0x1428] sm:$0xff]
        %v787 = vld [vmem:[%s119 + $0x1430] sm:$0xff]
        %v788 = vld [vmem:[%s119 + $0x1438] sm:$0xff]
        %v789 = vld [vmem:[%s119 + $0x1440] sm:$0xff]
        %v790 = vld [vmem:[%s119 + $0x1448] sm:$0xff]
        %v791 = vld [vmem:[%s119 + $0x1450] sm:$0xff]
        %v792 = vld [vmem:[%s119 + $0x1458] sm:$0xff]
        %v793 = vld [vmem:[%s119 + $0x1460] sm:$0xff]
        %v794 = vld [vmem:[%s119 + $0x1468] sm:$0xff]
        %v795 = vld [vmem:[%s119 + $0x1470] sm:$0xff]
        %v796 = vld [vmem:[%s119 + $0x1478] sm:$0xff]
        %v797 = vld [vmem:[%s119 + $0x1480] sm:$0xff]
        %v798 = vld [vmem:[%s119 + $0x1488] sm:$0xff]
        %v799 = vld [vmem:[%s119 + $0x1490] sm:$0xff]
        %v800 = vld [vmem:[%s119 + $0x1498] sm:$0xff]
        %v801 = vld [vmem:[%s119 + $0x14a0] sm:$0xff]
        %v802 = vld [vmem:[%s119 + $0x14a8] sm:$0xff]
        %v803 = vld [vmem:[%s119 + $0x14b0] sm:$0xff]
        %v804 = vld [vmem:[%s119 + $0x14b8] sm:$0xff]
        %v805 = vld [vmem:[%s119 + $0x14c0] sm:$0xff]
        %v806 = vld [vmem:[%s119 + $0x14c8] sm:$0xff]
        %v807 = vld [vmem:[%s119 + $0x14d0] sm:$0xff]
        %v808 = vld [vmem:[%s119 + $0x14d8] sm:$0xff]
        %v809 = vld [vmem:[%s119 + $0x14e0] sm:$0xff]
        %v810 = vld [vmem:[%s119 + $0x14e8] sm:$0xff]
        %v811 = vld [vmem:[%s119 + $0x14f0] sm:$0xff]
        %v812 = vld [vmem:[%s119 + $0x14f8] sm:$0xff]
        %v813 = vld [vmem:[%s119 + $0x1500] sm:$0xff]
        %v814 = vld [vmem:[%s119 + $0x1508] sm:$0xff]
        %v815 = vld [vmem:[%s119 + $0x1510] sm:$0xff]
        %v816 = vld [vmem:[%s119 + $0x1518] sm:$0xff]
        %v817 = vld [vmem:[%s119 + $0x1520] sm:$0xff]
        %v818 = vld [vmem:[%s119 + $0x1528] sm:$0xff]
        %v819 = vld [vmem:[%s119 + $0x1530] sm:$0xff]
        %v820 = vld [vmem:[%s119 + $0x1538] sm:$0xff]
        %v821 = vld [vmem:[%s119 + $0x1540] sm:$0xff]
        %v822 = vld [vmem:[%s119 + $0x1548] sm:$0xff]
        %v823 = vld [vmem:[%s119 + $0x1550] sm:$0xff]
        %v824 = vld [vmem:[%s119 + $0x1558] sm:$0xff]
        %v825 = vld [vmem:[%s119 + $0x1560] sm:$0xff]
        %v826 = vld [vmem:[%s119 + $0x1568] sm:$0xff]
        %v827 = vld [vmem:[%s119 + $0x1570] sm:$0xff]
        %v828 = vld [vmem:[%s119 + $0x1578] sm:$0xff]
        %v829 = vld [vmem:[%s119 + $0x1580] sm:$0xff]
        %v830 = vld [vmem:[%s119 + $0x1588] sm:$0xff]
        %v831 = vld [vmem:[%s119 + $0x1590] sm:$0xff]
        %v832 = vld [vmem:[%s119 + $0x1598] sm:$0xff]
        %v833 = vld [vmem:[%s119 + $0x15a0] sm:$0xff]
        %v834 = vld [vmem:[%s119 + $0x15a8] sm:$0xff]
        %v835 = vld [vmem:[%s119 + $0x15b0] sm:$0xff]
        %v836 = vld [vmem:[%s119 + $0x15b8] sm:$0xff]
        %v837 = vld [vmem:[%s119 + $0x15c0] sm:$0xff]
        %v838 = vld [vmem:[%s119 + $0x15c8] sm:$0xff]
        %v839 = vld [vmem:[%s119 + $0x15d0] sm:$0xff]
        %v840 = vld [vmem:[%s119 + $0x15d8] sm:$0xff]
        %v841 = vld [vmem:[%s119 + $0x15e0] sm:$0xff]
        %v842 = vld [vmem:[%s119 + $0x15e8] sm:$0xff]
        %v843 = vld [vmem:[%s119 + $0x15f0] sm:$0xff]
        %v844 = vld [vmem:[%s119 + $0x15f8] sm:$0xff]
        %v845 = vld [vmem:[%s119 + $0x1600] sm:$0xff]
        %v846 = vld [vmem:[%s119 + $0x1608] sm:$0xff]
        %v847 = vld [vmem:[%s119 + $0x1610] sm:$0xff]
        %v848 = vld [vmem:[%s119 + $0x1618] sm:$0xff]
        %v849 = vld [vmem:[%s119 + $0x1620] sm:$0xff]
        %v850 = vld [vmem:[%s119 + $0x1628] sm:$0xff]
        %v851 = vld [vmem:[%s119 + $0x1630] sm:$0xff]
        %v852 = vld [vmem:[%s119 + $0x1638] sm:$0xff]
        %v853 = vld [vmem:[%s119 + $0x1640] sm:$0xff]
        %v854 = vld [vmem:[%s119 + $0x1648] sm:$0xff]
        %v855 = vld [vmem:[%s119 + $0x1650] sm:$0xff]
        %v856 = vld [vmem:[%s119 + $0x1658] sm:$0xff]
        %v857 = vld [vmem:[%s119 + $0x1660] sm:$0xff]
        %v858 = vld [vmem:[%s119 + $0x1668] sm:$0xff]
        %v859 = vld [vmem:[%s119 + $0x1670] sm:$0xff]
        %v860 = vld [vmem:[%s119 + $0x1678] sm:$0xff]
        %v861 = vld [vmem:[%s119 + $0x1680] sm:$0xff]
        %v862 = vld [vmem:[%s119 + $0x1688] sm:$0xff]
        %v863 = vld [vmem:[%s119 + $0x1690] sm:$0xff]
        %v864 = vld [vmem:[%s119 + $0x1698] sm:$0xff]
        %v865 = vld [vmem:[%s119 + $0x16a0] sm:$0xff]
        %v866 = vld [vmem:[%s119 + $0x16a8] sm:$0xff]
        %v867 = vld [vmem:[%s119 + $0x16b0] sm:$0xff]
        %v868 = vld [vmem:[%s119 + $0x16b8] sm:$0xff]
        %v869 = vld [vmem:[%s119 + $0x16c0] sm:$0xff]
        %v870 = vld [vmem:[%s119 + $0x16c8] sm:$0xff]
        %v871 = vld [vmem:[%s119 + $0x16d0] sm:$0xff]
        %v872 = vld [vmem:[%s119 + $0x16d8] sm:$0xff]
        %v873 = vld [vmem:[%s119 + $0x16e0] sm:$0xff]
        %v874 = vld [vmem:[%s119 + $0x16e8] sm:$0xff]
        %v875 = vld [vmem:[%s119 + $0x16f0] sm:$0xff]
        %v876 = vld [vmem:[%s119 + $0x16f8] sm:$0xff]
        %v877 = vld [vmem:[%s119 + $0x1700] sm:$0xff]
        %v878 = vld [vmem:[%s119 + $0x1708] sm:$0xff]
        %v879 = vld [vmem:[%s119 + $0x1710] sm:$0xff]
        %v880 = vld [vmem:[%s119 + $0x1718] sm:$0xff]
        %v881 = vld [vmem:[%s119 + $0x1720] sm:$0xff]
        %v882 = vld [vmem:[%s119 + $0x1728] sm:$0xff]
        %v883 = vld [vmem:[%s119 + $0x1730] sm:$0xff]
        %v884 = vld [vmem:[%s119 + $0x1738] sm:$0xff]
        %v885 = vld [vmem:[%s119 + $0x1740] sm:$0xff]
        %v886 = vld [vmem:[%s119 + $0x1748] sm:$0xff]
        %v887 = vld [vmem:[%s119 + $0x1750] sm:$0xff]
        %v888 = vld [vmem:[%s119 + $0x1758] sm:$0xff]
        %v889 = vld [vmem:[%s119 + $0x1760] sm:$0xff]
        %v890 = vld [vmem:[%s119 + $0x1768] sm:$0xff]
        %v891 = vld [vmem:[%s119 + $0x1770] sm:$0xff]
        %v892 = vld [vmem:[%s119 + $0x1778] sm:$0xff]
        %v893 = vld [vmem:[%s119 + $0x1780] sm:$0xff]
        %v894 = vld [vmem:[%s119 + $0x1788] sm:$0xff]
        %v895 = vld [vmem:[%s119 + $0x1790] sm:$0xff]
        %v896 = vld [vmem:[%s119 + $0x1798] sm:$0xff]
        %v897 = vld [vmem:[%s119 + $0x17a0] sm:$0xff]
        %v898 = vld [vmem:[%s119 + $0x17a8] sm:$0xff]
        %v899 = vld [vmem:[%s119 + $0x17b0] sm:$0xff]
        %v900 = vld [vmem:[%s119 + $0x17b8] sm:$0xff]
        %v901 = vld [vmem:[%s119 + $0x17c0] sm:$0xff]
        %v902 = vld [vmem:[%s119 + $0x17c8] sm:$0xff]
        %v903 = vld [vmem:[%s119 + $0x17d0] sm:$0xff]
        %v904 = vld [vmem:[%s119 + $0x17d8] sm:$0xff]
        %v905 = vld [vmem:[%s119 + $0x17e0] sm:$0xff]
        %v906 = vld [vmem:[%s119 + $0x17e8] sm:$0xff]
        %v907 = vld [vmem:[%s119 + $0x17f0] sm:$0xff]
        %v908 = vld [vmem:[%s119 + $0x17f8] sm:$0xff]
        %v909 = vld [vmem:[%s119 + $0x1800] sm:$0xff]
        %v910 = vld [vmem:[%s119 + $0x1808] sm:$0xff]
        %v911 = vld [vmem:[%s119 + $0x1810] sm:$0xff]
        %v912 = vld [vmem:[%s119 + $0x1818] sm:$0xff]
        %v913 = vld [vmem:[%s119 + $0x1820] sm:$0xff]
        %v914 = vld [vmem:[%s119 + $0x1828] sm:$0xff]
        %v915 = vld [vmem:[%s119 + $0x1830] sm:$0xff]
        %v916 = vld [vmem:[%s119 + $0x1838] sm:$0xff]
        %v917 = vld [vmem:[%s119 + $0x1840] sm:$0xff]
        %v918 = vld [vmem:[%s119 + $0x1848] sm:$0xff]
        %v919 = vld [vmem:[%s119 + $0x1850] sm:$0xff]
        %v920 = vld [vmem:[%s119 + $0x1858] sm:$0xff]
        %v921 = vld [vmem:[%s119 + $0x1860] sm:$0xff]
        %v922 = vld [vmem:[%s119 + $0x1868] sm:$0xff]
        %v923 = vld [vmem:[%s119 + $0x1870] sm:$0xff]
        %v924 = vld [vmem:[%s119 + $0x1878] sm:$0xff]
        %v925 = vld [vmem:[%s119 + $0x1880] sm:$0xff]
        %v926 = vld [vmem:[%s119 + $0x1888] sm:$0xff]
        %v927 = vld [vmem:[%s119 + $0x1890] sm:$0xff]
        %v928 = vld [vmem:[%s119 + $0x1898] sm:$0xff]
        %v929 = vld [vmem:[%s119 + $0x18a0] sm:$0xff]
        %v930 = vld [vmem:[%s119 + $0x18a8] sm:$0xff]
        %v931 = vld [vmem:[%s119 + $0x18b0] sm:$0xff]
        %v932 = vld [vmem:[%s119 + $0x18b8] sm:$0xff]
        %v933 = vld [vmem:[%s119 + $0x18c0] sm:$0xff]
        %v934 = vld [vmem:[%s119 + $0x18c8] sm:$0xff]
        %v935 = vld [vmem:[%s119 + $0x18d0] sm:$0xff]
        %v936 = vld [vmem:[%s119 + $0x18d8] sm:$0xff]
        %v937 = vld [vmem:[%s119 + $0x18e0] sm:$0xff]
        %v938 = vld [vmem:[%s119 + $0x18e8] sm:$0xff]
        %v939 = vld [vmem:[%s119 + $0x18f0] sm:$0xff]
        %v940 = vld [vmem:[%s119 + $0x18f8] sm:$0xff]
        %v941 = vld [vmem:[%s119 + $0x1900] sm:$0xff]
        %v942 = vld [vmem:[%s119 + $0x1908] sm:$0xff]
        %v943 = vld [vmem:[%s119 + $0x1910] sm:$0xff]
        %v944 = vld [vmem:[%s119 + $0x1918] sm:$0xff]
        %v945 = vld [vmem:[%s119 + $0x1920] sm:$0xff]
        %v946 = vld [vmem:[%s119 + $0x1928] sm:$0xff]
        %v947 = vld [vmem:[%s119 + $0x1930] sm:$0xff]
        %v948 = vld [vmem:[%s119 + $0x1938] sm:$0xff]
        %v949 = vld [vmem:[%s119 + $0x1940] sm:$0xff]
        %v950 = vld [vmem:[%s119 + $0x1948] sm:$0xff]
        %v951 = vld [vmem:[%s119 + $0x1950] sm:$0xff]
        %v952 = vld [vmem:[%s119 + $0x1958] sm:$0xff]
        %v953 = vld [vmem:[%s119 + $0x1960] sm:$0xff]
        %v954 = vld [vmem:[%s119 + $0x1968] sm:$0xff]
        %v955 = vld [vmem:[%s119 + $0x1970] sm:$0xff]
        %v956 = vld [vmem:[%s119 + $0x1978] sm:$0xff]
        %v957 = vld [vmem:[%s119 + $0x1980] sm:$0xff]
        %v958 = vld [vmem:[%s119 + $0x1988] sm:$0xff]
        %v959 = vld [vmem:[%s119 + $0x1990] sm:$0xff]
        %v960 = vld [vmem:[%s119 + $0x1998] sm:$0xff]
        %v961 = vld [vmem:[%s119 + $0x19a0] sm:$0xff]
        %v962 = vld [vmem:[%s119 + $0x19a8] sm:$0xff]
        %v963 = vld [vmem:[%s119 + $0x19b0] sm:$0xff]
        %v964 = vld [vmem:[%s119 + $0x19b8] sm:$0xff]
        %v965 = vld [vmem:[%s119 + $0x19c0] sm:$0xff]
        %v966 = vld [vmem:[%s119 + $0x19c8] sm:$0xff]
        %v967 = vld [vmem:[%s119 + $0x19d0] sm:$0xff]
        %v968 = vld [vmem:[%s119 + $0x19d8] sm:$0xff]
        %v969 = vld [vmem:[%s119 + $0x19e0] sm:$0xff]
        %v970 = vld [vmem:[%s119 + $0x19e8] sm:$0xff]
        %v971 = vld [vmem:[%s119 + $0x19f0] sm:$0xff]
        %v972 = vld [vmem:[%s119 + $0x19f8] sm:$0xff]
        %v973 = vld [vmem:[%s119 + $0x1a00] sm:$0xff]
        %v974 = vld [vmem:[%s119 + $0x1a08] sm:$0xff]
        %v975 = vld [vmem:[%s119 + $0x1a10] sm:$0xff]
        %v976 = vld [vmem:[%s119 + $0x1a18] sm:$0xff]
        %v977 = vld [vmem:[%s119 + $0x1a20] sm:$0xff]
        %v978 = vld [vmem:[%s119 + $0x1a28] sm:$0xff]
        %v979 = vld [vmem:[%s119 + $0x1a30] sm:$0xff]
        %v980 = vld [vmem:[%s119 + $0x1a38] sm:$0xff]
        %v981 = vld [vmem:[%s119 + $0x1a40] sm:$0xff]
        %v982 = vld [vmem:[%s119 + $0x1a48] sm:$0xff]
        %v983 = vld [vmem:[%s119 + $0x1a50] sm:$0xff]
        %v984 = vld [vmem:[%s119 + $0x1a58] sm:$0xff]
        %v985 = vld [vmem:[%s119 + $0x1a60] sm:$0xff]
        %v986 = vld [vmem:[%s119 + $0x1a68] sm:$0xff]
        %v987 = vld [vmem:[%s119 + $0x1a70] sm:$0xff]
        %v988 = vld [vmem:[%s119 + $0x1a78] sm:$0xff]
        %v989 = vld [vmem:[%s119 + $0x1a80] sm:$0xff]
        %v990 = vld [vmem:[%s119 + $0x1a88] sm:$0xff]
        %v991 = vld [vmem:[%s119 + $0x1a90] sm:$0xff]
        %v992 = vld [vmem:[%s119 + $0x1a98] sm:$0xff]
        %v993 = vld [vmem:[%s119 + $0x1aa0] sm:$0xff]
        %v994 = vld [vmem:[%s119 + $0x1aa8] sm:$0xff]
        %v995 = vld [vmem:[%s119 + $0x1ab0] sm:$0xff]
        %v996 = vld [vmem:[%s119 + $0x1ab8] sm:$0xff]
        %v997 = vld [vmem:[%s119 + $0x1ac0] sm:$0xff]
        %v998 = vld [vmem:[%s119 + $0x1ac8] sm:$0xff]
        %v999 = vld [vmem:[%s119 + $0x1ad0] sm:$0xff]
        %v1000 = vld [vmem:[%s119 + $0x1ad8] sm:$0xff]
        %v1001 = vld [vmem:[%s119 + $0x1ae0] sm:$0xff]
        %v1002 = vld [vmem:[%s119 + $0x1ae8] sm:$0xff]
        %v1003 = vld [vmem:[%s119 + $0x1af0] sm:$0xff]
        %v1004 = vld [vmem:[%s119 + $0x1af8] sm:$0xff]
        %v1005 = vld [vmem:[%s119 + $0x1b00] sm:$0xff]
        %v1006 = vld [vmem:[%s119 + $0x1b08] sm:$0xff]
        %v1007 = vld [vmem:[%s119 + $0x1b10] sm:$0xff]
        %v1008 = vld [vmem:[%s119 + $0x1b18] sm:$0xff]
        %v1009 = vld [vmem:[%s119 + $0x1b20] sm:$0xff]
        %v1010 = vld [vmem:[%s119 + $0x1b28] sm:$0xff]
        %v1011 = vld [vmem:[%s119 + $0x1b30] sm:$0xff]
        %v1012 = vld [vmem:[%s119 + $0x1b38] sm:$0xff]
        %v1013 = vld [vmem:[%s119 + $0x1b40] sm:$0xff]
        %v1014 = vld [vmem:[%s119 + $0x1b48] sm:$0xff]
        %v1015 = vld [vmem:[%s119 + $0x1b50] sm:$0xff]
        %v1016 = vld [vmem:[%s119 + $0x1b58] sm:$0xff]
        %v1017 = vld [vmem:[%s119 + $0x1b60] sm:$0xff]
        %v1018 = vld [vmem:[%s119 + $0x1b68] sm:$0xff]
        %v1019 = vld [vmem:[%s119 + $0x1b70] sm:$0xff]
        %v1020 = vld [vmem:[%s119 + $0x1b78] sm:$0xff]
        %v1021 = vld [vmem:[%s119 + $0x1b80] sm:$0xff]
        %v1022 = vld [vmem:[%s119 + $0x1b88] sm:$0xff]
        %v1023 = vld [vmem:[%s119 + $0x1b90] sm:$0xff]
        %v1024 = vld [vmem:[%s119 + $0x1b98] sm:$0xff]
        %v1025 = vld [vmem:[%s119 + $0x1ba0] sm:$0xff]
        %v1026 = vld [vmem:[%s119 + $0x1ba8] sm:$0xff]
        %v1027 = vld [vmem:[%s119 + $0x1bb0] sm:$0xff]
        %v1028 = vld [vmem:[%s119 + $0x1bb8] sm:$0xff]
        %v1029 = vld [vmem:[%s119 + $0x1bc0] sm:$0xff]
        %v1030 = vld [vmem:[%s119 + $0x1bc8] sm:$0xff]
        %v1031 = vld [vmem:[%s119 + $0x1bd0] sm:$0xff]
        %v1032 = vld [vmem:[%s119 + $0x1bd8] sm:$0xff]
        %v1033 = vld [vmem:[%s119 + $0x1be0] sm:$0xff]
        %v1034 = vld [vmem:[%s119 + $0x1be8] sm:$0xff]
        %v1035 = vld [vmem:[%s119 + $0x1bf0] sm:$0xff]
        %v1036 = vld [vmem:[%s119 + $0x1bf8] sm:$0xff]
        %v1037 = vld [vmem:[%s119 + $0x1c00] sm:$0xff]
        %v1038 = vld [vmem:[%s119 + $0x1c08] sm:$0xff]
        %v1039 = vld [vmem:[%s119 + $0x1c10] sm:$0xff]
        %v1040 = vld [vmem:[%s119 + $0x1c18] sm:$0xff]
        %v1041 = vld [vmem:[%s119 + $0x1c20] sm:$0xff]
        %v1042 = vld [vmem:[%s119 + $0x1c28] sm:$0xff]
        %v1043 = vld [vmem:[%s119 + $0x1c30] sm:$0xff]
        %v1044 = vld [vmem:[%s119 + $0x1c38] sm:$0xff]
        %v1045 = vld [vmem:[%s119 + $0x1c40] sm:$0xff]
        %v1046 = vld [vmem:[%s119 + $0x1c48] sm:$0xff]
        %v1047 = vld [vmem:[%s119 + $0x1c50] sm:$0xff]
        %v1048 = vld [vmem:[%s119 + $0x1c58] sm:$0xff]
        %v1049 = vld [vmem:[%s119 + $0x1c60] sm:$0xff]
        %v1050 = vld [vmem:[%s119 + $0x1c68] sm:$0xff]
        %v1051 = vld [vmem:[%s119 + $0x1c70] sm:$0xff]
        %v1052 = vld [vmem:[%s119 + $0x1c78] sm:$0xff]
        %v1053 = vld [vmem:[%s119 + $0x1c80] sm:$0xff]
        %v1054 = vld [vmem:[%s119 + $0x1c88] sm:$0xff]
        %v1055 = vld [vmem:[%s119 + $0x1c90] sm:$0xff]
        %v1056 = vld [vmem:[%s119 + $0x1c98] sm:$0xff]
        %v1057 = vld [vmem:[%s119 + $0x1ca0] sm:$0xff]
        %v1058 = vld [vmem:[%s119 + $0x1ca8] sm:$0xff]
        %v1059 = vld [vmem:[%s119 + $0x1cb0] sm:$0xff]
        %v1060 = vld [vmem:[%s119 + $0x1cb8] sm:$0xff]
        %v1061 = vld [vmem:[%s119 + $0x1cc0] sm:$0xff]
        %v1062 = vld [vmem:[%s119 + $0x1cc8] sm:$0xff]
        %v1063 = vld [vmem:[%s119 + $0x1cd0] sm:$0xff]
        %v1064 = vld [vmem:[%s119 + $0x1cd8] sm:$0xff]
        %v1065 = vld [vmem:[%s119 + $0x1ce0] sm:$0xff]
        %v1066 = vld [vmem:[%s119 + $0x1ce8] sm:$0xff]
        %v1067 = vld [vmem:[%s119 + $0x1cf0] sm:$0xff]
        %v1068 = vld [vmem:[%s119 + $0x1cf8] sm:$0xff]
        %v1069 = vld [vmem:[%s119 + $0x1d00] sm:$0xff]
        %v1070 = vld [vmem:[%s119 + $0x1d08] sm:$0xff]
        %v1071 = vld [vmem:[%s119 + $0x1d10] sm:$0xff]
        %v1072 = vld [vmem:[%s119 + $0x1d18] sm:$0xff]
        %v1073 = vld [vmem:[%s119 + $0x1d20] sm:$0xff]
        %v1074 = vld [vmem:[%s119 + $0x1d28] sm:$0xff]
        %v1075 = vld [vmem:[%s119 + $0x1d30] sm:$0xff]
        %v1076 = vld [vmem:[%s119 + $0x1d38] sm:$0xff]
        %v1077 = vld [vmem:[%s119 + $0x1d40] sm:$0xff]
        %v1078 = vld [vmem:[%s119 + $0x1d48] sm:$0xff]
        %v1079 = vld [vmem:[%s119 + $0x1d50] sm:$0xff]
        %v1080 = vld [vmem:[%s119 + $0x1d58] sm:$0xff]
        %v1081 = vld [vmem:[%s119 + $0x1d60] sm:$0xff]
        %v1082 = vld [vmem:[%s119 + $0x1d68] sm:$0xff]
        %v1083 = vld [vmem:[%s119 + $0x1d70] sm:$0xff]
        %v1084 = vld [vmem:[%s119 + $0x1d78] sm:$0xff]
        %v1085 = vld [vmem:[%s119 + $0x1d80] sm:$0xff]
        %v1086 = vld [vmem:[%s119 + $0x1d88] sm:$0xff]
        %v1087 = vld [vmem:[%s119 + $0x1d90] sm:$0xff]
        %v1088 = vld [vmem:[%s119 + $0x1d98] sm:$0xff]
        %v1089 = vld [vmem:[%s119 + $0x1da0] sm:$0xff]
        %v1090 = vld [vmem:[%s119 + $0x1da8] sm:$0xff]
        %v1091 = vld [vmem:[%s119 + $0x1db0] sm:$0xff]
        %v1092 = vld [vmem:[%s119 + $0x1db8] sm:$0xff]
        %v1093 = vld [vmem:[%s119 + $0x1dc0] sm:$0xff]
        %v1094 = vld [vmem:[%s119 + $0x1dc8] sm:$0xff]
        %v1095 = vld [vmem:[%s119 + $0x1dd0] sm:$0xff]
        %v1096 = vld [vmem:[%s119 + $0x1dd8] sm:$0xff]
        %v1097 = vld [vmem:[%s119 + $0x1de0] sm:$0xff]
        %v1098 = vld [vmem:[%s119 + $0x1de8] sm:$0xff]
        %v1099 = vld [vmem:[%s119 + $0x1df0] sm:$0xff]
        %v1100 = vld [vmem:[%s119 + $0x1df8] sm:$0xff]
        %v1101 = vld [vmem:[%s119 + $0x1e00] sm:$0xff]
        %v1102 = vld [vmem:[%s119 + $0x1e08] sm:$0xff]
        %v1103 = vld [vmem:[%s119 + $0x1e10] sm:$0xff]
        %v1104 = vld [vmem:[%s119 + $0x1e18] sm:$0xff]
        %v1105 = vld [vmem:[%s119 + $0x1e20] sm:$0xff]
        %v1106 = vld [vmem:[%s119 + $0x1e28] sm:$0xff]
        %v1107 = vld [vmem:[%s119 + $0x1e30] sm:$0xff]
        %v1108 = vld [vmem:[%s119 + $0x1e38] sm:$0xff]
        %v1109 = vld [vmem:[%s119 + $0x1e40] sm:$0xff]
        %v1110 = vld [vmem:[%s119 + $0x1e48] sm:$0xff]
        %v1111 = vld [vmem:[%s119 + $0x1e50] sm:$0xff]
        %v1112 = vld [vmem:[%s119 + $0x1e58] sm:$0xff]
        %v1113 = vld [vmem:[%s119 + $0x1e60] sm:$0xff]
        %v1114 = vld [vmem:[%s119 + $0x1e68] sm:$0xff]
        %v1115 = vld [vmem:[%s119 + $0x1e70] sm:$0xff]
        %v1116 = vld [vmem:[%s119 + $0x1e78] sm:$0xff]
        %v1117 = vld [vmem:[%s119 + $0x1e80] sm:$0xff]
        %v1118 = vld [vmem:[%s119 + $0x1e88] sm:$0xff]
        %v1119 = vld [vmem:[%s119 + $0x1e90] sm:$0xff]
        %v1120 = vld [vmem:[%s119 + $0x1e98] sm:$0xff]
        %v1121 = vld [vmem:[%s119 + $0x1ea0] sm:$0xff]
        %v1122 = vld [vmem:[%s119 + $0x1ea8] sm:$0xff]
        %v1123 = vld [vmem:[%s119 + $0x1eb0] sm:$0xff]
        %v1124 = vld [vmem:[%s119 + $0x1eb8] sm:$0xff]
        %v1125 = vld [vmem:[%s119 + $0x1ec0] sm:$0xff]
        %v1126 = vld [vmem:[%s119 + $0x1ec8] sm:$0xff]
        %v1127 = vld [vmem:[%s119 + $0x1ed0] sm:$0xff]
        %v1128 = vld [vmem:[%s119 + $0x1ed8] sm:$0xff]
        %v1129 = vld [vmem:[%s119 + $0x1ee0] sm:$0xff]
        %v1130 = vld [vmem:[%s119 + $0x1ee8] sm:$0xff]
        %v1131 = vld [vmem:[%s119 + $0x1ef0] sm:$0xff]
        %v1132 = vld [vmem:[%s119 + $0x1ef8] sm:$0xff]
        %v1133 = vld [vmem:[%s119 + $0x1f00] sm:$0xff]
        %v1134 = vld [vmem:[%s119 + $0x1f08] sm:$0xff]
        %v1135 = vld [vmem:[%s119 + $0x1f10] sm:$0xff]
        %v1136 = vld [vmem:[%s119 + $0x1f18] sm:$0xff]
        %v1137 = vld [vmem:[%s119 + $0x1f20] sm:$0xff]
        %v1138 = vld [vmem:[%s119 + $0x1f28] sm:$0xff]
        %v1139 = vld [vmem:[%s119 + $0x1f30] sm:$0xff]
        %v1140 = vld [vmem:[%s119 + $0x1f38] sm:$0xff]
        %v1141 = vld [vmem:[%s119 + $0x1f40] sm:$0xff]
        %v1142 = vld [vmem:[%s119 + $0x1f48] sm:$0xff]
        %v1143 = vld [vmem:[%s119 + $0x1f50] sm:$0xff]
        %v1144 = vld [vmem:[%s119 + $0x1f58] sm:$0xff]
        %v1145 = vld [vmem:[%s119 + $0x1f60] sm:$0xff]
        %v1146 = vld [vmem:[%s119 + $0x1f68] sm:$0xff]
        %v1147 = vld [vmem:[%s119 + $0x1f70] sm:$0xff]
        %v1148 = vld [vmem:[%s119 + $0x1f78] sm:$0xff]
        %v1149 = vld [vmem:[%s119 + $0x1f80] sm:$0xff]
        %v1150 = vld [vmem:[%s119 + $0x1f88] sm:$0xff]
        %v1151 = vld [vmem:[%s119 + $0x1f90] sm:$0xff]
        %v1152 = vld [vmem:[%s119 + $0x1f98] sm:$0xff]
        %v1153 = vld [vmem:[%s119 + $0x1fa0] sm:$0xff]
        %v1154 = vld [vmem:[%s119 + $0x1fa8] sm:$0xff]
        %v1155 = vld [vmem:[%s119 + $0x1fb0] sm:$0xff]
        %v1156 = vld [vmem:[%s119 + $0x1fb8] sm:$0xff]
        %v1157 = vld [vmem:[%s119 + $0x1fc0] sm:$0xff]
        %v1158 = vld [vmem:[%s119 + $0x1fc8] sm:$0xff]
        %v1159 = vld [vmem:[%s119 + $0x1fd0] sm:$0xff]
        %v1160 = vld [vmem:[%s119 + $0x1fd8] sm:$0xff]
        %v1161 = vld [vmem:[%s119 + $0x1fe0] sm:$0xff]
        %v1162 = vld [vmem:[%s119 + $0x1fe8] sm:$0xff]
        %v1163 = vld [vmem:[%s119 + $0x1ff0] sm:$0xff]
        %v1164 = vld [vmem:[%s119 + $0x1ff8] sm:$0xff]
        %v1165 = vstv %s140
        %v1166 = vmul.f32 %v141, %v1165
        %v1167 = vmul.f32 %v142, %v1165
        %v1168 = vmul.f32 %v143, %v1165
        %v1169 = vmul.f32 %v144, %v1165
        %v1170 = vmul.f32 %v145, %v1165
        %v1171 = vmul.f32 %v146, %v1165
        %v1172 = vmul.f32 %v147, %v1165
        %v1173 = vmul.f32 %v148, %v1165
        %v1174 = vmul.f32 %v149, %v1165
        %v1175 = vmul.f32 %v150, %v1165
        %v1176 = vmul.f32 %v151, %v1165
        %v1177 = vmul.f32 %v152, %v1165
        %v1178 = vmul.f32 %v153, %v1165
        %v1179 = vmul.f32 %v154, %v1165
        %v1180 = vmul.f32 %v155, %v1165
        %v1181 = vmul.f32 %v156, %v1165
        %v1182 = vmul.f32 %v157, %v1165
        %v1183 = vmul.f32 %v158, %v1165
        %v1184 = vmul.f32 %v159, %v1165
        %v1185 = vmul.f32 %v160, %v1165
        %v1186 = vmul.f32 %v161, %v1165
        %v1187 = vmul.f32 %v162, %v1165
        %v1188 = vmul.f32 %v163, %v1165
        %v1189 = vmul.f32 %v164, %v1165
        %v1190 = vmul.f32 %v165, %v1165
        %v1191 = vmul.f32 %v166, %v1165
        %v1192 = vmul.f32 %v167, %v1165
        %v1193 = vmul.f32 %v168, %v1165
        %v1194 = vmul.f32 %v169, %v1165
        %v1195 = vmul.f32 %v170, %v1165
        %v1196 = vmul.f32 %v171, %v1165
        %v1197 = vmul.f32 %v172, %v1165
        %v1198 = vmul.f32 %v173, %v1165
        %v1199 = vmul.f32 %v174, %v1165
        %v1200 = vmul.f32 %v175, %v1165
        %v1201 = vmul.f32 %v176, %v1165
        %v1202 = vmul.f32 %v177, %v1165
        %v1203 = vmul.f32 %v178, %v1165
        %v1204 = vmul.f32 %v179, %v1165
        %v1205 = vmul.f32 %v180, %v1165
        %v1206 = vmul.f32 %v181, %v1165
        %v1207 = vmul.f32 %v182, %v1165
        %v1208 = vmul.f32 %v183, %v1165
        %v1209 = vmul.f32 %v184, %v1165
        %v1210 = vmul.f32 %v185, %v1165
        %v1211 = vmul.f32 %v186, %v1165
        %v1212 = vmul.f32 %v187, %v1165
        %v1213 = vmul.f32 %v188, %v1165
        %v1214 = vmul.f32 %v189, %v1165
        %v1215 = vmul.f32 %v190, %v1165
        %v1216 = vmul.f32 %v191, %v1165
        %v1217 = vmul.f32 %v192, %v1165
        %v1218 = vmul.f32 %v193, %v1165
        %v1219 = vmul.f32 %v194, %v1165
        %v1220 = vmul.f32 %v195, %v1165
        %v1221 = vmul.f32 %v196, %v1165
        %v1222 = vmul.f32 %v197, %v1165
        %v1223 = vmul.f32 %v198, %v1165
        %v1224 = vmul.f32 %v199, %v1165
        %v1225 = vmul.f32 %v200, %v1165
        %v1226 = vmul.f32 %v201, %v1165
        %v1227 = vmul.f32 %v202, %v1165
        %v1228 = vmul.f32 %v203, %v1165
        %v1229 = vmul.f32 %v204, %v1165
        %v1230 = vmul.f32 %v205, %v1165
        %v1231 = vmul.f32 %v206, %v1165
        %v1232 = vmul.f32 %v207, %v1165
        %v1233 = vmul.f32 %v208, %v1165
        %v1234 = vmul.f32 %v209, %v1165
        %v1235 = vmul.f32 %v210, %v1165
        %v1236 = vmul.f32 %v211, %v1165
        %v1237 = vmul.f32 %v212, %v1165
        %v1238 = vmul.f32 %v213, %v1165
        %v1239 = vmul.f32 %v214, %v1165
        %v1240 = vmul.f32 %v215, %v1165
        %v1241 = vmul.f32 %v216, %v1165
        %v1242 = vmul.f32 %v217, %v1165
        %v1243 = vmul.f32 %v218, %v1165
        %v1244 = vmul.f32 %v219, %v1165
        %v1245 = vmul.f32 %v220, %v1165
        %v1246 = vmul.f32 %v221, %v1165
        %v1247 = vmul.f32 %v222, %v1165
        %v1248 = vmul.f32 %v223, %v1165
        %v1249 = vmul.f32 %v224, %v1165
        %v1250 = vmul.f32 %v225, %v1165
        %v1251 = vmul.f32 %v226, %v1165
        %v1252 = vmul.f32 %v227, %v1165
        %v1253 = vmul.f32 %v228, %v1165
        %v1254 = vmul.f32 %v229, %v1165
        %v1255 = vmul.f32 %v230, %v1165
        %v1256 = vmul.f32 %v231, %v1165
        %v1257 = vmul.f32 %v232, %v1165
        %v1258 = vmul.f32 %v233, %v1165
        %v1259 = vmul.f32 %v234, %v1165
        %v1260 = vmul.f32 %v235, %v1165
        %v1261 = vmul.f32 %v236, %v1165
        %v1262 = vmul.f32 %v237, %v1165
        %v1263 = vmul.f32 %v238, %v1165
        %v1264 = vmul.f32 %v239, %v1165
        %v1265 = vmul.f32 %v240, %v1165
        %v1266 = vmul.f32 %v241, %v1165
        %v1267 = vmul.f32 %v242, %v1165
        %v1268 = vmul.f32 %v243, %v1165
        %v1269 = vmul.f32 %v244, %v1165
        %v1270 = vmul.f32 %v245, %v1165
        %v1271 = vmul.f32 %v246, %v1165
        %v1272 = vmul.f32 %v247, %v1165
        %v1273 = vmul.f32 %v248, %v1165
        %v1274 = vmul.f32 %v249, %v1165
        %v1275 = vmul.f32 %v250, %v1165
        %v1276 = vmul.f32 %v251, %v1165
        %v1277 = vmul.f32 %v252, %v1165
        %v1278 = vmul.f32 %v253, %v1165
        %v1279 = vmul.f32 %v254, %v1165
        %v1280 = vmul.f32 %v255, %v1165
        %v1281 = vmul.f32 %v256, %v1165
        %v1282 = vmul.f32 %v257, %v1165
        %v1283 = vmul.f32 %v258, %v1165
        %v1284 = vmul.f32 %v259, %v1165
        %v1285 = vmul.f32 %v260, %v1165
        %v1286 = vmul.f32 %v261, %v1165
        %v1287 = vmul.f32 %v262, %v1165
        %v1288 = vmul.f32 %v263, %v1165
        %v1289 = vmul.f32 %v264, %v1165
        %v1290 = vmul.f32 %v265, %v1165
        %v1291 = vmul.f32 %v266, %v1165
        %v1292 = vmul.f32 %v267, %v1165
        %v1293 = vmul.f32 %v268, %v1165
        %v1294 = vmul.f32 %v269, %v1165
        %v1295 = vmul.f32 %v270, %v1165
        %v1296 = vmul.f32 %v271, %v1165
        %v1297 = vmul.f32 %v272, %v1165
        %v1298 = vmul.f32 %v273, %v1165
        %v1299 = vmul.f32 %v274, %v1165
        %v1300 = vmul.f32 %v275, %v1165
        %v1301 = vmul.f32 %v276, %v1165
        %v1302 = vmul.f32 %v277, %v1165
        %v1303 = vmul.f32 %v278, %v1165
        %v1304 = vmul.f32 %v279, %v1165
        %v1305 = vmul.f32 %v280, %v1165
        %v1306 = vmul.f32 %v281, %v1165
        %v1307 = vmul.f32 %v282, %v1165
        %v1308 = vmul.f32 %v283, %v1165
        %v1309 = vmul.f32 %v284, %v1165
        %v1310 = vmul.f32 %v285, %v1165
        %v1311 = vmul.f32 %v286, %v1165
        %v1312 = vmul.f32 %v287, %v1165
        %v1313 = vmul.f32 %v288, %v1165
        %v1314 = vmul.f32 %v289, %v1165
        %v1315 = vmul.f32 %v290, %v1165
        %v1316 = vmul.f32 %v291, %v1165
        %v1317 = vmul.f32 %v292, %v1165
        %v1318 = vmul.f32 %v293, %v1165
        %v1319 = vmul.f32 %v294, %v1165
        %v1320 = vmul.f32 %v295, %v1165
        %v1321 = vmul.f32 %v296, %v1165
        %v1322 = vmul.f32 %v297, %v1165
        %v1323 = vmul.f32 %v298, %v1165
        %v1324 = vmul.f32 %v299, %v1165
        %v1325 = vmul.f32 %v300, %v1165
        %v1326 = vmul.f32 %v301, %v1165
        %v1327 = vmul.f32 %v302, %v1165
        %v1328 = vmul.f32 %v303, %v1165
        %v1329 = vmul.f32 %v304, %v1165
        %v1330 = vmul.f32 %v305, %v1165
        %v1331 = vmul.f32 %v306, %v1165
        %v1332 = vmul.f32 %v307, %v1165
        %v1333 = vmul.f32 %v308, %v1165
        %v1334 = vmul.f32 %v309, %v1165
        %v1335 = vmul.f32 %v310, %v1165
        %v1336 = vmul.f32 %v311, %v1165
        %v1337 = vmul.f32 %v312, %v1165
        %v1338 = vmul.f32 %v313, %v1165
        %v1339 = vmul.f32 %v314, %v1165
        %v1340 = vmul.f32 %v315, %v1165
        %v1341 = vmul.f32 %v316, %v1165
        %v1342 = vmul.f32 %v317, %v1165
        %v1343 = vmul.f32 %v318, %v1165
        %v1344 = vmul.f32 %v319, %v1165
        %v1345 = vmul.f32 %v320, %v1165
        %v1346 = vmul.f32 %v321, %v1165
        %v1347 = vmul.f32 %v322, %v1165
        %v1348 = vmul.f32 %v323, %v1165
        %v1349 = vmul.f32 %v324, %v1165
        %v1350 = vmul.f32 %v325, %v1165
        %v1351 = vmul.f32 %v326, %v1165
        %v1352 = vmul.f32 %v327, %v1165
        %v1353 = vmul.f32 %v328, %v1165
        %v1354 = vmul.f32 %v329, %v1165
        %v1355 = vmul.f32 %v330, %v1165
        %v1356 = vmul.f32 %v331, %v1165
        %v1357 = vmul.f32 %v332, %v1165
        %v1358 = vmul.f32 %v333, %v1165
        %v1359 = vmul.f32 %v334, %v1165
        %v1360 = vmul.f32 %v335, %v1165
        %v1361 = vmul.f32 %v336, %v1165
        %v1362 = vmul.f32 %v337, %v1165
        %v1363 = vmul.f32 %v338, %v1165
        %v1364 = vmul.f32 %v339, %v1165
        %v1365 = vmul.f32 %v340, %v1165
        %v1366 = vmul.f32 %v341, %v1165
        %v1367 = vmul.f32 %v342, %v1165
        %v1368 = vmul.f32 %v343, %v1165
        %v1369 = vmul.f32 %v344, %v1165
        %v1370 = vmul.f32 %v345, %v1165
        %v1371 = vmul.f32 %v346, %v1165
        %v1372 = vmul.f32 %v347, %v1165
        %v1373 = vmul.f32 %v348, %v1165
        %v1374 = vmul.f32 %v349, %v1165
        %v1375 = vmul.f32 %v350, %v1165
        %v1376 = vmul.f32 %v351, %v1165
        %v1377 = vmul.f32 %v352, %v1165
        %v1378 = vmul.f32 %v353, %v1165
        %v1379 = vmul.f32 %v354, %v1165
        %v1380 = vmul.f32 %v355, %v1165
        %v1381 = vmul.f32 %v356, %v1165
        %v1382 = vmul.f32 %v357, %v1165
        %v1383 = vmul.f32 %v358, %v1165
        %v1384 = vmul.f32 %v359, %v1165
        %v1385 = vmul.f32 %v360, %v1165
        %v1386 = vmul.f32 %v361, %v1165
        %v1387 = vmul.f32 %v362, %v1165
        %v1388 = vmul.f32 %v363, %v1165
        %v1389 = vmul.f32 %v364, %v1165
        %v1390 = vmul.f32 %v365, %v1165
        %v1391 = vmul.f32 %v366, %v1165
        %v1392 = vmul.f32 %v367, %v1165
        %v1393 = vmul.f32 %v368, %v1165
        %v1394 = vmul.f32 %v369, %v1165
        %v1395 = vmul.f32 %v370, %v1165
        %v1396 = vmul.f32 %v371, %v1165
        %v1397 = vmul.f32 %v372, %v1165
        %v1398 = vmul.f32 %v373, %v1165
        %v1399 = vmul.f32 %v374, %v1165
        %v1400 = vmul.f32 %v375, %v1165
        %v1401 = vmul.f32 %v376, %v1165
        %v1402 = vmul.f32 %v377, %v1165
        %v1403 = vmul.f32 %v378, %v1165
        %v1404 = vmul.f32 %v379, %v1165
        %v1405 = vmul.f32 %v380, %v1165
        %v1406 = vmul.f32 %v381, %v1165
        %v1407 = vmul.f32 %v382, %v1165
        %v1408 = vmul.f32 %v383, %v1165
        %v1409 = vmul.f32 %v384, %v1165
        %v1410 = vmul.f32 %v385, %v1165
        %v1411 = vmul.f32 %v386, %v1165
        %v1412 = vmul.f32 %v387, %v1165
        %v1413 = vmul.f32 %v388, %v1165
        %v1414 = vmul.f32 %v389, %v1165
        %v1415 = vmul.f32 %v390, %v1165
        %v1416 = vmul.f32 %v391, %v1165
        %v1417 = vmul.f32 %v392, %v1165
        %v1418 = vmul.f32 %v393, %v1165
        %v1419 = vmul.f32 %v394, %v1165
        %v1420 = vmul.f32 %v395, %v1165
        %v1421 = vmul.f32 %v396, %v1165
        %v1422 = vmul.f32 %v397, %v1165
        %v1423 = vmul.f32 %v398, %v1165
        %v1424 = vmul.f32 %v399, %v1165
        %v1425 = vmul.f32 %v400, %v1165
        %v1426 = vmul.f32 %v401, %v1165
        %v1427 = vmul.f32 %v402, %v1165
        %v1428 = vmul.f32 %v403, %v1165
        %v1429 = vmul.f32 %v404, %v1165
        %v1430 = vmul.f32 %v405, %v1165
        %v1431 = vmul.f32 %v406, %v1165
        %v1432 = vmul.f32 %v407, %v1165
        %v1433 = vmul.f32 %v408, %v1165
        %v1434 = vmul.f32 %v409, %v1165
        %v1435 = vmul.f32 %v410, %v1165
        %v1436 = vmul.f32 %v411, %v1165
        %v1437 = vmul.f32 %v412, %v1165
        %v1438 = vmul.f32 %v413, %v1165
        %v1439 = vmul.f32 %v414, %v1165
        %v1440 = vmul.f32 %v415, %v1165
        %v1441 = vmul.f32 %v416, %v1165
        %v1442 = vmul.f32 %v417, %v1165
        %v1443 = vmul.f32 %v418, %v1165
        %v1444 = vmul.f32 %v419, %v1165
        %v1445 = vmul.f32 %v420, %v1165
        %v1446 = vmul.f32 %v421, %v1165
        %v1447 = vmul.f32 %v422, %v1165
        %v1448 = vmul.f32 %v423, %v1165
        %v1449 = vmul.f32 %v424, %v1165
        %v1450 = vmul.f32 %v425, %v1165
        %v1451 = vmul.f32 %v426, %v1165
        %v1452 = vmul.f32 %v427, %v1165
        %v1453 = vmul.f32 %v428, %v1165
        %v1454 = vmul.f32 %v429, %v1165
        %v1455 = vmul.f32 %v430, %v1165
        %v1456 = vmul.f32 %v431, %v1165
        %v1457 = vmul.f32 %v432, %v1165
        %v1458 = vmul.f32 %v433, %v1165
        %v1459 = vmul.f32 %v434, %v1165
        %v1460 = vmul.f32 %v435, %v1165
        %v1461 = vmul.f32 %v436, %v1165
        %v1462 = vmul.f32 %v437, %v1165
        %v1463 = vmul.f32 %v438, %v1165
        %v1464 = vmul.f32 %v439, %v1165
        %v1465 = vmul.f32 %v440, %v1165
        %v1466 = vmul.f32 %v441, %v1165
        %v1467 = vmul.f32 %v442, %v1165
        %v1468 = vmul.f32 %v443, %v1165
        %v1469 = vmul.f32 %v444, %v1165
        %v1470 = vmul.f32 %v445, %v1165
        %v1471 = vmul.f32 %v446, %v1165
        %v1472 = vmul.f32 %v447, %v1165
        %v1473 = vmul.f32 %v448, %v1165
        %v1474 = vmul.f32 %v449, %v1165
        %v1475 = vmul.f32 %v450, %v1165
        %v1476 = vmul.f32 %v451, %v1165
        %v1477 = vmul.f32 %v452, %v1165
        %v1478 = vmul.f32 %v453, %v1165
        %v1479 = vmul.f32 %v454, %v1165
        %v1480 = vmul.f32 %v455, %v1165
        %v1481 = vmul.f32 %v456, %v1165
        %v1482 = vmul.f32 %v457, %v1165
        %v1483 = vmul.f32 %v458, %v1165
        %v1484 = vmul.f32 %v459, %v1165
        %v1485 = vmul.f32 %v460, %v1165
        %v1486 = vmul.f32 %v461, %v1165
        %v1487 = vmul.f32 %v462, %v1165
        %v1488 = vmul.f32 %v463, %v1165
        %v1489 = vmul.f32 %v464, %v1165
        %v1490 = vmul.f32 %v465, %v1165
        %v1491 = vmul.f32 %v466, %v1165
        %v1492 = vmul.f32 %v467, %v1165
        %v1493 = vmul.f32 %v468, %v1165
        %v1494 = vmul.f32 %v469, %v1165
        %v1495 = vmul.f32 %v470, %v1165
        %v1496 = vmul.f32 %v471, %v1165
        %v1497 = vmul.f32 %v472, %v1165
        %v1498 = vmul.f32 %v473, %v1165
        %v1499 = vmul.f32 %v474, %v1165
        %v1500 = vmul.f32 %v475, %v1165
        %v1501 = vmul.f32 %v476, %v1165
        %v1502 = vmul.f32 %v477, %v1165
        %v1503 = vmul.f32 %v478, %v1165
        %v1504 = vmul.f32 %v479, %v1165
        %v1505 = vmul.f32 %v480, %v1165
        %v1506 = vmul.f32 %v481, %v1165
        %v1507 = vmul.f32 %v482, %v1165
        %v1508 = vmul.f32 %v483, %v1165
        %v1509 = vmul.f32 %v484, %v1165
        %v1510 = vmul.f32 %v485, %v1165
        %v1511 = vmul.f32 %v486, %v1165
        %v1512 = vmul.f32 %v487, %v1165
        %v1513 = vmul.f32 %v488, %v1165
        %v1514 = vmul.f32 %v489, %v1165
        %v1515 = vmul.f32 %v490, %v1165
        %v1516 = vmul.f32 %v491, %v1165
        %v1517 = vmul.f32 %v492, %v1165
        %v1518 = vmul.f32 %v493, %v1165
        %v1519 = vmul.f32 %v494, %v1165
        %v1520 = vmul.f32 %v495, %v1165
        %v1521 = vmul.f32 %v496, %v1165
        %v1522 = vmul.f32 %v497, %v1165
        %v1523 = vmul.f32 %v498, %v1165
        %v1524 = vmul.f32 %v499, %v1165
        %v1525 = vmul.f32 %v500, %v1165
        %v1526 = vmul.f32 %v501, %v1165
        %v1527 = vmul.f32 %v502, %v1165
        %v1528 = vmul.f32 %v503, %v1165
        %v1529 = vmul.f32 %v504, %v1165
        %v1530 = vmul.f32 %v505, %v1165
        %v1531 = vmul.f32 %v506, %v1165
        %v1532 = vmul.f32 %v507, %v1165
        %v1533 = vmul.f32 %v508, %v1165
        %v1534 = vmul.f32 %v509, %v1165
        %v1535 = vmul.f32 %v510, %v1165
        %v1536 = vmul.f32 %v511, %v1165
        %v1537 = vmul.f32 %v512, %v1165
        %v1538 = vmul.f32 %v513, %v1165
        %v1539 = vmul.f32 %v514, %v1165
        %v1540 = vmul.f32 %v515, %v1165
        %v1541 = vmul.f32 %v516, %v1165
        %v1542 = vmul.f32 %v517, %v1165
        %v1543 = vmul.f32 %v518, %v1165
        %v1544 = vmul.f32 %v519, %v1165
        %v1545 = vmul.f32 %v520, %v1165
        %v1546 = vmul.f32 %v521, %v1165
        %v1547 = vmul.f32 %v522, %v1165
        %v1548 = vmul.f32 %v523, %v1165
        %v1549 = vmul.f32 %v524, %v1165
        %v1550 = vmul.f32 %v525, %v1165
        %v1551 = vmul.f32 %v526, %v1165
        %v1552 = vmul.f32 %v527, %v1165
        %v1553 = vmul.f32 %v528, %v1165
        %v1554 = vmul.f32 %v529, %v1165
        %v1555 = vmul.f32 %v530, %v1165
        %v1556 = vmul.f32 %v531, %v1165
        %v1557 = vmul.f32 %v532, %v1165
        %v1558 = vmul.f32 %v533, %v1165
        %v1559 = vmul.f32 %v534, %v1165
        %v1560 = vmul.f32 %v535, %v1165
        %v1561 = vmul.f32 %v536, %v1165
        %v1562 = vmul.f32 %v537, %v1165
        %v1563 = vmul.f32 %v538, %v1165
        %v1564 = vmul.f32 %v539, %v1165
        %v1565 = vmul.f32 %v540, %v1165
        %v1566 = vmul.f32 %v541, %v1165
        %v1567 = vmul.f32 %v542, %v1165
        %v1568 = vmul.f32 %v543, %v1165
        %v1569 = vmul.f32 %v544, %v1165
        %v1570 = vmul.f32 %v545, %v1165
        %v1571 = vmul.f32 %v546, %v1165
        %v1572 = vmul.f32 %v547, %v1165
        %v1573 = vmul.f32 %v548, %v1165
        %v1574 = vmul.f32 %v549, %v1165
        %v1575 = vmul.f32 %v550, %v1165
        %v1576 = vmul.f32 %v551, %v1165
        %v1577 = vmul.f32 %v552, %v1165
        %v1578 = vmul.f32 %v553, %v1165
        %v1579 = vmul.f32 %v554, %v1165
        %v1580 = vmul.f32 %v555, %v1165
        %v1581 = vmul.f32 %v556, %v1165
        %v1582 = vmul.f32 %v557, %v1165
        %v1583 = vmul.f32 %v558, %v1165
        %v1584 = vmul.f32 %v559, %v1165
        %v1585 = vmul.f32 %v560, %v1165
        %v1586 = vmul.f32 %v561, %v1165
        %v1587 = vmul.f32 %v562, %v1165
        %v1588 = vmul.f32 %v563, %v1165
        %v1589 = vmul.f32 %v564, %v1165
        %v1590 = vmul.f32 %v565, %v1165
        %v1591 = vmul.f32 %v566, %v1165
        %v1592 = vmul.f32 %v567, %v1165
        %v1593 = vmul.f32 %v568, %v1165
        %v1594 = vmul.f32 %v569, %v1165
        %v1595 = vmul.f32 %v570, %v1165
        %v1596 = vmul.f32 %v571, %v1165
        %v1597 = vmul.f32 %v572, %v1165
        %v1598 = vmul.f32 %v573, %v1165
        %v1599 = vmul.f32 %v574, %v1165
        %v1600 = vmul.f32 %v575, %v1165
        %v1601 = vmul.f32 %v576, %v1165
        %v1602 = vmul.f32 %v577, %v1165
        %v1603 = vmul.f32 %v578, %v1165
        %v1604 = vmul.f32 %v579, %v1165
        %v1605 = vmul.f32 %v580, %v1165
        %v1606 = vmul.f32 %v581, %v1165
        %v1607 = vmul.f32 %v582, %v1165
        %v1608 = vmul.f32 %v583, %v1165
        %v1609 = vmul.f32 %v584, %v1165
        %v1610 = vmul.f32 %v585, %v1165
        %v1611 = vmul.f32 %v586, %v1165
        %v1612 = vmul.f32 %v587, %v1165
        %v1613 = vmul.f32 %v588, %v1165
        %v1614 = vmul.f32 %v589, %v1165
        %v1615 = vmul.f32 %v590, %v1165
        %v1616 = vmul.f32 %v591, %v1165
        %v1617 = vmul.f32 %v592, %v1165
        %v1618 = vmul.f32 %v593, %v1165
        %v1619 = vmul.f32 %v594, %v1165
        %v1620 = vmul.f32 %v595, %v1165
        %v1621 = vmul.f32 %v596, %v1165
        %v1622 = vmul.f32 %v597, %v1165
        %v1623 = vmul.f32 %v598, %v1165
        %v1624 = vmul.f32 %v599, %v1165
        %v1625 = vmul.f32 %v600, %v1165
        %v1626 = vmul.f32 %v601, %v1165
        %v1627 = vmul.f32 %v602, %v1165
        %v1628 = vmul.f32 %v603, %v1165
        %v1629 = vmul.f32 %v604, %v1165
        %v1630 = vmul.f32 %v605, %v1165
        %v1631 = vmul.f32 %v606, %v1165
        %v1632 = vmul.f32 %v607, %v1165
        %v1633 = vmul.f32 %v608, %v1165
        %v1634 = vmul.f32 %v609, %v1165
        %v1635 = vmul.f32 %v610, %v1165
        %v1636 = vmul.f32 %v611, %v1165
        %v1637 = vmul.f32 %v612, %v1165
        %v1638 = vmul.f32 %v613, %v1165
        %v1639 = vmul.f32 %v614, %v1165
        %v1640 = vmul.f32 %v615, %v1165
        %v1641 = vmul.f32 %v616, %v1165
        %v1642 = vmul.f32 %v617, %v1165
        %v1643 = vmul.f32 %v618, %v1165
        %v1644 = vmul.f32 %v619, %v1165
        %v1645 = vmul.f32 %v620, %v1165
        %v1646 = vmul.f32 %v621, %v1165
        %v1647 = vmul.f32 %v622, %v1165
        %v1648 = vmul.f32 %v623, %v1165
        %v1649 = vmul.f32 %v624, %v1165
        %v1650 = vmul.f32 %v625, %v1165
        %v1651 = vmul.f32 %v626, %v1165
        %v1652 = vmul.f32 %v627, %v1165
        %v1653 = vmul.f32 %v628, %v1165
        %v1654 = vmul.f32 %v629, %v1165
        %v1655 = vmul.f32 %v630, %v1165
        %v1656 = vmul.f32 %v631, %v1165
        %v1657 = vmul.f32 %v632, %v1165
        %v1658 = vmul.f32 %v633, %v1165
        %v1659 = vmul.f32 %v634, %v1165
        %v1660 = vmul.f32 %v635, %v1165
        %v1661 = vmul.f32 %v636, %v1165
        %v1662 = vmul.f32 %v637, %v1165
        %v1663 = vmul.f32 %v638, %v1165
        %v1664 = vmul.f32 %v639, %v1165
        %v1665 = vmul.f32 %v640, %v1165
        %v1666 = vmul.f32 %v641, %v1165
        %v1667 = vmul.f32 %v642, %v1165
        %v1668 = vmul.f32 %v643, %v1165
        %v1669 = vmul.f32 %v644, %v1165
        %v1670 = vmul.f32 %v645, %v1165
        %v1671 = vmul.f32 %v646, %v1165
        %v1672 = vmul.f32 %v647, %v1165
        %v1673 = vmul.f32 %v648, %v1165
        %v1674 = vmul.f32 %v649, %v1165
        %v1675 = vmul.f32 %v650, %v1165
        %v1676 = vmul.f32 %v651, %v1165
        %v1677 = vmul.f32 %v652, %v1165
        %v1678 = vmul.f32 %v653, %v1165
        %v1679 = vmul.f32 %v654, %v1165
        %v1680 = vmul.f32 %v655, %v1165
        %v1681 = vmul.f32 %v656, %v1165
        %v1682 = vmul.f32 %v657, %v1165
        %v1683 = vmul.f32 %v658, %v1165
        %v1684 = vmul.f32 %v659, %v1165
        %v1685 = vmul.f32 %v660, %v1165
        %v1686 = vmul.f32 %v661, %v1165
        %v1687 = vmul.f32 %v662, %v1165
        %v1688 = vmul.f32 %v663, %v1165
        %v1689 = vmul.f32 %v664, %v1165
        %v1690 = vmul.f32 %v665, %v1165
        %v1691 = vmul.f32 %v666, %v1165
        %v1692 = vmul.f32 %v667, %v1165
        %v1693 = vmul.f32 %v668, %v1165
        %v1694 = vmul.f32 %v669, %v1165
        %v1695 = vmul.f32 %v670, %v1165
        %v1696 = vmul.f32 %v671, %v1165
        %v1697 = vmul.f32 %v672, %v1165
        %v1698 = vmul.f32 %v673, %v1165
        %v1699 = vmul.f32 %v674, %v1165
        %v1700 = vmul.f32 %v675, %v1165
        %v1701 = vmul.f32 %v676, %v1165
        %v1702 = vmul.f32 %v677, %v1165
        %v1703 = vmul.f32 %v678, %v1165
        %v1704 = vmul.f32 %v679, %v1165
        %v1705 = vmul.f32 %v680, %v1165
        %v1706 = vmul.f32 %v681, %v1165
        %v1707 = vmul.f32 %v682, %v1165
        %v1708 = vmul.f32 %v683, %v1165
        %v1709 = vmul.f32 %v684, %v1165
        %v1710 = vmul.f32 %v685, %v1165
        %v1711 = vmul.f32 %v686, %v1165
        %v1712 = vmul.f32 %v687, %v1165
        %v1713 = vmul.f32 %v688, %v1165
        %v1714 = vmul.f32 %v689, %v1165
        %v1715 = vmul.f32 %v690, %v1165
        %v1716 = vmul.f32 %v691, %v1165
        %v1717 = vmul.f32 %v692, %v1165
        %v1718 = vmul.f32 %v693, %v1165
        %v1719 = vmul.f32 %v694, %v1165
        %v1720 = vmul.f32 %v695, %v1165
        %v1721 = vmul.f32 %v696, %v1165
        %v1722 = vmul.f32 %v697, %v1165
        %v1723 = vmul.f32 %v698, %v1165
        %v1724 = vmul.f32 %v699, %v1165
        %v1725 = vmul.f32 %v700, %v1165
        %v1726 = vmul.f32 %v701, %v1165
        %v1727 = vmul.f32 %v702, %v1165
        %v1728 = vmul.f32 %v703, %v1165
        %v1729 = vmul.f32 %v704, %v1165
        %v1730 = vmul.f32 %v705, %v1165
        %v1731 = vmul.f32 %v706, %v1165
        %v1732 = vmul.f32 %v707, %v1165
        %v1733 = vmul.f32 %v708, %v1165
        %v1734 = vmul.f32 %v709, %v1165
        %v1735 = vmul.f32 %v710, %v1165
        %v1736 = vmul.f32 %v711, %v1165
        %v1737 = vmul.f32 %v712, %v1165
        %v1738 = vmul.f32 %v713, %v1165
        %v1739 = vmul.f32 %v714, %v1165
        %v1740 = vmul.f32 %v715, %v1165
        %v1741 = vmul.f32 %v716, %v1165
        %v1742 = vmul.f32 %v717, %v1165
        %v1743 = vmul.f32 %v718, %v1165
        %v1744 = vmul.f32 %v719, %v1165
        %v1745 = vmul.f32 %v720, %v1165
        %v1746 = vmul.f32 %v721, %v1165
        %v1747 = vmul.f32 %v722, %v1165
        %v1748 = vmul.f32 %v723, %v1165
        %v1749 = vmul.f32 %v724, %v1165
        %v1750 = vmul.f32 %v725, %v1165
        %v1751 = vmul.f32 %v726, %v1165
        %v1752 = vmul.f32 %v727, %v1165
        %v1753 = vmul.f32 %v728, %v1165
        %v1754 = vmul.f32 %v729, %v1165
        %v1755 = vmul.f32 %v730, %v1165
        %v1756 = vmul.f32 %v731, %v1165
        %v1757 = vmul.f32 %v732, %v1165
        %v1758 = vmul.f32 %v733, %v1165
        %v1759 = vmul.f32 %v734, %v1165
        %v1760 = vmul.f32 %v735, %v1165
        %v1761 = vmul.f32 %v736, %v1165
        %v1762 = vmul.f32 %v737, %v1165
        %v1763 = vmul.f32 %v738, %v1165
        %v1764 = vmul.f32 %v739, %v1165
        %v1765 = vmul.f32 %v740, %v1165
        %v1766 = vmul.f32 %v741, %v1165
        %v1767 = vmul.f32 %v742, %v1165
        %v1768 = vmul.f32 %v743, %v1165
        %v1769 = vmul.f32 %v744, %v1165
        %v1770 = vmul.f32 %v745, %v1165
        %v1771 = vmul.f32 %v746, %v1165
        %v1772 = vmul.f32 %v747, %v1165
        %v1773 = vmul.f32 %v748, %v1165
        %v1774 = vmul.f32 %v749, %v1165
        %v1775 = vmul.f32 %v750, %v1165
        %v1776 = vmul.f32 %v751, %v1165
        %v1777 = vmul.f32 %v752, %v1165
        %v1778 = vmul.f32 %v753, %v1165
        %v1779 = vmul.f32 %v754, %v1165
        %v1780 = vmul.f32 %v755, %v1165
        %v1781 = vmul.f32 %v756, %v1165
        %v1782 = vmul.f32 %v757, %v1165
        %v1783 = vmul.f32 %v758, %v1165
        %v1784 = vmul.f32 %v759, %v1165
        %v1785 = vmul.f32 %v760, %v1165
        %v1786 = vmul.f32 %v761, %v1165
        %v1787 = vmul.f32 %v762, %v1165
        %v1788 = vmul.f32 %v763, %v1165
        %v1789 = vmul.f32 %v764, %v1165
        %v1790 = vmul.f32 %v765, %v1165
        %v1791 = vmul.f32 %v766, %v1165
        %v1792 = vmul.f32 %v767, %v1165
        %v1793 = vmul.f32 %v768, %v1165
        %v1794 = vmul.f32 %v769, %v1165
        %v1795 = vmul.f32 %v770, %v1165
        %v1796 = vmul.f32 %v771, %v1165
        %v1797 = vmul.f32 %v772, %v1165
        %v1798 = vmul.f32 %v773, %v1165
        %v1799 = vmul.f32 %v774, %v1165
        %v1800 = vmul.f32 %v775, %v1165
        %v1801 = vmul.f32 %v776, %v1165
        %v1802 = vmul.f32 %v777, %v1165
        %v1803 = vmul.f32 %v778, %v1165
        %v1804 = vmul.f32 %v779, %v1165
        %v1805 = vmul.f32 %v780, %v1165
        %v1806 = vmul.f32 %v781, %v1165
        %v1807 = vmul.f32 %v782, %v1165
        %v1808 = vmul.f32 %v783, %v1165
        %v1809 = vmul.f32 %v784, %v1165
        %v1810 = vmul.f32 %v785, %v1165
        %v1811 = vmul.f32 %v786, %v1165
        %v1812 = vmul.f32 %v787, %v1165
        %v1813 = vmul.f32 %v788, %v1165
        %v1814 = vmul.f32 %v789, %v1165
        %v1815 = vmul.f32 %v790, %v1165
        %v1816 = vmul.f32 %v791, %v1165
        %v1817 = vmul.f32 %v792, %v1165
        %v1818 = vmul.f32 %v793, %v1165
        %v1819 = vmul.f32 %v794, %v1165
        %v1820 = vmul.f32 %v795, %v1165
        %v1821 = vmul.f32 %v796, %v1165
        %v1822 = vmul.f32 %v797, %v1165
        %v1823 = vmul.f32 %v798, %v1165
        %v1824 = vmul.f32 %v799, %v1165
        %v1825 = vmul.f32 %v800, %v1165
        %v1826 = vmul.f32 %v801, %v1165
        %v1827 = vmul.f32 %v802, %v1165
        %v1828 = vmul.f32 %v803, %v1165
        %v1829 = vmul.f32 %v804, %v1165
        %v1830 = vmul.f32 %v805, %v1165
        %v1831 = vmul.f32 %v806, %v1165
        %v1832 = vmul.f32 %v807, %v1165
        %v1833 = vmul.f32 %v808, %v1165
        %v1834 = vmul.f32 %v809, %v1165
        %v1835 = vmul.f32 %v810, %v1165
        %v1836 = vmul.f32 %v811, %v1165
        %v1837 = vmul.f32 %v812, %v1165
        %v1838 = vmul.f32 %v813, %v1165
        %v1839 = vmul.f32 %v814, %v1165
        %v1840 = vmul.f32 %v815, %v1165
        %v1841 = vmul.f32 %v816, %v1165
        %v1842 = vmul.f32 %v817, %v1165
        %v1843 = vmul.f32 %v818, %v1165
        %v1844 = vmul.f32 %v819, %v1165
        %v1845 = vmul.f32 %v820, %v1165
        %v1846 = vmul.f32 %v821, %v1165
        %v1847 = vmul.f32 %v822, %v1165
        %v1848 = vmul.f32 %v823, %v1165
        %v1849 = vmul.f32 %v824, %v1165
        %v1850 = vmul.f32 %v825, %v1165
        %v1851 = vmul.f32 %v826, %v1165
        %v1852 = vmul.f32 %v827, %v1165
        %v1853 = vmul.f32 %v828, %v1165
        %v1854 = vmul.f32 %v829, %v1165
        %v1855 = vmul.f32 %v830, %v1165
        %v1856 = vmul.f32 %v831, %v1165
        %v1857 = vmul.f32 %v832, %v1165
        %v1858 = vmul.f32 %v833, %v1165
        %v1859 = vmul.f32 %v834, %v1165
        %v1860 = vmul.f32 %v835, %v1165
        %v1861 = vmul.f32 %v836, %v1165
        %v1862 = vmul.f32 %v837, %v1165
        %v1863 = vmul.f32 %v838, %v1165
        %v1864 = vmul.f32 %v839, %v1165
        %v1865 = vmul.f32 %v840, %v1165
        %v1866 = vmul.f32 %v841, %v1165
        %v1867 = vmul.f32 %v842, %v1165
        %v1868 = vmul.f32 %v843, %v1165
        %v1869 = vmul.f32 %v844, %v1165
        %v1870 = vmul.f32 %v845, %v1165
        %v1871 = vmul.f32 %v846, %v1165
        %v1872 = vmul.f32 %v847, %v1165
        %v1873 = vmul.f32 %v848, %v1165
        %v1874 = vmul.f32 %v849, %v1165
        %v1875 = vmul.f32 %v850, %v1165
        %v1876 = vmul.f32 %v851, %v1165
        %v1877 = vmul.f32 %v852, %v1165
        %v1878 = vmul.f32 %v853, %v1165
        %v1879 = vmul.f32 %v854, %v1165
        %v1880 = vmul.f32 %v855, %v1165
        %v1881 = vmul.f32 %v856, %v1165
        %v1882 = vmul.f32 %v857, %v1165
        %v1883 = vmul.f32 %v858, %v1165
        %v1884 = vmul.f32 %v859, %v1165
        %v1885 = vmul.f32 %v860, %v1165
        %v1886 = vmul.f32 %v861, %v1165
        %v1887 = vmul.f32 %v862, %v1165
        %v1888 = vmul.f32 %v863, %v1165
        %v1889 = vmul.f32 %v864, %v1165
        %v1890 = vmul.f32 %v865, %v1165
        %v1891 = vmul.f32 %v866, %v1165
        %v1892 = vmul.f32 %v867, %v1165
        %v1893 = vmul.f32 %v868, %v1165
        %v1894 = vmul.f32 %v869, %v1165
        %v1895 = vmul.f32 %v870, %v1165
        %v1896 = vmul.f32 %v871, %v1165
        %v1897 = vmul.f32 %v872, %v1165
        %v1898 = vmul.f32 %v873, %v1165
        %v1899 = vmul.f32 %v874, %v1165
        %v1900 = vmul.f32 %v875, %v1165
        %v1901 = vmul.f32 %v876, %v1165
        %v1902 = vmul.f32 %v877, %v1165
        %v1903 = vmul.f32 %v878, %v1165
        %v1904 = vmul.f32 %v879, %v1165
        %v1905 = vmul.f32 %v880, %v1165
        %v1906 = vmul.f32 %v881, %v1165
        %v1907 = vmul.f32 %v882, %v1165
        %v1908 = vmul.f32 %v883, %v1165
        %v1909 = vmul.f32 %v884, %v1165
        %v1910 = vmul.f32 %v885, %v1165
        %v1911 = vmul.f32 %v886, %v1165
        %v1912 = vmul.f32 %v887, %v1165
        %v1913 = vmul.f32 %v888, %v1165
        %v1914 = vmul.f32 %v889, %v1165
        %v1915 = vmul.f32 %v890, %v1165
        %v1916 = vmul.f32 %v891, %v1165
        %v1917 = vmul.f32 %v892, %v1165
        %v1918 = vmul.f32 %v893, %v1165
        %v1919 = vmul.f32 %v894, %v1165
        %v1920 = vmul.f32 %v895, %v1165
        %v1921 = vmul.f32 %v896, %v1165
        %v1922 = vmul.f32 %v897, %v1165
        %v1923 = vmul.f32 %v898, %v1165
        %v1924 = vmul.f32 %v899, %v1165
        %v1925 = vmul.f32 %v900, %v1165
        %v1926 = vmul.f32 %v901, %v1165
        %v1927 = vmul.f32 %v902, %v1165
        %v1928 = vmul.f32 %v903, %v1165
        %v1929 = vmul.f32 %v904, %v1165
        %v1930 = vmul.f32 %v905, %v1165
        %v1931 = vmul.f32 %v906, %v1165
        %v1932 = vmul.f32 %v907, %v1165
        %v1933 = vmul.f32 %v908, %v1165
        %v1934 = vmul.f32 %v909, %v1165
        %v1935 = vmul.f32 %v910, %v1165
        %v1936 = vmul.f32 %v911, %v1165
        %v1937 = vmul.f32 %v912, %v1165
        %v1938 = vmul.f32 %v913, %v1165
        %v1939 = vmul.f32 %v914, %v1165
        %v1940 = vmul.f32 %v915, %v1165
        %v1941 = vmul.f32 %v916, %v1165
        %v1942 = vmul.f32 %v917, %v1165
        %v1943 = vmul.f32 %v918, %v1165
        %v1944 = vmul.f32 %v919, %v1165
        %v1945 = vmul.f32 %v920, %v1165
        %v1946 = vmul.f32 %v921, %v1165
        %v1947 = vmul.f32 %v922, %v1165
        %v1948 = vmul.f32 %v923, %v1165
        %v1949 = vmul.f32 %v924, %v1165
        %v1950 = vmul.f32 %v925, %v1165
        %v1951 = vmul.f32 %v926, %v1165
        %v1952 = vmul.f32 %v927, %v1165
        %v1953 = vmul.f32 %v928, %v1165
        %v1954 = vmul.f32 %v929, %v1165
        %v1955 = vmul.f32 %v930, %v1165
        %v1956 = vmul.f32 %v931, %v1165
        %v1957 = vmul.f32 %v932, %v1165
        %v1958 = vmul.f32 %v933, %v1165
        %v1959 = vmul.f32 %v934, %v1165
        %v1960 = vmul.f32 %v935, %v1165
        %v1961 = vmul.f32 %v936, %v1165
        %v1962 = vmul.f32 %v937, %v1165
        %v1963 = vmul.f32 %v938, %v1165
        %v1964 = vmul.f32 %v939, %v1165
        %v1965 = vmul.f32 %v940, %v1165
        %v1966 = vmul.f32 %v941, %v1165
        %v1967 = vmul.f32 %v942, %v1165
        %v1968 = vmul.f32 %v943, %v1165
        %v1969 = vmul.f32 %v944, %v1165
        %v1970 = vmul.f32 %v945, %v1165
        %v1971 = vmul.f32 %v946, %v1165
        %v1972 = vmul.f32 %v947, %v1165
        %v1973 = vmul.f32 %v948, %v1165
        %v1974 = vmul.f32 %v949, %v1165
        %v1975 = vmul.f32 %v950, %v1165
        %v1976 = vmul.f32 %v951, %v1165
        %v1977 = vmul.f32 %v952, %v1165
        %v1978 = vmul.f32 %v953, %v1165
        %v1979 = vmul.f32 %v954, %v1165
        %v1980 = vmul.f32 %v955, %v1165
        %v1981 = vmul.f32 %v956, %v1165
        %v1982 = vmul.f32 %v957, %v1165
        %v1983 = vmul.f32 %v958, %v1165
        %v1984 = vmul.f32 %v959, %v1165
        %v1985 = vmul.f32 %v960, %v1165
        %v1986 = vmul.f32 %v961, %v1165
        %v1987 = vmul.f32 %v962, %v1165
        %v1988 = vmul.f32 %v963, %v1165
        %v1989 = vmul.f32 %v964, %v1165
        %v1990 = vmul.f32 %v965, %v1165
        %v1991 = vmul.f32 %v966, %v1165
        %v1992 = vmul.f32 %v967, %v1165
        %v1993 = vmul.f32 %v968, %v1165
        %v1994 = vmul.f32 %v969, %v1165
        %v1995 = vmul.f32 %v970, %v1165
        %v1996 = vmul.f32 %v971, %v1165
        %v1997 = vmul.f32 %v972, %v1165
        %v1998 = vmul.f32 %v973, %v1165
        %v1999 = vmul.f32 %v974, %v1165
        %v2000 = vmul.f32 %v975, %v1165
        %v2001 = vmul.f32 %v976, %v1165
        %v2002 = vmul.f32 %v977, %v1165
        %v2003 = vmul.f32 %v978, %v1165
        %v2004 = vmul.f32 %v979, %v1165
        %v2005 = vmul.f32 %v980, %v1165
        %v2006 = vmul.f32 %v981, %v1165
        %v2007 = vmul.f32 %v982, %v1165
        %v2008 = vmul.f32 %v983, %v1165
        %v2009 = vmul.f32 %v984, %v1165
        %v2010 = vmul.f32 %v985, %v1165
        %v2011 = vmul.f32 %v986, %v1165
        %v2012 = vmul.f32 %v987, %v1165
        %v2013 = vmul.f32 %v988, %v1165
        %v2014 = vmul.f32 %v989, %v1165
        %v2015 = vmul.f32 %v990, %v1165
        %v2016 = vmul.f32 %v991, %v1165
        %v2017 = vmul.f32 %v992, %v1165
        %v2018 = vmul.f32 %v993, %v1165
        %v2019 = vmul.f32 %v994, %v1165
        %v2020 = vmul.f32 %v995, %v1165
        %v2021 = vmul.f32 %v996, %v1165
        %v2022 = vmul.f32 %v997, %v1165
        %v2023 = vmul.f32 %v998, %v1165
        %v2024 = vmul.f32 %v999, %v1165
        %v2025 = vmul.f32 %v1000, %v1165
        %v2026 = vmul.f32 %v1001, %v1165
        %v2027 = vmul.f32 %v1002, %v1165
        %v2028 = vmul.f32 %v1003, %v1165
        %v2029 = vmul.f32 %v1004, %v1165
        %v2030 = vmul.f32 %v1005, %v1165
        %v2031 = vmul.f32 %v1006, %v1165
        %v2032 = vmul.f32 %v1007, %v1165
        %v2033 = vmul.f32 %v1008, %v1165
        %v2034 = vmul.f32 %v1009, %v1165
        %v2035 = vmul.f32 %v1010, %v1165
        %v2036 = vmul.f32 %v1011, %v1165
        %v2037 = vmul.f32 %v1012, %v1165
        %v2038 = vmul.f32 %v1013, %v1165
        %v2039 = vmul.f32 %v1014, %v1165
        %v2040 = vmul.f32 %v1015, %v1165
        %v2041 = vmul.f32 %v1016, %v1165
        %v2042 = vmul.f32 %v1017, %v1165
        %v2043 = vmul.f32 %v1018, %v1165
        %v2044 = vmul.f32 %v1019, %v1165
        %v2045 = vmul.f32 %v1020, %v1165
        %v2046 = vmul.f32 %v1021, %v1165
        %v2047 = vmul.f32 %v1022, %v1165
        %v2048 = vmul.f32 %v1023, %v1165
        %v2049 = vmul.f32 %v1024, %v1165
        %v2050 = vmul.f32 %v1025, %v1165
        %v2051 = vmul.f32 %v1026, %v1165
        %v2052 = vmul.f32 %v1027, %v1165
        %v2053 = vmul.f32 %v1028, %v1165
        %v2054 = vmul.f32 %v1029, %v1165
        %v2055 = vmul.f32 %v1030, %v1165
        %v2056 = vmul.f32 %v1031, %v1165
        %v2057 = vmul.f32 %v1032, %v1165
        %v2058 = vmul.f32 %v1033, %v1165
        %v2059 = vmul.f32 %v1034, %v1165
        %v2060 = vmul.f32 %v1035, %v1165
        %v2061 = vmul.f32 %v1036, %v1165
        %v2062 = vmul.f32 %v1037, %v1165
        %v2063 = vmul.f32 %v1038, %v1165
        %v2064 = vmul.f32 %v1039, %v1165
        %v2065 = vmul.f32 %v1040, %v1165
        %v2066 = vmul.f32 %v1041, %v1165
        %v2067 = vmul.f32 %v1042, %v1165
        %v2068 = vmul.f32 %v1043, %v1165
        %v2069 = vmul.f32 %v1044, %v1165
        %v2070 = vmul.f32 %v1045, %v1165
        %v2071 = vmul.f32 %v1046, %v1165
        %v2072 = vmul.f32 %v1047, %v1165
        %v2073 = vmul.f32 %v1048, %v1165
        %v2074 = vmul.f32 %v1049, %v1165
        %v2075 = vmul.f32 %v1050, %v1165
        %v2076 = vmul.f32 %v1051, %v1165
        %v2077 = vmul.f32 %v1052, %v1165
        %v2078 = vmul.f32 %v1053, %v1165
        %v2079 = vmul.f32 %v1054, %v1165
        %v2080 = vmul.f32 %v1055, %v1165
        %v2081 = vmul.f32 %v1056, %v1165
        %v2082 = vmul.f32 %v1057, %v1165
        %v2083 = vmul.f32 %v1058, %v1165
        %v2084 = vmul.f32 %v1059, %v1165
        %v2085 = vmul.f32 %v1060, %v1165
        %v2086 = vmul.f32 %v1061, %v1165
        %v2087 = vmul.f32 %v1062, %v1165
        %v2088 = vmul.f32 %v1063, %v1165
        %v2089 = vmul.f32 %v1064, %v1165
        %v2090 = vmul.f32 %v1065, %v1165
        %v2091 = vmul.f32 %v1066, %v1165
        %v2092 = vmul.f32 %v1067, %v1165
        %v2093 = vmul.f32 %v1068, %v1165
        %v2094 = vmul.f32 %v1069, %v1165
        %v2095 = vmul.f32 %v1070, %v1165
        %v2096 = vmul.f32 %v1071, %v1165
        %v2097 = vmul.f32 %v1072, %v1165
        %v2098 = vmul.f32 %v1073, %v1165
        %v2099 = vmul.f32 %v1074, %v1165
        %v2100 = vmul.f32 %v1075, %v1165
        %v2101 = vmul.f32 %v1076, %v1165
        %v2102 = vmul.f32 %v1077, %v1165
        %v2103 = vmul.f32 %v1078, %v1165
        %v2104 = vmul.f32 %v1079, %v1165
        %v2105 = vmul.f32 %v1080, %v1165
        %v2106 = vmul.f32 %v1081, %v1165
        %v2107 = vmul.f32 %v1082, %v1165
        %v2108 = vmul.f32 %v1083, %v1165
        %v2109 = vmul.f32 %v1084, %v1165
        %v2110 = vmul.f32 %v1085, %v1165
        %v2111 = vmul.f32 %v1086, %v1165
        %v2112 = vmul.f32 %v1087, %v1165
        %v2113 = vmul.f32 %v1088, %v1165
        %v2114 = vmul.f32 %v1089, %v1165
        %v2115 = vmul.f32 %v1090, %v1165
        %v2116 = vmul.f32 %v1091, %v1165
        %v2117 = vmul.f32 %v1092, %v1165
        %v2118 = vmul.f32 %v1093, %v1165
        %v2119 = vmul.f32 %v1094, %v1165
        %v2120 = vmul.f32 %v1095, %v1165
        %v2121 = vmul.f32 %v1096, %v1165
        %v2122 = vmul.f32 %v1097, %v1165
        %v2123 = vmul.f32 %v1098, %v1165
        %v2124 = vmul.f32 %v1099, %v1165
        %v2125 = vmul.f32 %v1100, %v1165
        %v2126 = vmul.f32 %v1101, %v1165
        %v2127 = vmul.f32 %v1102, %v1165
        %v2128 = vmul.f32 %v1103, %v1165
        %v2129 = vmul.f32 %v1104, %v1165
        %v2130 = vmul.f32 %v1105, %v1165
        %v2131 = vmul.f32 %v1106, %v1165
        %v2132 = vmul.f32 %v1107, %v1165
        %v2133 = vmul.f32 %v1108, %v1165
        %v2134 = vmul.f32 %v1109, %v1165
        %v2135 = vmul.f32 %v1110, %v1165
        %v2136 = vmul.f32 %v1111, %v1165
        %v2137 = vmul.f32 %v1112, %v1165
        %v2138 = vmul.f32 %v1113, %v1165
        %v2139 = vmul.f32 %v1114, %v1165
        %v2140 = vmul.f32 %v1115, %v1165
        %v2141 = vmul.f32 %v1116, %v1165
        %v2142 = vmul.f32 %v1117, %v1165
        %v2143 = vmul.f32 %v1118, %v1165
        %v2144 = vmul.f32 %v1119, %v1165
        %v2145 = vmul.f32 %v1120, %v1165
        %v2146 = vmul.f32 %v1121, %v1165
        %v2147 = vmul.f32 %v1122, %v1165
        %v2148 = vmul.f32 %v1123, %v1165
        %v2149 = vmul.f32 %v1124, %v1165
        %v2150 = vmul.f32 %v1125, %v1165
        %v2151 = vmul.f32 %v1126, %v1165
        %v2152 = vmul.f32 %v1127, %v1165
        %v2153 = vmul.f32 %v1128, %v1165
        %v2154 = vmul.f32 %v1129, %v1165
        %v2155 = vmul.f32 %v1130, %v1165
        %v2156 = vmul.f32 %v1131, %v1165
        %v2157 = vmul.f32 %v1132, %v1165
        %v2158 = vmul.f32 %v1133, %v1165
        %v2159 = vmul.f32 %v1134, %v1165
        %v2160 = vmul.f32 %v1135, %v1165
        %v2161 = vmul.f32 %v1136, %v1165
        %v2162 = vmul.f32 %v1137, %v1165
        %v2163 = vmul.f32 %v1138, %v1165
        %v2164 = vmul.f32 %v1139, %v1165
        %v2165 = vmul.f32 %v1140, %v1165
        %v2166 = vmul.f32 %v1141, %v1165
        %v2167 = vmul.f32 %v1142, %v1165
        %v2168 = vmul.f32 %v1143, %v1165
        %v2169 = vmul.f32 %v1144, %v1165
        %v2170 = vmul.f32 %v1145, %v1165
        %v2171 = vmul.f32 %v1146, %v1165
        %v2172 = vmul.f32 %v1147, %v1165
        %v2173 = vmul.f32 %v1148, %v1165
        %v2174 = vmul.f32 %v1149, %v1165
        %v2175 = vmul.f32 %v1150, %v1165
        %v2176 = vmul.f32 %v1151, %v1165
        %v2177 = vmul.f32 %v1152, %v1165
        %v2178 = vmul.f32 %v1153, %v1165
        %v2179 = vmul.f32 %v1154, %v1165
        %v2180 = vmul.f32 %v1155, %v1165
        %v2181 = vmul.f32 %v1156, %v1165
        %v2182 = vmul.f32 %v1157, %v1165
        %v2183 = vmul.f32 %v1158, %v1165
        %v2184 = vmul.f32 %v1159, %v1165
        %v2185 = vmul.f32 %v1160, %v1165
        %v2186 = vmul.f32 %v1161, %v1165
        %v2187 = vmul.f32 %v1162, %v1165
        %v2188 = vmul.f32 %v1163, %v1165
        %v2189 = vmul.f32 %v1164, %v1165
        %2190 = vst [vmem:[%s137] sm:$0xff] %v1166
        %2191 = vst [vmem:[%s137 + $0x8] sm:$0xff] %v1167
        %2192 = vst [vmem:[%s137 + $0x10] sm:$0xff] %v1168
        %2193 = vst [vmem:[%s137 + $0x18] sm:$0xff] %v1169
        %2194 = vst [vmem:[%s137 + $0x20] sm:$0xff] %v1170
        %2195 = vst [vmem:[%s137 + $0x28] sm:$0xff] %v1171
        %2196 = vst [vmem:[%s137 + $0x30] sm:$0xff] %v1172
        %2197 = vst [vmem:[%s137 + $0x38] sm:$0xff] %v1173
        %2198 = vst [vmem:[%s137 + $0x40] sm:$0xff] %v1174
        %2199 = vst [vmem:[%s137 + $0x48] sm:$0xff] %v1175
        %2200 = vst [vmem:[%s137 + $0x50] sm:$0xff] %v1176
        %2201 = vst [vmem:[%s137 + $0x58] sm:$0xff] %v1177
        %2202 = vst [vmem:[%s137 + $0x60] sm:$0xff] %v1178
        %2203 = vst [vmem:[%s137 + $0x68] sm:$0xff] %v1179
        %2204 = vst [vmem:[%s137 + $0x70] sm:$0xff] %v1180
        %2205 = vst [vmem:[%s137 + $0x78] sm:$0xff] %v1181
        %2206 = vst [vmem:[%s137 + $0x80] sm:$0xff] %v1182
        %2207 = vst [vmem:[%s137 + $0x88] sm:$0xff] %v1183
        %2208 = vst [vmem:[%s137 + $0x90] sm:$0xff] %v1184
        %2209 = vst [vmem:[%s137 + $0x98] sm:$0xff] %v1185
        %2210 = vst [vmem:[%s137 + $0xa0] sm:$0xff] %v1186
        %2211 = vst [vmem:[%s137 + $0xa8] sm:$0xff] %v1187
        %2212 = vst [vmem:[%s137 + $0xb0] sm:$0xff] %v1188
        %2213 = vst [vmem:[%s137 + $0xb8] sm:$0xff] %v1189
        %2214 = vst [vmem:[%s137 + $0xc0] sm:$0xff] %v1190
        %2215 = vst [vmem:[%s137 + $0xc8] sm:$0xff] %v1191
        %2216 = vst [vmem:[%s137 + $0xd0] sm:$0xff] %v1192
        %2217 = vst [vmem:[%s137 + $0xd8] sm:$0xff] %v1193
        %2218 = vst [vmem:[%s137 + $0xe0] sm:$0xff] %v1194
        %2219 = vst [vmem:[%s137 + $0xe8] sm:$0xff] %v1195
        %2220 = vst [vmem:[%s137 + $0xf0] sm:$0xff] %v1196
        %2221 = vst [vmem:[%s137 + $0xf8] sm:$0xff] %v1197
        %2222 = vst [vmem:[%s137 + $0x100] sm:$0xff] %v1198
        %2223 = vst [vmem:[%s137 + $0x108] sm:$0xff] %v1199
        %2224 = vst [vmem:[%s137 + $0x110] sm:$0xff] %v1200
        %2225 = vst [vmem:[%s137 + $0x118] sm:$0xff] %v1201
        %2226 = vst [vmem:[%s137 + $0x120] sm:$0xff] %v1202
        %2227 = vst [vmem:[%s137 + $0x128] sm:$0xff] %v1203
        %2228 = vst [vmem:[%s137 + $0x130] sm:$0xff] %v1204
        %2229 = vst [vmem:[%s137 + $0x138] sm:$0xff] %v1205
        %2230 = vst [vmem:[%s137 + $0x140] sm:$0xff] %v1206
        %2231 = vst [vmem:[%s137 + $0x148] sm:$0xff] %v1207
        %2232 = vst [vmem:[%s137 + $0x150] sm:$0xff] %v1208
        %2233 = vst [vmem:[%s137 + $0x158] sm:$0xff] %v1209
        %2234 = vst [vmem:[%s137 + $0x160] sm:$0xff] %v1210
        %2235 = vst [vmem:[%s137 + $0x168] sm:$0xff] %v1211
        %2236 = vst [vmem:[%s137 + $0x170] sm:$0xff] %v1212
        %2237 = vst [vmem:[%s137 + $0x178] sm:$0xff] %v1213
        %2238 = vst [vmem:[%s137 + $0x180] sm:$0xff] %v1214
        %2239 = vst [vmem:[%s137 + $0x188] sm:$0xff] %v1215
        %2240 = vst [vmem:[%s137 + $0x190] sm:$0xff] %v1216
        %2241 = vst [vmem:[%s137 + $0x198] sm:$0xff] %v1217
        %2242 = vst [vmem:[%s137 + $0x1a0] sm:$0xff] %v1218
        %2243 = vst [vmem:[%s137 + $0x1a8] sm:$0xff] %v1219
        %2244 = vst [vmem:[%s137 + $0x1b0] sm:$0xff] %v1220
        %2245 = vst [vmem:[%s137 + $0x1b8] sm:$0xff] %v1221
        %2246 = vst [vmem:[%s137 + $0x1c0] sm:$0xff] %v1222
        %2247 = vst [vmem:[%s137 + $0x1c8] sm:$0xff] %v1223
        %2248 = vst [vmem:[%s137 + $0x1d0] sm:$0xff] %v1224
        %2249 = vst [vmem:[%s137 + $0x1d8] sm:$0xff] %v1225
        %2250 = vst [vmem:[%s137 + $0x1e0] sm:$0xff] %v1226
        %2251 = vst [vmem:[%s137 + $0x1e8] sm:$0xff] %v1227
        %2252 = vst [vmem:[%s137 + $0x1f0] sm:$0xff] %v1228
        %2253 = vst [vmem:[%s137 + $0x1f8] sm:$0xff] %v1229
        %2254 = vst [vmem:[%s137 + $0x200] sm:$0xff] %v1230
        %2255 = vst [vmem:[%s137 + $0x208] sm:$0xff] %v1231
        %2256 = vst [vmem:[%s137 + $0x210] sm:$0xff] %v1232
        %2257 = vst [vmem:[%s137 + $0x218] sm:$0xff] %v1233
        %2258 = vst [vmem:[%s137 + $0x220] sm:$0xff] %v1234
        %2259 = vst [vmem:[%s137 + $0x228] sm:$0xff] %v1235
        %2260 = vst [vmem:[%s137 + $0x230] sm:$0xff] %v1236
        %2261 = vst [vmem:[%s137 + $0x238] sm:$0xff] %v1237
        %2262 = vst [vmem:[%s137 + $0x240] sm:$0xff] %v1238
        %2263 = vst [vmem:[%s137 + $0x248] sm:$0xff] %v1239
        %2264 = vst [vmem:[%s137 + $0x250] sm:$0xff] %v1240
        %2265 = vst [vmem:[%s137 + $0x258] sm:$0xff] %v1241
        %2266 = vst [vmem:[%s137 + $0x260] sm:$0xff] %v1242
        %2267 = vst [vmem:[%s137 + $0x268] sm:$0xff] %v1243
        %2268 = vst [vmem:[%s137 + $0x270] sm:$0xff] %v1244
        %2269 = vst [vmem:[%s137 + $0x278] sm:$0xff] %v1245
        %2270 = vst [vmem:[%s137 + $0x280] sm:$0xff] %v1246
        %2271 = vst [vmem:[%s137 + $0x288] sm:$0xff] %v1247
        %2272 = vst [vmem:[%s137 + $0x290] sm:$0xff] %v1248
        %2273 = vst [vmem:[%s137 + $0x298] sm:$0xff] %v1249
        %2274 = vst [vmem:[%s137 + $0x2a0] sm:$0xff] %v1250
        %2275 = vst [vmem:[%s137 + $0x2a8] sm:$0xff] %v1251
        %2276 = vst [vmem:[%s137 + $0x2b0] sm:$0xff] %v1252
        %2277 = vst [vmem:[%s137 + $0x2b8] sm:$0xff] %v1253
        %2278 = vst [vmem:[%s137 + $0x2c0] sm:$0xff] %v1254
        %2279 = vst [vmem:[%s137 + $0x2c8] sm:$0xff] %v1255
        %2280 = vst [vmem:[%s137 + $0x2d0] sm:$0xff] %v1256
        %2281 = vst [vmem:[%s137 + $0x2d8] sm:$0xff] %v1257
        %2282 = vst [vmem:[%s137 + $0x2e0] sm:$0xff] %v1258
        %2283 = vst [vmem:[%s137 + $0x2e8] sm:$0xff] %v1259
        %2284 = vst [vmem:[%s137 + $0x2f0] sm:$0xff] %v1260
        %2285 = vst [vmem:[%s137 + $0x2f8] sm:$0xff] %v1261
        %2286 = vst [vmem:[%s137 + $0x300] sm:$0xff] %v1262
        %2287 = vst [vmem:[%s137 + $0x308] sm:$0xff] %v1263
        %2288 = vst [vmem:[%s137 + $0x310] sm:$0xff] %v1264
        %2289 = vst [vmem:[%s137 + $0x318] sm:$0xff] %v1265
        %2290 = vst [vmem:[%s137 + $0x320] sm:$0xff] %v1266
        %2291 = vst [vmem:[%s137 + $0x328] sm:$0xff] %v1267
        %2292 = vst [vmem:[%s137 + $0x330] sm:$0xff] %v1268
        %2293 = vst [vmem:[%s137 + $0x338] sm:$0xff] %v1269
        %2294 = vst [vmem:[%s137 + $0x340] sm:$0xff] %v1270
        %2295 = vst [vmem:[%s137 + $0x348] sm:$0xff] %v1271
        %2296 = vst [vmem:[%s137 + $0x350] sm:$0xff] %v1272
        %2297 = vst [vmem:[%s137 + $0x358] sm:$0xff] %v1273
        %2298 = vst [vmem:[%s137 + $0x360] sm:$0xff] %v1274
        %2299 = vst [vmem:[%s137 + $0x368] sm:$0xff] %v1275
        %2300 = vst [vmem:[%s137 + $0x370] sm:$0xff] %v1276
        %2301 = vst [vmem:[%s137 + $0x378] sm:$0xff] %v1277
        %2302 = vst [vmem:[%s137 + $0x380] sm:$0xff] %v1278
        %2303 = vst [vmem:[%s137 + $0x388] sm:$0xff] %v1279
        %2304 = vst [vmem:[%s137 + $0x390] sm:$0xff] %v1280
        %2305 = vst [vmem:[%s137 + $0x398] sm:$0xff] %v1281
        %2306 = vst [vmem:[%s137 + $0x3a0] sm:$0xff] %v1282
        %2307 = vst [vmem:[%s137 + $0x3a8] sm:$0xff] %v1283
        %2308 = vst [vmem:[%s137 + $0x3b0] sm:$0xff] %v1284
        %2309 = vst [vmem:[%s137 + $0x3b8] sm:$0xff] %v1285
        %2310 = vst [vmem:[%s137 + $0x3c0] sm:$0xff] %v1286
        %2311 = vst [vmem:[%s137 + $0x3c8] sm:$0xff] %v1287
        %2312 = vst [vmem:[%s137 + $0x3d0] sm:$0xff] %v1288
        %2313 = vst [vmem:[%s137 + $0x3d8] sm:$0xff] %v1289
        %2314 = vst [vmem:[%s137 + $0x3e0] sm:$0xff] %v1290
        %2315 = vst [vmem:[%s137 + $0x3e8] sm:$0xff] %v1291
        %2316 = vst [vmem:[%s137 + $0x3f0] sm:$0xff] %v1292
        %2317 = vst [vmem:[%s137 + $0x3f8] sm:$0xff] %v1293
        %2318 = vst [vmem:[%s137 + $0x400] sm:$0xff] %v1294
        %2319 = vst [vmem:[%s137 + $0x408] sm:$0xff] %v1295
        %2320 = vst [vmem:[%s137 + $0x410] sm:$0xff] %v1296
        %2321 = vst [vmem:[%s137 + $0x418] sm:$0xff] %v1297
        %2322 = vst [vmem:[%s137 + $0x420] sm:$0xff] %v1298
        %2323 = vst [vmem:[%s137 + $0x428] sm:$0xff] %v1299
        %2324 = vst [vmem:[%s137 + $0x430] sm:$0xff] %v1300
        %2325 = vst [vmem:[%s137 + $0x438] sm:$0xff] %v1301
        %2326 = vst [vmem:[%s137 + $0x440] sm:$0xff] %v1302
        %2327 = vst [vmem:[%s137 + $0x448] sm:$0xff] %v1303
        %2328 = vst [vmem:[%s137 + $0x450] sm:$0xff] %v1304
        %2329 = vst [vmem:[%s137 + $0x458] sm:$0xff] %v1305
        %2330 = vst [vmem:[%s137 + $0x460] sm:$0xff] %v1306
        %2331 = vst [vmem:[%s137 + $0x468] sm:$0xff] %v1307
        %2332 = vst [vmem:[%s137 + $0x470] sm:$0xff] %v1308
        %2333 = vst [vmem:[%s137 + $0x478] sm:$0xff] %v1309
        %2334 = vst [vmem:[%s137 + $0x480] sm:$0xff] %v1310
        %2335 = vst [vmem:[%s137 + $0x488] sm:$0xff] %v1311
        %2336 = vst [vmem:[%s137 + $0x490] sm:$0xff] %v1312
        %2337 = vst [vmem:[%s137 + $0x498] sm:$0xff] %v1313
        %2338 = vst [vmem:[%s137 + $0x4a0] sm:$0xff] %v1314
        %2339 = vst [vmem:[%s137 + $0x4a8] sm:$0xff] %v1315
        %2340 = vst [vmem:[%s137 + $0x4b0] sm:$0xff] %v1316
        %2341 = vst [vmem:[%s137 + $0x4b8] sm:$0xff] %v1317
        %2342 = vst [vmem:[%s137 + $0x4c0] sm:$0xff] %v1318
        %2343 = vst [vmem:[%s137 + $0x4c8] sm:$0xff] %v1319
        %2344 = vst [vmem:[%s137 + $0x4d0] sm:$0xff] %v1320
        %2345 = vst [vmem:[%s137 + $0x4d8] sm:$0xff] %v1321
        %2346 = vst [vmem:[%s137 + $0x4e0] sm:$0xff] %v1322
        %2347 = vst [vmem:[%s137 + $0x4e8] sm:$0xff] %v1323
        %2348 = vst [vmem:[%s137 + $0x4f0] sm:$0xff] %v1324
        %2349 = vst [vmem:[%s137 + $0x4f8] sm:$0xff] %v1325
        %2350 = vst [vmem:[%s137 + $0x500] sm:$0xff] %v1326
        %2351 = vst [vmem:[%s137 + $0x508] sm:$0xff] %v1327
        %2352 = vst [vmem:[%s137 + $0x510] sm:$0xff] %v1328
        %2353 = vst [vmem:[%s137 + $0x518] sm:$0xff] %v1329
        %2354 = vst [vmem:[%s137 + $0x520] sm:$0xff] %v1330
        %2355 = vst [vmem:[%s137 + $0x528] sm:$0xff] %v1331
        %2356 = vst [vmem:[%s137 + $0x530] sm:$0xff] %v1332
        %2357 = vst [vmem:[%s137 + $0x538] sm:$0xff] %v1333
        %2358 = vst [vmem:[%s137 + $0x540] sm:$0xff] %v1334
        %2359 = vst [vmem:[%s137 + $0x548] sm:$0xff] %v1335
        %2360 = vst [vmem:[%s137 + $0x550] sm:$0xff] %v1336
        %2361 = vst [vmem:[%s137 + $0x558] sm:$0xff] %v1337
        %2362 = vst [vmem:[%s137 + $0x560] sm:$0xff] %v1338
        %2363 = vst [vmem:[%s137 + $0x568] sm:$0xff] %v1339
        %2364 = vst [vmem:[%s137 + $0x570] sm:$0xff] %v1340
        %2365 = vst [vmem:[%s137 + $0x578] sm:$0xff] %v1341
        %2366 = vst [vmem:[%s137 + $0x580] sm:$0xff] %v1342
        %2367 = vst [vmem:[%s137 + $0x588] sm:$0xff] %v1343
        %2368 = vst [vmem:[%s137 + $0x590] sm:$0xff] %v1344
        %2369 = vst [vmem:[%s137 + $0x598] sm:$0xff] %v1345
        %2370 = vst [vmem:[%s137 + $0x5a0] sm:$0xff] %v1346
        %2371 = vst [vmem:[%s137 + $0x5a8] sm:$0xff] %v1347
        %2372 = vst [vmem:[%s137 + $0x5b0] sm:$0xff] %v1348
        %2373 = vst [vmem:[%s137 + $0x5b8] sm:$0xff] %v1349
        %2374 = vst [vmem:[%s137 + $0x5c0] sm:$0xff] %v1350
        %2375 = vst [vmem:[%s137 + $0x5c8] sm:$0xff] %v1351
        %2376 = vst [vmem:[%s137 + $0x5d0] sm:$0xff] %v1352
        %2377 = vst [vmem:[%s137 + $0x5d8] sm:$0xff] %v1353
        %2378 = vst [vmem:[%s137 + $0x5e0] sm:$0xff] %v1354
        %2379 = vst [vmem:[%s137 + $0x5e8] sm:$0xff] %v1355
        %2380 = vst [vmem:[%s137 + $0x5f0] sm:$0xff] %v1356
        %2381 = vst [vmem:[%s137 + $0x5f8] sm:$0xff] %v1357
        %2382 = vst [vmem:[%s137 + $0x600] sm:$0xff] %v1358
        %2383 = vst [vmem:[%s137 + $0x608] sm:$0xff] %v1359
        %2384 = vst [vmem:[%s137 + $0x610] sm:$0xff] %v1360
        %2385 = vst [vmem:[%s137 + $0x618] sm:$0xff] %v1361
        %2386 = vst [vmem:[%s137 + $0x620] sm:$0xff] %v1362
        %2387 = vst [vmem:[%s137 + $0x628] sm:$0xff] %v1363
        %2388 = vst [vmem:[%s137 + $0x630] sm:$0xff] %v1364
        %2389 = vst [vmem:[%s137 + $0x638] sm:$0xff] %v1365
        %2390 = vst [vmem:[%s137 + $0x640] sm:$0xff] %v1366
        %2391 = vst [vmem:[%s137 + $0x648] sm:$0xff] %v1367
        %2392 = vst [vmem:[%s137 + $0x650] sm:$0xff] %v1368
        %2393 = vst [vmem:[%s137 + $0x658] sm:$0xff] %v1369
        %2394 = vst [vmem:[%s137 + $0x660] sm:$0xff] %v1370
        %2395 = vst [vmem:[%s137 + $0x668] sm:$0xff] %v1371
        %2396 = vst [vmem:[%s137 + $0x670] sm:$0xff] %v1372
        %2397 = vst [vmem:[%s137 + $0x678] sm:$0xff] %v1373
        %2398 = vst [vmem:[%s137 + $0x680] sm:$0xff] %v1374
        %2399 = vst [vmem:[%s137 + $0x688] sm:$0xff] %v1375
        %2400 = vst [vmem:[%s137 + $0x690] sm:$0xff] %v1376
        %2401 = vst [vmem:[%s137 + $0x698] sm:$0xff] %v1377
        %2402 = vst [vmem:[%s137 + $0x6a0] sm:$0xff] %v1378
        %2403 = vst [vmem:[%s137 + $0x6a8] sm:$0xff] %v1379
        %2404 = vst [vmem:[%s137 + $0x6b0] sm:$0xff] %v1380
        %2405 = vst [vmem:[%s137 + $0x6b8] sm:$0xff] %v1381
        %2406 = vst [vmem:[%s137 + $0x6c0] sm:$0xff] %v1382
        %2407 = vst [vmem:[%s137 + $0x6c8] sm:$0xff] %v1383
        %2408 = vst [vmem:[%s137 + $0x6d0] sm:$0xff] %v1384
        %2409 = vst [vmem:[%s137 + $0x6d8] sm:$0xff] %v1385
        %2410 = vst [vmem:[%s137 + $0x6e0] sm:$0xff] %v1386
        %2411 = vst [vmem:[%s137 + $0x6e8] sm:$0xff] %v1387
        %2412 = vst [vmem:[%s137 + $0x6f0] sm:$0xff] %v1388
        %2413 = vst [vmem:[%s137 + $0x6f8] sm:$0xff] %v1389
        %2414 = vst [vmem:[%s137 + $0x700] sm:$0xff] %v1390
        %2415 = vst [vmem:[%s137 + $0x708] sm:$0xff] %v1391
        %2416 = vst [vmem:[%s137 + $0x710] sm:$0xff] %v1392
        %2417 = vst [vmem:[%s137 + $0x718] sm:$0xff] %v1393
        %2418 = vst [vmem:[%s137 + $0x720] sm:$0xff] %v1394
        %2419 = vst [vmem:[%s137 + $0x728] sm:$0xff] %v1395
        %2420 = vst [vmem:[%s137 + $0x730] sm:$0xff] %v1396
        %2421 = vst [vmem:[%s137 + $0x738] sm:$0xff] %v1397
        %2422 = vst [vmem:[%s137 + $0x740] sm:$0xff] %v1398
        %2423 = vst [vmem:[%s137 + $0x748] sm:$0xff] %v1399
        %2424 = vst [vmem:[%s137 + $0x750] sm:$0xff] %v1400
        %2425 = vst [vmem:[%s137 + $0x758] sm:$0xff] %v1401
        %2426 = vst [vmem:[%s137 + $0x760] sm:$0xff] %v1402
        %2427 = vst [vmem:[%s137 + $0x768] sm:$0xff] %v1403
        %2428 = vst [vmem:[%s137 + $0x770] sm:$0xff] %v1404
        %2429 = vst [vmem:[%s137 + $0x778] sm:$0xff] %v1405
        %2430 = vst [vmem:[%s137 + $0x780] sm:$0xff] %v1406
        %2431 = vst [vmem:[%s137 + $0x788] sm:$0xff] %v1407
        %2432 = vst [vmem:[%s137 + $0x790] sm:$0xff] %v1408
        %2433 = vst [vmem:[%s137 + $0x798] sm:$0xff] %v1409
        %2434 = vst [vmem:[%s137 + $0x7a0] sm:$0xff] %v1410
        %2435 = vst [vmem:[%s137 + $0x7a8] sm:$0xff] %v1411
        %2436 = vst [vmem:[%s137 + $0x7b0] sm:$0xff] %v1412
        %2437 = vst [vmem:[%s137 + $0x7b8] sm:$0xff] %v1413
        %2438 = vst [vmem:[%s137 + $0x7c0] sm:$0xff] %v1414
        %2439 = vst [vmem:[%s137 + $0x7c8] sm:$0xff] %v1415
        %2440 = vst [vmem:[%s137 + $0x7d0] sm:$0xff] %v1416
        %2441 = vst [vmem:[%s137 + $0x7d8] sm:$0xff] %v1417
        %2442 = vst [vmem:[%s137 + $0x7e0] sm:$0xff] %v1418
        %2443 = vst [vmem:[%s137 + $0x7e8] sm:$0xff] %v1419
        %2444 = vst [vmem:[%s137 + $0x7f0] sm:$0xff] %v1420
        %2445 = vst [vmem:[%s137 + $0x7f8] sm:$0xff] %v1421
        %2446 = vst [vmem:[%s137 + $0x800] sm:$0xff] %v1422
        %2447 = vst [vmem:[%s137 + $0x808] sm:$0xff] %v1423
        %2448 = vst [vmem:[%s137 + $0x810] sm:$0xff] %v1424
        %2449 = vst [vmem:[%s137 + $0x818] sm:$0xff] %v1425
        %2450 = vst [vmem:[%s137 + $0x820] sm:$0xff] %v1426
        %2451 = vst [vmem:[%s137 + $0x828] sm:$0xff] %v1427
        %2452 = vst [vmem:[%s137 + $0x830] sm:$0xff] %v1428
        %2453 = vst [vmem:[%s137 + $0x838] sm:$0xff] %v1429
        %2454 = vst [vmem:[%s137 + $0x840] sm:$0xff] %v1430
        %2455 = vst [vmem:[%s137 + $0x848] sm:$0xff] %v1431
        %2456 = vst [vmem:[%s137 + $0x850] sm:$0xff] %v1432
        %2457 = vst [vmem:[%s137 + $0x858] sm:$0xff] %v1433
        %2458 = vst [vmem:[%s137 + $0x860] sm:$0xff] %v1434
        %2459 = vst [vmem:[%s137 + $0x868] sm:$0xff] %v1435
        %2460 = vst [vmem:[%s137 + $0x870] sm:$0xff] %v1436
        %2461 = vst [vmem:[%s137 + $0x878] sm:$0xff] %v1437
        %2462 = vst [vmem:[%s137 + $0x880] sm:$0xff] %v1438
        %2463 = vst [vmem:[%s137 + $0x888] sm:$0xff] %v1439
        %2464 = vst [vmem:[%s137 + $0x890] sm:$0xff] %v1440
        %2465 = vst [vmem:[%s137 + $0x898] sm:$0xff] %v1441
        %2466 = vst [vmem:[%s137 + $0x8a0] sm:$0xff] %v1442
        %2467 = vst [vmem:[%s137 + $0x8a8] sm:$0xff] %v1443
        %2468 = vst [vmem:[%s137 + $0x8b0] sm:$0xff] %v1444
        %2469 = vst [vmem:[%s137 + $0x8b8] sm:$0xff] %v1445
        %2470 = vst [vmem:[%s137 + $0x8c0] sm:$0xff] %v1446
        %2471 = vst [vmem:[%s137 + $0x8c8] sm:$0xff] %v1447
        %2472 = vst [vmem:[%s137 + $0x8d0] sm:$0xff] %v1448
        %2473 = vst [vmem:[%s137 + $0x8d8] sm:$0xff] %v1449
        %2474 = vst [vmem:[%s137 + $0x8e0] sm:$0xff] %v1450
        %2475 = vst [vmem:[%s137 + $0x8e8] sm:$0xff] %v1451
        %2476 = vst [vmem:[%s137 + $0x8f0] sm:$0xff] %v1452
        %2477 = vst [vmem:[%s137 + $0x8f8] sm:$0xff] %v1453
        %2478 = vst [vmem:[%s137 + $0x900] sm:$0xff] %v1454
        %2479 = vst [vmem:[%s137 + $0x908] sm:$0xff] %v1455
        %2480 = vst [vmem:[%s137 + $0x910] sm:$0xff] %v1456
        %2481 = vst [vmem:[%s137 + $0x918] sm:$0xff] %v1457
        %2482 = vst [vmem:[%s137 + $0x920] sm:$0xff] %v1458
        %2483 = vst [vmem:[%s137 + $0x928] sm:$0xff] %v1459
        %2484 = vst [vmem:[%s137 + $0x930] sm:$0xff] %v1460
        %2485 = vst [vmem:[%s137 + $0x938] sm:$0xff] %v1461
        %2486 = vst [vmem:[%s137 + $0x940] sm:$0xff] %v1462
        %2487 = vst [vmem:[%s137 + $0x948] sm:$0xff] %v1463
        %2488 = vst [vmem:[%s137 + $0x950] sm:$0xff] %v1464
        %2489 = vst [vmem:[%s137 + $0x958] sm:$0xff] %v1465
        %2490 = vst [vmem:[%s137 + $0x960] sm:$0xff] %v1466
        %2491 = vst [vmem:[%s137 + $0x968] sm:$0xff] %v1467
        %2492 = vst [vmem:[%s137 + $0x970] sm:$0xff] %v1468
        %2493 = vst [vmem:[%s137 + $0x978] sm:$0xff] %v1469
        %2494 = vst [vmem:[%s137 + $0x980] sm:$0xff] %v1470
        %2495 = vst [vmem:[%s137 + $0x988] sm:$0xff] %v1471
        %2496 = vst [vmem:[%s137 + $0x990] sm:$0xff] %v1472
        %2497 = vst [vmem:[%s137 + $0x998] sm:$0xff] %v1473
        %2498 = vst [vmem:[%s137 + $0x9a0] sm:$0xff] %v1474
        %2499 = vst [vmem:[%s137 + $0x9a8] sm:$0xff] %v1475
        %2500 = vst [vmem:[%s137 + $0x9b0] sm:$0xff] %v1476
        %2501 = vst [vmem:[%s137 + $0x9b8] sm:$0xff] %v1477
        %2502 = vst [vmem:[%s137 + $0x9c0] sm:$0xff] %v1478
        %2503 = vst [vmem:[%s137 + $0x9c8] sm:$0xff] %v1479
        %2504 = vst [vmem:[%s137 + $0x9d0] sm:$0xff] %v1480
        %2505 = vst [vmem:[%s137 + $0x9d8] sm:$0xff] %v1481
        %2506 = vst [vmem:[%s137 + $0x9e0] sm:$0xff] %v1482
        %2507 = vst [vmem:[%s137 + $0x9e8] sm:$0xff] %v1483
        %2508 = vst [vmem:[%s137 + $0x9f0] sm:$0xff] %v1484
        %2509 = vst [vmem:[%s137 + $0x9f8] sm:$0xff] %v1485
        %2510 = vst [vmem:[%s137 + $0xa00] sm:$0xff] %v1486
        %2511 = vst [vmem:[%s137 + $0xa08] sm:$0xff] %v1487
        %2512 = vst [vmem:[%s137 + $0xa10] sm:$0xff] %v1488
        %2513 = vst [vmem:[%s137 + $0xa18] sm:$0xff] %v1489
        %2514 = vst [vmem:[%s137 + $0xa20] sm:$0xff] %v1490
        %2515 = vst [vmem:[%s137 + $0xa28] sm:$0xff] %v1491
        %2516 = vst [vmem:[%s137 + $0xa30] sm:$0xff] %v1492
        %2517 = vst [vmem:[%s137 + $0xa38] sm:$0xff] %v1493
        %2518 = vst [vmem:[%s137 + $0xa40] sm:$0xff] %v1494
        %2519 = vst [vmem:[%s137 + $0xa48] sm:$0xff] %v1495
        %2520 = vst [vmem:[%s137 + $0xa50] sm:$0xff] %v1496
        %2521 = vst [vmem:[%s137 + $0xa58] sm:$0xff] %v1497
        %2522 = vst [vmem:[%s137 + $0xa60] sm:$0xff] %v1498
        %2523 = vst [vmem:[%s137 + $0xa68] sm:$0xff] %v1499
        %2524 = vst [vmem:[%s137 + $0xa70] sm:$0xff] %v1500
        %2525 = vst [vmem:[%s137 + $0xa78] sm:$0xff] %v1501
        %2526 = vst [vmem:[%s137 + $0xa80] sm:$0xff] %v1502
        %2527 = vst [vmem:[%s137 + $0xa88] sm:$0xff] %v1503
        %2528 = vst [vmem:[%s137 + $0xa90] sm:$0xff] %v1504
        %2529 = vst [vmem:[%s137 + $0xa98] sm:$0xff] %v1505
        %2530 = vst [vmem:[%s137 + $0xaa0] sm:$0xff] %v1506
        %2531 = vst [vmem:[%s137 + $0xaa8] sm:$0xff] %v1507
        %2532 = vst [vmem:[%s137 + $0xab0] sm:$0xff] %v1508
        %2533 = vst [vmem:[%s137 + $0xab8] sm:$0xff] %v1509
        %2534 = vst [vmem:[%s137 + $0xac0] sm:$0xff] %v1510
        %2535 = vst [vmem:[%s137 + $0xac8] sm:$0xff] %v1511
        %2536 = vst [vmem:[%s137 + $0xad0] sm:$0xff] %v1512
        %2537 = vst [vmem:[%s137 + $0xad8] sm:$0xff] %v1513
        %2538 = vst [vmem:[%s137 + $0xae0] sm:$0xff] %v1514
        %2539 = vst [vmem:[%s137 + $0xae8] sm:$0xff] %v1515
        %2540 = vst [vmem:[%s137 + $0xaf0] sm:$0xff] %v1516
        %2541 = vst [vmem:[%s137 + $0xaf8] sm:$0xff] %v1517
        %2542 = vst [vmem:[%s137 + $0xb00] sm:$0xff] %v1518
        %2543 = vst [vmem:[%s137 + $0xb08] sm:$0xff] %v1519
        %2544 = vst [vmem:[%s137 + $0xb10] sm:$0xff] %v1520
        %2545 = vst [vmem:[%s137 + $0xb18] sm:$0xff] %v1521
        %2546 = vst [vmem:[%s137 + $0xb20] sm:$0xff] %v1522
        %2547 = vst [vmem:[%s137 + $0xb28] sm:$0xff] %v1523
        %2548 = vst [vmem:[%s137 + $0xb30] sm:$0xff] %v1524
        %2549 = vst [vmem:[%s137 + $0xb38] sm:$0xff] %v1525
        %2550 = vst [vmem:[%s137 + $0xb40] sm:$0xff] %v1526
        %2551 = vst [vmem:[%s137 + $0xb48] sm:$0xff] %v1527
        %2552 = vst [vmem:[%s137 + $0xb50] sm:$0xff] %v1528
        %2553 = vst [vmem:[%s137 + $0xb58] sm:$0xff] %v1529
        %2554 = vst [vmem:[%s137 + $0xb60] sm:$0xff] %v1530
        %2555 = vst [vmem:[%s137 + $0xb68] sm:$0xff] %v1531
        %2556 = vst [vmem:[%s137 + $0xb70] sm:$0xff] %v1532
        %2557 = vst [vmem:[%s137 + $0xb78] sm:$0xff] %v1533
        %2558 = vst [vmem:[%s137 + $0xb80] sm:$0xff] %v1534
        %2559 = vst [vmem:[%s137 + $0xb88] sm:$0xff] %v1535
        %2560 = vst [vmem:[%s137 + $0xb90] sm:$0xff] %v1536
        %2561 = vst [vmem:[%s137 + $0xb98] sm:$0xff] %v1537
        %2562 = vst [vmem:[%s137 + $0xba0] sm:$0xff] %v1538
        %2563 = vst [vmem:[%s137 + $0xba8] sm:$0xff] %v1539
        %2564 = vst [vmem:[%s137 + $0xbb0] sm:$0xff] %v1540
        %2565 = vst [vmem:[%s137 + $0xbb8] sm:$0xff] %v1541
        %2566 = vst [vmem:[%s137 + $0xbc0] sm:$0xff] %v1542
        %2567 = vst [vmem:[%s137 + $0xbc8] sm:$0xff] %v1543
        %2568 = vst [vmem:[%s137 + $0xbd0] sm:$0xff] %v1544
        %2569 = vst [vmem:[%s137 + $0xbd8] sm:$0xff] %v1545
        %2570 = vst [vmem:[%s137 + $0xbe0] sm:$0xff] %v1546
        %2571 = vst [vmem:[%s137 + $0xbe8] sm:$0xff] %v1547
        %2572 = vst [vmem:[%s137 + $0xbf0] sm:$0xff] %v1548
        %2573 = vst [vmem:[%s137 + $0xbf8] sm:$0xff] %v1549
        %2574 = vst [vmem:[%s137 + $0xc00] sm:$0xff] %v1550
        %2575 = vst [vmem:[%s137 + $0xc08] sm:$0xff] %v1551
        %2576 = vst [vmem:[%s137 + $0xc10] sm:$0xff] %v1552
        %2577 = vst [vmem:[%s137 + $0xc18] sm:$0xff] %v1553
        %2578 = vst [vmem:[%s137 + $0xc20] sm:$0xff] %v1554
        %2579 = vst [vmem:[%s137 + $0xc28] sm:$0xff] %v1555
        %2580 = vst [vmem:[%s137 + $0xc30] sm:$0xff] %v1556
        %2581 = vst [vmem:[%s137 + $0xc38] sm:$0xff] %v1557
        %2582 = vst [vmem:[%s137 + $0xc40] sm:$0xff] %v1558
        %2583 = vst [vmem:[%s137 + $0xc48] sm:$0xff] %v1559
        %2584 = vst [vmem:[%s137 + $0xc50] sm:$0xff] %v1560
        %2585 = vst [vmem:[%s137 + $0xc58] sm:$0xff] %v1561
        %2586 = vst [vmem:[%s137 + $0xc60] sm:$0xff] %v1562
        %2587 = vst [vmem:[%s137 + $0xc68] sm:$0xff] %v1563
        %2588 = vst [vmem:[%s137 + $0xc70] sm:$0xff] %v1564
        %2589 = vst [vmem:[%s137 + $0xc78] sm:$0xff] %v1565
        %2590 = vst [vmem:[%s137 + $0xc80] sm:$0xff] %v1566
        %2591 = vst [vmem:[%s137 + $0xc88] sm:$0xff] %v1567
        %2592 = vst [vmem:[%s137 + $0xc90] sm:$0xff] %v1568
        %2593 = vst [vmem:[%s137 + $0xc98] sm:$0xff] %v1569
        %2594 = vst [vmem:[%s137 + $0xca0] sm:$0xff] %v1570
        %2595 = vst [vmem:[%s137 + $0xca8] sm:$0xff] %v1571
        %2596 = vst [vmem:[%s137 + $0xcb0] sm:$0xff] %v1572
        %2597 = vst [vmem:[%s137 + $0xcb8] sm:$0xff] %v1573
        %2598 = vst [vmem:[%s137 + $0xcc0] sm:$0xff] %v1574
        %2599 = vst [vmem:[%s137 + $0xcc8] sm:$0xff] %v1575
        %2600 = vst [vmem:[%s137 + $0xcd0] sm:$0xff] %v1576
        %2601 = vst [vmem:[%s137 + $0xcd8] sm:$0xff] %v1577
        %2602 = vst [vmem:[%s137 + $0xce0] sm:$0xff] %v1578
        %2603 = vst [vmem:[%s137 + $0xce8] sm:$0xff] %v1579
        %2604 = vst [vmem:[%s137 + $0xcf0] sm:$0xff] %v1580
        %2605 = vst [vmem:[%s137 + $0xcf8] sm:$0xff] %v1581
        %2606 = vst [vmem:[%s137 + $0xd00] sm:$0xff] %v1582
        %2607 = vst [vmem:[%s137 + $0xd08] sm:$0xff] %v1583
        %2608 = vst [vmem:[%s137 + $0xd10] sm:$0xff] %v1584
        %2609 = vst [vmem:[%s137 + $0xd18] sm:$0xff] %v1585
        %2610 = vst [vmem:[%s137 + $0xd20] sm:$0xff] %v1586
        %2611 = vst [vmem:[%s137 + $0xd28] sm:$0xff] %v1587
        %2612 = vst [vmem:[%s137 + $0xd30] sm:$0xff] %v1588
        %2613 = vst [vmem:[%s137 + $0xd38] sm:$0xff] %v1589
        %2614 = vst [vmem:[%s137 + $0xd40] sm:$0xff] %v1590
        %2615 = vst [vmem:[%s137 + $0xd48] sm:$0xff] %v1591
        %2616 = vst [vmem:[%s137 + $0xd50] sm:$0xff] %v1592
        %2617 = vst [vmem:[%s137 + $0xd58] sm:$0xff] %v1593
        %2618 = vst [vmem:[%s137 + $0xd60] sm:$0xff] %v1594
        %2619 = vst [vmem:[%s137 + $0xd68] sm:$0xff] %v1595
        %2620 = vst [vmem:[%s137 + $0xd70] sm:$0xff] %v1596
        %2621 = vst [vmem:[%s137 + $0xd78] sm:$0xff] %v1597
        %2622 = vst [vmem:[%s137 + $0xd80] sm:$0xff] %v1598
        %2623 = vst [vmem:[%s137 + $0xd88] sm:$0xff] %v1599
        %2624 = vst [vmem:[%s137 + $0xd90] sm:$0xff] %v1600
        %2625 = vst [vmem:[%s137 + $0xd98] sm:$0xff] %v1601
        %2626 = vst [vmem:[%s137 + $0xda0] sm:$0xff] %v1602
        %2627 = vst [vmem:[%s137 + $0xda8] sm:$0xff] %v1603
        %2628 = vst [vmem:[%s137 + $0xdb0] sm:$0xff] %v1604
        %2629 = vst [vmem:[%s137 + $0xdb8] sm:$0xff] %v1605
        %2630 = vst [vmem:[%s137 + $0xdc0] sm:$0xff] %v1606
        %2631 = vst [vmem:[%s137 + $0xdc8] sm:$0xff] %v1607
        %2632 = vst [vmem:[%s137 + $0xdd0] sm:$0xff] %v1608
        %2633 = vst [vmem:[%s137 + $0xdd8] sm:$0xff] %v1609
        %2634 = vst [vmem:[%s137 + $0xde0] sm:$0xff] %v1610
        %2635 = vst [vmem:[%s137 + $0xde8] sm:$0xff] %v1611
        %2636 = vst [vmem:[%s137 + $0xdf0] sm:$0xff] %v1612
        %2637 = vst [vmem:[%s137 + $0xdf8] sm:$0xff] %v1613
        %2638 = vst [vmem:[%s137 + $0xe00] sm:$0xff] %v1614
        %2639 = vst [vmem:[%s137 + $0xe08] sm:$0xff] %v1615
        %2640 = vst [vmem:[%s137 + $0xe10] sm:$0xff] %v1616
        %2641 = vst [vmem:[%s137 + $0xe18] sm:$0xff] %v1617
        %2642 = vst [vmem:[%s137 + $0xe20] sm:$0xff] %v1618
        %2643 = vst [vmem:[%s137 + $0xe28] sm:$0xff] %v1619
        %2644 = vst [vmem:[%s137 + $0xe30] sm:$0xff] %v1620
        %2645 = vst [vmem:[%s137 + $0xe38] sm:$0xff] %v1621
        %2646 = vst [vmem:[%s137 + $0xe40] sm:$0xff] %v1622
        %2647 = vst [vmem:[%s137 + $0xe48] sm:$0xff] %v1623
        %2648 = vst [vmem:[%s137 + $0xe50] sm:$0xff] %v1624
        %2649 = vst [vmem:[%s137 + $0xe58] sm:$0xff] %v1625
        %2650 = vst [vmem:[%s137 + $0xe60] sm:$0xff] %v1626
        %2651 = vst [vmem:[%s137 + $0xe68] sm:$0xff] %v1627
        %2652 = vst [vmem:[%s137 + $0xe70] sm:$0xff] %v1628
        %2653 = vst [vmem:[%s137 + $0xe78] sm:$0xff] %v1629
        %2654 = vst [vmem:[%s137 + $0xe80] sm:$0xff] %v1630
        %2655 = vst [vmem:[%s137 + $0xe88] sm:$0xff] %v1631
        %2656 = vst [vmem:[%s137 + $0xe90] sm:$0xff] %v1632
        %2657 = vst [vmem:[%s137 + $0xe98] sm:$0xff] %v1633
        %2658 = vst [vmem:[%s137 + $0xea0] sm:$0xff] %v1634
        %2659 = vst [vmem:[%s137 + $0xea8] sm:$0xff] %v1635
        %2660 = vst [vmem:[%s137 + $0xeb0] sm:$0xff] %v1636
        %2661 = vst [vmem:[%s137 + $0xeb8] sm:$0xff] %v1637
        %2662 = vst [vmem:[%s137 + $0xec0] sm:$0xff] %v1638
        %2663 = vst [vmem:[%s137 + $0xec8] sm:$0xff] %v1639
        %2664 = vst [vmem:[%s137 + $0xed0] sm:$0xff] %v1640
        %2665 = vst [vmem:[%s137 + $0xed8] sm:$0xff] %v1641
        %2666 = vst [vmem:[%s137 + $0xee0] sm:$0xff] %v1642
        %2667 = vst [vmem:[%s137 + $0xee8] sm:$0xff] %v1643
        %2668 = vst [vmem:[%s137 + $0xef0] sm:$0xff] %v1644
        %2669 = vst [vmem:[%s137 + $0xef8] sm:$0xff] %v1645
        %2670 = vst [vmem:[%s137 + $0xf00] sm:$0xff] %v1646
        %2671 = vst [vmem:[%s137 + $0xf08] sm:$0xff] %v1647
        %2672 = vst [vmem:[%s137 + $0xf10] sm:$0xff] %v1648
        %2673 = vst [vmem:[%s137 + $0xf18] sm:$0xff] %v1649
        %2674 = vst [vmem:[%s137 + $0xf20] sm:$0xff] %v1650
        %2675 = vst [vmem:[%s137 + $0xf28] sm:$0xff] %v1651
        %2676 = vst [vmem:[%s137 + $0xf30] sm:$0xff] %v1652
        %2677 = vst [vmem:[%s137 + $0xf38] sm:$0xff] %v1653
        %2678 = vst [vmem:[%s137 + $0xf40] sm:$0xff] %v1654
        %2679 = vst [vmem:[%s137 + $0xf48] sm:$0xff] %v1655
        %2680 = vst [vmem:[%s137 + $0xf50] sm:$0xff] %v1656
        %2681 = vst [vmem:[%s137 + $0xf58] sm:$0xff] %v1657
        %2682 = vst [vmem:[%s137 + $0xf60] sm:$0xff] %v1658
        %2683 = vst [vmem:[%s137 + $0xf68] sm:$0xff] %v1659
        %2684 = vst [vmem:[%s137 + $0xf70] sm:$0xff] %v1660
        %2685 = vst [vmem:[%s137 + $0xf78] sm:$0xff] %v1661
        %2686 = vst [vmem:[%s137 + $0xf80] sm:$0xff] %v1662
        %2687 = vst [vmem:[%s137 + $0xf88] sm:$0xff] %v1663
        %2688 = vst [vmem:[%s137 + $0xf90] sm:$0xff] %v1664
        %2689 = vst [vmem:[%s137 + $0xf98] sm:$0xff] %v1665
        %2690 = vst [vmem:[%s137 + $0xfa0] sm:$0xff] %v1666
        %2691 = vst [vmem:[%s137 + $0xfa8] sm:$0xff] %v1667
        %2692 = vst [vmem:[%s137 + $0xfb0] sm:$0xff] %v1668
        %2693 = vst [vmem:[%s137 + $0xfb8] sm:$0xff] %v1669
        %2694 = vst [vmem:[%s137 + $0xfc0] sm:$0xff] %v1670
        %2695 = vst [vmem:[%s137 + $0xfc8] sm:$0xff] %v1671
        %2696 = vst [vmem:[%s137 + $0xfd0] sm:$0xff] %v1672
        %2697 = vst [vmem:[%s137 + $0xfd8] sm:$0xff] %v1673
        %2698 = vst [vmem:[%s137 + $0xfe0] sm:$0xff] %v1674
        %2699 = vst [vmem:[%s137 + $0xfe8] sm:$0xff] %v1675
        %2700 = vst [vmem:[%s137 + $0xff0] sm:$0xff] %v1676
        %2701 = vst [vmem:[%s137 + $0xff8] sm:$0xff] %v1677
        %2702 = vst [vmem:[%s137 + $0x1000] sm:$0xff] %v1678
        %2703 = vst [vmem:[%s137 + $0x1008] sm:$0xff] %v1679
        %2704 = vst [vmem:[%s137 + $0x1010] sm:$0xff] %v1680
        %2705 = vst [vmem:[%s137 + $0x1018] sm:$0xff] %v1681
        %2706 = vst [vmem:[%s137 + $0x1020] sm:$0xff] %v1682
        %2707 = vst [vmem:[%s137 + $0x1028] sm:$0xff] %v1683
        %2708 = vst [vmem:[%s137 + $0x1030] sm:$0xff] %v1684
        %2709 = vst [vmem:[%s137 + $0x1038] sm:$0xff] %v1685
        %2710 = vst [vmem:[%s137 + $0x1040] sm:$0xff] %v1686
        %2711 = vst [vmem:[%s137 + $0x1048] sm:$0xff] %v1687
        %2712 = vst [vmem:[%s137 + $0x1050] sm:$0xff] %v1688
        %2713 = vst [vmem:[%s137 + $0x1058] sm:$0xff] %v1689
        %2714 = vst [vmem:[%s137 + $0x1060] sm:$0xff] %v1690
        %2715 = vst [vmem:[%s137 + $0x1068] sm:$0xff] %v1691
        %2716 = vst [vmem:[%s137 + $0x1070] sm:$0xff] %v1692
        %2717 = vst [vmem:[%s137 + $0x1078] sm:$0xff] %v1693
        %2718 = vst [vmem:[%s137 + $0x1080] sm:$0xff] %v1694
        %2719 = vst [vmem:[%s137 + $0x1088] sm:$0xff] %v1695
        %2720 = vst [vmem:[%s137 + $0x1090] sm:$0xff] %v1696
        %2721 = vst [vmem:[%s137 + $0x1098] sm:$0xff] %v1697
        %2722 = vst [vmem:[%s137 + $0x10a0] sm:$0xff] %v1698
        %2723 = vst [vmem:[%s137 + $0x10a8] sm:$0xff] %v1699
        %2724 = vst [vmem:[%s137 + $0x10b0] sm:$0xff] %v1700
        %2725 = vst [vmem:[%s137 + $0x10b8] sm:$0xff] %v1701
        %2726 = vst [vmem:[%s137 + $0x10c0] sm:$0xff] %v1702
        %2727 = vst [vmem:[%s137 + $0x10c8] sm:$0xff] %v1703
        %2728 = vst [vmem:[%s137 + $0x10d0] sm:$0xff] %v1704
        %2729 = vst [vmem:[%s137 + $0x10d8] sm:$0xff] %v1705
        %2730 = vst [vmem:[%s137 + $0x10e0] sm:$0xff] %v1706
        %2731 = vst [vmem:[%s137 + $0x10e8] sm:$0xff] %v1707
        %2732 = vst [vmem:[%s137 + $0x10f0] sm:$0xff] %v1708
        %2733 = vst [vmem:[%s137 + $0x10f8] sm:$0xff] %v1709
        %2734 = vst [vmem:[%s137 + $0x1100] sm:$0xff] %v1710
        %2735 = vst [vmem:[%s137 + $0x1108] sm:$0xff] %v1711
        %2736 = vst [vmem:[%s137 + $0x1110] sm:$0xff] %v1712
        %2737 = vst [vmem:[%s137 + $0x1118] sm:$0xff] %v1713
        %2738 = vst [vmem:[%s137 + $0x1120] sm:$0xff] %v1714
        %2739 = vst [vmem:[%s137 + $0x1128] sm:$0xff] %v1715
        %2740 = vst [vmem:[%s137 + $0x1130] sm:$0xff] %v1716
        %2741 = vst [vmem:[%s137 + $0x1138] sm:$0xff] %v1717
        %2742 = vst [vmem:[%s137 + $0x1140] sm:$0xff] %v1718
        %2743 = vst [vmem:[%s137 + $0x1148] sm:$0xff] %v1719
        %2744 = vst [vmem:[%s137 + $0x1150] sm:$0xff] %v1720
        %2745 = vst [vmem:[%s137 + $0x1158] sm:$0xff] %v1721
        %2746 = vst [vmem:[%s137 + $0x1160] sm:$0xff] %v1722
        %2747 = vst [vmem:[%s137 + $0x1168] sm:$0xff] %v1723
        %2748 = vst [vmem:[%s137 + $0x1170] sm:$0xff] %v1724
        %2749 = vst [vmem:[%s137 + $0x1178] sm:$0xff] %v1725
        %2750 = vst [vmem:[%s137 + $0x1180] sm:$0xff] %v1726
        %2751 = vst [vmem:[%s137 + $0x1188] sm:$0xff] %v1727
        %2752 = vst [vmem:[%s137 + $0x1190] sm:$0xff] %v1728
        %2753 = vst [vmem:[%s137 + $0x1198] sm:$0xff] %v1729
        %2754 = vst [vmem:[%s137 + $0x11a0] sm:$0xff] %v1730
        %2755 = vst [vmem:[%s137 + $0x11a8] sm:$0xff] %v1731
        %2756 = vst [vmem:[%s137 + $0x11b0] sm:$0xff] %v1732
        %2757 = vst [vmem:[%s137 + $0x11b8] sm:$0xff] %v1733
        %2758 = vst [vmem:[%s137 + $0x11c0] sm:$0xff] %v1734
        %2759 = vst [vmem:[%s137 + $0x11c8] sm:$0xff] %v1735
        %2760 = vst [vmem:[%s137 + $0x11d0] sm:$0xff] %v1736
        %2761 = vst [vmem:[%s137 + $0x11d8] sm:$0xff] %v1737
        %2762 = vst [vmem:[%s137 + $0x11e0] sm:$0xff] %v1738
        %2763 = vst [vmem:[%s137 + $0x11e8] sm:$0xff] %v1739
        %2764 = vst [vmem:[%s137 + $0x11f0] sm:$0xff] %v1740
        %2765 = vst [vmem:[%s137 + $0x11f8] sm:$0xff] %v1741
        %2766 = vst [vmem:[%s137 + $0x1200] sm:$0xff] %v1742
        %2767 = vst [vmem:[%s137 + $0x1208] sm:$0xff] %v1743
        %2768 = vst [vmem:[%s137 + $0x1210] sm:$0xff] %v1744
        %2769 = vst [vmem:[%s137 + $0x1218] sm:$0xff] %v1745
        %2770 = vst [vmem:[%s137 + $0x1220] sm:$0xff] %v1746
        %2771 = vst [vmem:[%s137 + $0x1228] sm:$0xff] %v1747
        %2772 = vst [vmem:[%s137 + $0x1230] sm:$0xff] %v1748
        %2773 = vst [vmem:[%s137 + $0x1238] sm:$0xff] %v1749
        %2774 = vst [vmem:[%s137 + $0x1240] sm:$0xff] %v1750
        %2775 = vst [vmem:[%s137 + $0x1248] sm:$0xff] %v1751
        %2776 = vst [vmem:[%s137 + $0x1250] sm:$0xff] %v1752
        %2777 = vst [vmem:[%s137 + $0x1258] sm:$0xff] %v1753
        %2778 = vst [vmem:[%s137 + $0x1260] sm:$0xff] %v1754
        %2779 = vst [vmem:[%s137 + $0x1268] sm:$0xff] %v1755
        %2780 = vst [vmem:[%s137 + $0x1270] sm:$0xff] %v1756
        %2781 = vst [vmem:[%s137 + $0x1278] sm:$0xff] %v1757
        %2782 = vst [vmem:[%s137 + $0x1280] sm:$0xff] %v1758
        %2783 = vst [vmem:[%s137 + $0x1288] sm:$0xff] %v1759
        %2784 = vst [vmem:[%s137 + $0x1290] sm:$0xff] %v1760
        %2785 = vst [vmem:[%s137 + $0x1298] sm:$0xff] %v1761
        %2786 = vst [vmem:[%s137 + $0x12a0] sm:$0xff] %v1762
        %2787 = vst [vmem:[%s137 + $0x12a8] sm:$0xff] %v1763
        %2788 = vst [vmem:[%s137 + $0x12b0] sm:$0xff] %v1764
        %2789 = vst [vmem:[%s137 + $0x12b8] sm:$0xff] %v1765
        %2790 = vst [vmem:[%s137 + $0x12c0] sm:$0xff] %v1766
        %2791 = vst [vmem:[%s137 + $0x12c8] sm:$0xff] %v1767
        %2792 = vst [vmem:[%s137 + $0x12d0] sm:$0xff] %v1768
        %2793 = vst [vmem:[%s137 + $0x12d8] sm:$0xff] %v1769
        %2794 = vst [vmem:[%s137 + $0x12e0] sm:$0xff] %v1770
        %2795 = vst [vmem:[%s137 + $0x12e8] sm:$0xff] %v1771
        %2796 = vst [vmem:[%s137 + $0x12f0] sm:$0xff] %v1772
        %2797 = vst [vmem:[%s137 + $0x12f8] sm:$0xff] %v1773
        %2798 = vst [vmem:[%s137 + $0x1300] sm:$0xff] %v1774
        %2799 = vst [vmem:[%s137 + $0x1308] sm:$0xff] %v1775
        %2800 = vst [vmem:[%s137 + $0x1310] sm:$0xff] %v1776
        %2801 = vst [vmem:[%s137 + $0x1318] sm:$0xff] %v1777
        %2802 = vst [vmem:[%s137 + $0x1320] sm:$0xff] %v1778
        %2803 = vst [vmem:[%s137 + $0x1328] sm:$0xff] %v1779
        %2804 = vst [vmem:[%s137 + $0x1330] sm:$0xff] %v1780
        %2805 = vst [vmem:[%s137 + $0x1338] sm:$0xff] %v1781
        %2806 = vst [vmem:[%s137 + $0x1340] sm:$0xff] %v1782
        %2807 = vst [vmem:[%s137 + $0x1348] sm:$0xff] %v1783
        %2808 = vst [vmem:[%s137 + $0x1350] sm:$0xff] %v1784
        %2809 = vst [vmem:[%s137 + $0x1358] sm:$0xff] %v1785
        %2810 = vst [vmem:[%s137 + $0x1360] sm:$0xff] %v1786
        %2811 = vst [vmem:[%s137 + $0x1368] sm:$0xff] %v1787
        %2812 = vst [vmem:[%s137 + $0x1370] sm:$0xff] %v1788
        %2813 = vst [vmem:[%s137 + $0x1378] sm:$0xff] %v1789
        %2814 = vst [vmem:[%s137 + $0x1380] sm:$0xff] %v1790
        %2815 = vst [vmem:[%s137 + $0x1388] sm:$0xff] %v1791
        %2816 = vst [vmem:[%s137 + $0x1390] sm:$0xff] %v1792
        %2817 = vst [vmem:[%s137 + $0x1398] sm:$0xff] %v1793
        %2818 = vst [vmem:[%s137 + $0x13a0] sm:$0xff] %v1794
        %2819 = vst [vmem:[%s137 + $0x13a8] sm:$0xff] %v1795
        %2820 = vst [vmem:[%s137 + $0x13b0] sm:$0xff] %v1796
        %2821 = vst [vmem:[%s137 + $0x13b8] sm:$0xff] %v1797
        %2822 = vst [vmem:[%s137 + $0x13c0] sm:$0xff] %v1798
        %2823 = vst [vmem:[%s137 + $0x13c8] sm:$0xff] %v1799
        %2824 = vst [vmem:[%s137 + $0x13d0] sm:$0xff] %v1800
        %2825 = vst [vmem:[%s137 + $0x13d8] sm:$0xff] %v1801
        %2826 = vst [vmem:[%s137 + $0x13e0] sm:$0xff] %v1802
        %2827 = vst [vmem:[%s137 + $0x13e8] sm:$0xff] %v1803
        %2828 = vst [vmem:[%s137 + $0x13f0] sm:$0xff] %v1804
        %2829 = vst [vmem:[%s137 + $0x13f8] sm:$0xff] %v1805
        %2830 = vst [vmem:[%s137 + $0x1400] sm:$0xff] %v1806
        %2831 = vst [vmem:[%s137 + $0x1408] sm:$0xff] %v1807
        %2832 = vst [vmem:[%s137 + $0x1410] sm:$0xff] %v1808
        %2833 = vst [vmem:[%s137 + $0x1418] sm:$0xff] %v1809
        %2834 = vst [vmem:[%s137 + $0x1420] sm:$0xff] %v1810
        %2835 = vst [vmem:[%s137 + $0x1428] sm:$0xff] %v1811
        %2836 = vst [vmem:[%s137 + $0x1430] sm:$0xff] %v1812
        %2837 = vst [vmem:[%s137 + $0x1438] sm:$0xff] %v1813
        %2838 = vst [vmem:[%s137 + $0x1440] sm:$0xff] %v1814
        %2839 = vst [vmem:[%s137 + $0x1448] sm:$0xff] %v1815
        %2840 = vst [vmem:[%s137 + $0x1450] sm:$0xff] %v1816
        %2841 = vst [vmem:[%s137 + $0x1458] sm:$0xff] %v1817
        %2842 = vst [vmem:[%s137 + $0x1460] sm:$0xff] %v1818
        %2843 = vst [vmem:[%s137 + $0x1468] sm:$0xff] %v1819
        %2844 = vst [vmem:[%s137 + $0x1470] sm:$0xff] %v1820
        %2845 = vst [vmem:[%s137 + $0x1478] sm:$0xff] %v1821
        %2846 = vst [vmem:[%s137 + $0x1480] sm:$0xff] %v1822
        %2847 = vst [vmem:[%s137 + $0x1488] sm:$0xff] %v1823
        %2848 = vst [vmem:[%s137 + $0x1490] sm:$0xff] %v1824
        %2849 = vst [vmem:[%s137 + $0x1498] sm:$0xff] %v1825
        %2850 = vst [vmem:[%s137 + $0x14a0] sm:$0xff] %v1826
        %2851 = vst [vmem:[%s137 + $0x14a8] sm:$0xff] %v1827
        %2852 = vst [vmem:[%s137 + $0x14b0] sm:$0xff] %v1828
        %2853 = vst [vmem:[%s137 + $0x14b8] sm:$0xff] %v1829
        %2854 = vst [vmem:[%s137 + $0x14c0] sm:$0xff] %v1830
        %2855 = vst [vmem:[%s137 + $0x14c8] sm:$0xff] %v1831
        %2856 = vst [vmem:[%s137 + $0x14d0] sm:$0xff] %v1832
        %2857 = vst [vmem:[%s137 + $0x14d8] sm:$0xff] %v1833
        %2858 = vst [vmem:[%s137 + $0x14e0] sm:$0xff] %v1834
        %2859 = vst [vmem:[%s137 + $0x14e8] sm:$0xff] %v1835
        %2860 = vst [vmem:[%s137 + $0x14f0] sm:$0xff] %v1836
        %2861 = vst [vmem:[%s137 + $0x14f8] sm:$0xff] %v1837
        %2862 = vst [vmem:[%s137 + $0x1500] sm:$0xff] %v1838
        %2863 = vst [vmem:[%s137 + $0x1508] sm:$0xff] %v1839
        %2864 = vst [vmem:[%s137 + $0x1510] sm:$0xff] %v1840
        %2865 = vst [vmem:[%s137 + $0x1518] sm:$0xff] %v1841
        %2866 = vst [vmem:[%s137 + $0x1520] sm:$0xff] %v1842
        %2867 = vst [vmem:[%s137 + $0x1528] sm:$0xff] %v1843
        %2868 = vst [vmem:[%s137 + $0x1530] sm:$0xff] %v1844
        %2869 = vst [vmem:[%s137 + $0x1538] sm:$0xff] %v1845
        %2870 = vst [vmem:[%s137 + $0x1540] sm:$0xff] %v1846
        %2871 = vst [vmem:[%s137 + $0x1548] sm:$0xff] %v1847
        %2872 = vst [vmem:[%s137 + $0x1550] sm:$0xff] %v1848
        %2873 = vst [vmem:[%s137 + $0x1558] sm:$0xff] %v1849
        %2874 = vst [vmem:[%s137 + $0x1560] sm:$0xff] %v1850
        %2875 = vst [vmem:[%s137 + $0x1568] sm:$0xff] %v1851
        %2876 = vst [vmem:[%s137 + $0x1570] sm:$0xff] %v1852
        %2877 = vst [vmem:[%s137 + $0x1578] sm:$0xff] %v1853
        %2878 = vst [vmem:[%s137 + $0x1580] sm:$0xff] %v1854
        %2879 = vst [vmem:[%s137 + $0x1588] sm:$0xff] %v1855
        %2880 = vst [vmem:[%s137 + $0x1590] sm:$0xff] %v1856
        %2881 = vst [vmem:[%s137 + $0x1598] sm:$0xff] %v1857
        %2882 = vst [vmem:[%s137 + $0x15a0] sm:$0xff] %v1858
        %2883 = vst [vmem:[%s137 + $0x15a8] sm:$0xff] %v1859
        %2884 = vst [vmem:[%s137 + $0x15b0] sm:$0xff] %v1860
        %2885 = vst [vmem:[%s137 + $0x15b8] sm:$0xff] %v1861
        %2886 = vst [vmem:[%s137 + $0x15c0] sm:$0xff] %v1862
        %2887 = vst [vmem:[%s137 + $0x15c8] sm:$0xff] %v1863
        %2888 = vst [vmem:[%s137 + $0x15d0] sm:$0xff] %v1864
        %2889 = vst [vmem:[%s137 + $0x15d8] sm:$0xff] %v1865
        %2890 = vst [vmem:[%s137 + $0x15e0] sm:$0xff] %v1866
        %2891 = vst [vmem:[%s137 + $0x15e8] sm:$0xff] %v1867
        %2892 = vst [vmem:[%s137 + $0x15f0] sm:$0xff] %v1868
        %2893 = vst [vmem:[%s137 + $0x15f8] sm:$0xff] %v1869
        %2894 = vst [vmem:[%s137 + $0x1600] sm:$0xff] %v1870
        %2895 = vst [vmem:[%s137 + $0x1608] sm:$0xff] %v1871
        %2896 = vst [vmem:[%s137 + $0x1610] sm:$0xff] %v1872
        %2897 = vst [vmem:[%s137 + $0x1618] sm:$0xff] %v1873
        %2898 = vst [vmem:[%s137 + $0x1620] sm:$0xff] %v1874
        %2899 = vst [vmem:[%s137 + $0x1628] sm:$0xff] %v1875
        %2900 = vst [vmem:[%s137 + $0x1630] sm:$0xff] %v1876
        %2901 = vst [vmem:[%s137 + $0x1638] sm:$0xff] %v1877
        %2902 = vst [vmem:[%s137 + $0x1640] sm:$0xff] %v1878
        %2903 = vst [vmem:[%s137 + $0x1648] sm:$0xff] %v1879
        %2904 = vst [vmem:[%s137 + $0x1650] sm:$0xff] %v1880
        %2905 = vst [vmem:[%s137 + $0x1658] sm:$0xff] %v1881
        %2906 = vst [vmem:[%s137 + $0x1660] sm:$0xff] %v1882
        %2907 = vst [vmem:[%s137 + $0x1668] sm:$0xff] %v1883
        %2908 = vst [vmem:[%s137 + $0x1670] sm:$0xff] %v1884
        %2909 = vst [vmem:[%s137 + $0x1678] sm:$0xff] %v1885
        %2910 = vst [vmem:[%s137 + $0x1680] sm:$0xff] %v1886
        %2911 = vst [vmem:[%s137 + $0x1688] sm:$0xff] %v1887
        %2912 = vst [vmem:[%s137 + $0x1690] sm:$0xff] %v1888
        %2913 = vst [vmem:[%s137 + $0x1698] sm:$0xff] %v1889
        %2914 = vst [vmem:[%s137 + $0x16a0] sm:$0xff] %v1890
        %2915 = vst [vmem:[%s137 + $0x16a8] sm:$0xff] %v1891
        %2916 = vst [vmem:[%s137 + $0x16b0] sm:$0xff] %v1892
        %2917 = vst [vmem:[%s137 + $0x16b8] sm:$0xff] %v1893
        %2918 = vst [vmem:[%s137 + $0x16c0] sm:$0xff] %v1894
        %2919 = vst [vmem:[%s137 + $0x16c8] sm:$0xff] %v1895
        %2920 = vst [vmem:[%s137 + $0x16d0] sm:$0xff] %v1896
        %2921 = vst [vmem:[%s137 + $0x16d8] sm:$0xff] %v1897
        %2922 = vst [vmem:[%s137 + $0x16e0] sm:$0xff] %v1898
        %2923 = vst [vmem:[%s137 + $0x16e8] sm:$0xff] %v1899
        %2924 = vst [vmem:[%s137 + $0x16f0] sm:$0xff] %v1900
        %2925 = vst [vmem:[%s137 + $0x16f8] sm:$0xff] %v1901
        %2926 = vst [vmem:[%s137 + $0x1700] sm:$0xff] %v1902
        %2927 = vst [vmem:[%s137 + $0x1708] sm:$0xff] %v1903
        %2928 = vst [vmem:[%s137 + $0x1710] sm:$0xff] %v1904
        %2929 = vst [vmem:[%s137 + $0x1718] sm:$0xff] %v1905
        %2930 = vst [vmem:[%s137 + $0x1720] sm:$0xff] %v1906
        %2931 = vst [vmem:[%s137 + $0x1728] sm:$0xff] %v1907
        %2932 = vst [vmem:[%s137 + $0x1730] sm:$0xff] %v1908
        %2933 = vst [vmem:[%s137 + $0x1738] sm:$0xff] %v1909
        %2934 = vst [vmem:[%s137 + $0x1740] sm:$0xff] %v1910
        %2935 = vst [vmem:[%s137 + $0x1748] sm:$0xff] %v1911
        %2936 = vst [vmem:[%s137 + $0x1750] sm:$0xff] %v1912
        %2937 = vst [vmem:[%s137 + $0x1758] sm:$0xff] %v1913
        %2938 = vst [vmem:[%s137 + $0x1760] sm:$0xff] %v1914
        %2939 = vst [vmem:[%s137 + $0x1768] sm:$0xff] %v1915
        %2940 = vst [vmem:[%s137 + $0x1770] sm:$0xff] %v1916
        %2941 = vst [vmem:[%s137 + $0x1778] sm:$0xff] %v1917
        %2942 = vst [vmem:[%s137 + $0x1780] sm:$0xff] %v1918
        %2943 = vst [vmem:[%s137 + $0x1788] sm:$0xff] %v1919
        %2944 = vst [vmem:[%s137 + $0x1790] sm:$0xff] %v1920
        %2945 = vst [vmem:[%s137 + $0x1798] sm:$0xff] %v1921
        %2946 = vst [vmem:[%s137 + $0x17a0] sm:$0xff] %v1922
        %2947 = vst [vmem:[%s137 + $0x17a8] sm:$0xff] %v1923
        %2948 = vst [vmem:[%s137 + $0x17b0] sm:$0xff] %v1924
        %2949 = vst [vmem:[%s137 + $0x17b8] sm:$0xff] %v1925
        %2950 = vst [vmem:[%s137 + $0x17c0] sm:$0xff] %v1926
        %2951 = vst [vmem:[%s137 + $0x17c8] sm:$0xff] %v1927
        %2952 = vst [vmem:[%s137 + $0x17d0] sm:$0xff] %v1928
        %2953 = vst [vmem:[%s137 + $0x17d8] sm:$0xff] %v1929
        %2954 = vst [vmem:[%s137 + $0x17e0] sm:$0xff] %v1930
        %2955 = vst [vmem:[%s137 + $0x17e8] sm:$0xff] %v1931
        %2956 = vst [vmem:[%s137 + $0x17f0] sm:$0xff] %v1932
        %2957 = vst [vmem:[%s137 + $0x17f8] sm:$0xff] %v1933
        %2958 = vst [vmem:[%s137 + $0x1800] sm:$0xff] %v1934
        %2959 = vst [vmem:[%s137 + $0x1808] sm:$0xff] %v1935
        %2960 = vst [vmem:[%s137 + $0x1810] sm:$0xff] %v1936
        %2961 = vst [vmem:[%s137 + $0x1818] sm:$0xff] %v1937
        %2962 = vst [vmem:[%s137 + $0x1820] sm:$0xff] %v1938
        %2963 = vst [vmem:[%s137 + $0x1828] sm:$0xff] %v1939
        %2964 = vst [vmem:[%s137 + $0x1830] sm:$0xff] %v1940
        %2965 = vst [vmem:[%s137 + $0x1838] sm:$0xff] %v1941
        %2966 = vst [vmem:[%s137 + $0x1840] sm:$0xff] %v1942
        %2967 = vst [vmem:[%s137 + $0x1848] sm:$0xff] %v1943
        %2968 = vst [vmem:[%s137 + $0x1850] sm:$0xff] %v1944
        %2969 = vst [vmem:[%s137 + $0x1858] sm:$0xff] %v1945
        %2970 = vst [vmem:[%s137 + $0x1860] sm:$0xff] %v1946
        %2971 = vst [vmem:[%s137 + $0x1868] sm:$0xff] %v1947
        %2972 = vst [vmem:[%s137 + $0x1870] sm:$0xff] %v1948
        %2973 = vst [vmem:[%s137 + $0x1878] sm:$0xff] %v1949
        %2974 = vst [vmem:[%s137 + $0x1880] sm:$0xff] %v1950
        %2975 = vst [vmem:[%s137 + $0x1888] sm:$0xff] %v1951
        %2976 = vst [vmem:[%s137 + $0x1890] sm:$0xff] %v1952
        %2977 = vst [vmem:[%s137 + $0x1898] sm:$0xff] %v1953
        %2978 = vst [vmem:[%s137 + $0x18a0] sm:$0xff] %v1954
        %2979 = vst [vmem:[%s137 + $0x18a8] sm:$0xff] %v1955
        %2980 = vst [vmem:[%s137 + $0x18b0] sm:$0xff] %v1956
        %2981 = vst [vmem:[%s137 + $0x18b8] sm:$0xff] %v1957
        %2982 = vst [vmem:[%s137 + $0x18c0] sm:$0xff] %v1958
        %2983 = vst [vmem:[%s137 + $0x18c8] sm:$0xff] %v1959
        %2984 = vst [vmem:[%s137 + $0x18d0] sm:$0xff] %v1960
        %2985 = vst [vmem:[%s137 + $0x18d8] sm:$0xff] %v1961
        %2986 = vst [vmem:[%s137 + $0x18e0] sm:$0xff] %v1962
        %2987 = vst [vmem:[%s137 + $0x18e8] sm:$0xff] %v1963
        %2988 = vst [vmem:[%s137 + $0x18f0] sm:$0xff] %v1964
        %2989 = vst [vmem:[%s137 + $0x18f8] sm:$0xff] %v1965
        %2990 = vst [vmem:[%s137 + $0x1900] sm:$0xff] %v1966
        %2991 = vst [vmem:[%s137 + $0x1908] sm:$0xff] %v1967
        %2992 = vst [vmem:[%s137 + $0x1910] sm:$0xff] %v1968
        %2993 = vst [vmem:[%s137 + $0x1918] sm:$0xff] %v1969
        %2994 = vst [vmem:[%s137 + $0x1920] sm:$0xff] %v1970
        %2995 = vst [vmem:[%s137 + $0x1928] sm:$0xff] %v1971
        %2996 = vst [vmem:[%s137 + $0x1930] sm:$0xff] %v1972
        %2997 = vst [vmem:[%s137 + $0x1938] sm:$0xff] %v1973
        %2998 = vst [vmem:[%s137 + $0x1940] sm:$0xff] %v1974
        %2999 = vst [vmem:[%s137 + $0x1948] sm:$0xff] %v1975
        %3000 = vst [vmem:[%s137 + $0x1950] sm:$0xff] %v1976
        %3001 = vst [vmem:[%s137 + $0x1958] sm:$0xff] %v1977
        %3002 = vst [vmem:[%s137 + $0x1960] sm:$0xff] %v1978
        %3003 = vst [vmem:[%s137 + $0x1968] sm:$0xff] %v1979
        %3004 = vst [vmem:[%s137 + $0x1970] sm:$0xff] %v1980
        %3005 = vst [vmem:[%s137 + $0x1978] sm:$0xff] %v1981
        %3006 = vst [vmem:[%s137 + $0x1980] sm:$0xff] %v1982
        %3007 = vst [vmem:[%s137 + $0x1988] sm:$0xff] %v1983
        %3008 = vst [vmem:[%s137 + $0x1990] sm:$0xff] %v1984
        %3009 = vst [vmem:[%s137 + $0x1998] sm:$0xff] %v1985
        %3010 = vst [vmem:[%s137 + $0x19a0] sm:$0xff] %v1986
        %3011 = vst [vmem:[%s137 + $0x19a8] sm:$0xff] %v1987
        %3012 = vst [vmem:[%s137 + $0x19b0] sm:$0xff] %v1988
        %3013 = vst [vmem:[%s137 + $0x19b8] sm:$0xff] %v1989
        %3014 = vst [vmem:[%s137 + $0x19c0] sm:$0xff] %v1990
        %3015 = vst [vmem:[%s137 + $0x19c8] sm:$0xff] %v1991
        %3016 = vst [vmem:[%s137 + $0x19d0] sm:$0xff] %v1992
        %3017 = vst [vmem:[%s137 + $0x19d8] sm:$0xff] %v1993
        %3018 = vst [vmem:[%s137 + $0x19e0] sm:$0xff] %v1994
        %3019 = vst [vmem:[%s137 + $0x19e8] sm:$0xff] %v1995
        %3020 = vst [vmem:[%s137 + $0x19f0] sm:$0xff] %v1996
        %3021 = vst [vmem:[%s137 + $0x19f8] sm:$0xff] %v1997
        %3022 = vst [vmem:[%s137 + $0x1a00] sm:$0xff] %v1998
        %3023 = vst [vmem:[%s137 + $0x1a08] sm:$0xff] %v1999
        %3024 = vst [vmem:[%s137 + $0x1a10] sm:$0xff] %v2000
        %3025 = vst [vmem:[%s137 + $0x1a18] sm:$0xff] %v2001
        %3026 = vst [vmem:[%s137 + $0x1a20] sm:$0xff] %v2002
        %3027 = vst [vmem:[%s137 + $0x1a28] sm:$0xff] %v2003
        %3028 = vst [vmem:[%s137 + $0x1a30] sm:$0xff] %v2004
        %3029 = vst [vmem:[%s137 + $0x1a38] sm:$0xff] %v2005
        %3030 = vst [vmem:[%s137 + $0x1a40] sm:$0xff] %v2006
        %3031 = vst [vmem:[%s137 + $0x1a48] sm:$0xff] %v2007
        %3032 = vst [vmem:[%s137 + $0x1a50] sm:$0xff] %v2008
        %3033 = vst [vmem:[%s137 + $0x1a58] sm:$0xff] %v2009
        %3034 = vst [vmem:[%s137 + $0x1a60] sm:$0xff] %v2010
        %3035 = vst [vmem:[%s137 + $0x1a68] sm:$0xff] %v2011
        %3036 = vst [vmem:[%s137 + $0x1a70] sm:$0xff] %v2012
        %3037 = vst [vmem:[%s137 + $0x1a78] sm:$0xff] %v2013
        %3038 = vst [vmem:[%s137 + $0x1a80] sm:$0xff] %v2014
        %3039 = vst [vmem:[%s137 + $0x1a88] sm:$0xff] %v2015
        %3040 = vst [vmem:[%s137 + $0x1a90] sm:$0xff] %v2016
        %3041 = vst [vmem:[%s137 + $0x1a98] sm:$0xff] %v2017
        %3042 = vst [vmem:[%s137 + $0x1aa0] sm:$0xff] %v2018
        %3043 = vst [vmem:[%s137 + $0x1aa8] sm:$0xff] %v2019
        %3044 = vst [vmem:[%s137 + $0x1ab0] sm:$0xff] %v2020
        %3045 = vst [vmem:[%s137 + $0x1ab8] sm:$0xff] %v2021
        %3046 = vst [vmem:[%s137 + $0x1ac0] sm:$0xff] %v2022
        %3047 = vst [vmem:[%s137 + $0x1ac8] sm:$0xff] %v2023
        %3048 = vst [vmem:[%s137 + $0x1ad0] sm:$0xff] %v2024
        %3049 = vst [vmem:[%s137 + $0x1ad8] sm:$0xff] %v2025
        %3050 = vst [vmem:[%s137 + $0x1ae0] sm:$0xff] %v2026
        %3051 = vst [vmem:[%s137 + $0x1ae8] sm:$0xff] %v2027
        %3052 = vst [vmem:[%s137 + $0x1af0] sm:$0xff] %v2028
        %3053 = vst [vmem:[%s137 + $0x1af8] sm:$0xff] %v2029
        %3054 = vst [vmem:[%s137 + $0x1b00] sm:$0xff] %v2030
        %3055 = vst [vmem:[%s137 + $0x1b08] sm:$0xff] %v2031
        %3056 = vst [vmem:[%s137 + $0x1b10] sm:$0xff] %v2032
        %3057 = vst [vmem:[%s137 + $0x1b18] sm:$0xff] %v2033
        %3058 = vst [vmem:[%s137 + $0x1b20] sm:$0xff] %v2034
        %3059 = vst [vmem:[%s137 + $0x1b28] sm:$0xff] %v2035
        %3060 = vst [vmem:[%s137 + $0x1b30] sm:$0xff] %v2036
        %3061 = vst [vmem:[%s137 + $0x1b38] sm:$0xff] %v2037
        %3062 = vst [vmem:[%s137 + $0x1b40] sm:$0xff] %v2038
        %3063 = vst [vmem:[%s137 + $0x1b48] sm:$0xff] %v2039
        %3064 = vst [vmem:[%s137 + $0x1b50] sm:$0xff] %v2040
        %3065 = vst [vmem:[%s137 + $0x1b58] sm:$0xff] %v2041
        %3066 = vst [vmem:[%s137 + $0x1b60] sm:$0xff] %v2042
        %3067 = vst [vmem:[%s137 + $0x1b68] sm:$0xff] %v2043
        %3068 = vst [vmem:[%s137 + $0x1b70] sm:$0xff] %v2044
        %3069 = vst [vmem:[%s137 + $0x1b78] sm:$0xff] %v2045
        %3070 = vst [vmem:[%s137 + $0x1b80] sm:$0xff] %v2046
        %3071 = vst [vmem:[%s137 + $0x1b88] sm:$0xff] %v2047
        %3072 = vst [vmem:[%s137 + $0x1b90] sm:$0xff] %v2048
        %3073 = vst [vmem:[%s137 + $0x1b98] sm:$0xff] %v2049
        %3074 = vst [vmem:[%s137 + $0x1ba0] sm:$0xff] %v2050
        %3075 = vst [vmem:[%s137 + $0x1ba8] sm:$0xff] %v2051
        %3076 = vst [vmem:[%s137 + $0x1bb0] sm:$0xff] %v2052
        %3077 = vst [vmem:[%s137 + $0x1bb8] sm:$0xff] %v2053
        %3078 = vst [vmem:[%s137 + $0x1bc0] sm:$0xff] %v2054
        %3079 = vst [vmem:[%s137 + $0x1bc8] sm:$0xff] %v2055
        %3080 = vst [vmem:[%s137 + $0x1bd0] sm:$0xff] %v2056
        %3081 = vst [vmem:[%s137 + $0x1bd8] sm:$0xff] %v2057
        %3082 = vst [vmem:[%s137 + $0x1be0] sm:$0xff] %v2058
        %3083 = vst [vmem:[%s137 + $0x1be8] sm:$0xff] %v2059
        %3084 = vst [vmem:[%s137 + $0x1bf0] sm:$0xff] %v2060
        %3085 = vst [vmem:[%s137 + $0x1bf8] sm:$0xff] %v2061
        %3086 = vst [vmem:[%s137 + $0x1c00] sm:$0xff] %v2062
        %3087 = vst [vmem:[%s137 + $0x1c08] sm:$0xff] %v2063
        %3088 = vst [vmem:[%s137 + $0x1c10] sm:$0xff] %v2064
        %3089 = vst [vmem:[%s137 + $0x1c18] sm:$0xff] %v2065
        %3090 = vst [vmem:[%s137 + $0x1c20] sm:$0xff] %v2066
        %3091 = vst [vmem:[%s137 + $0x1c28] sm:$0xff] %v2067
        %3092 = vst [vmem:[%s137 + $0x1c30] sm:$0xff] %v2068
        %3093 = vst [vmem:[%s137 + $0x1c38] sm:$0xff] %v2069
        %3094 = vst [vmem:[%s137 + $0x1c40] sm:$0xff] %v2070
        %3095 = vst [vmem:[%s137 + $0x1c48] sm:$0xff] %v2071
        %3096 = vst [vmem:[%s137 + $0x1c50] sm:$0xff] %v2072
        %3097 = vst [vmem:[%s137 + $0x1c58] sm:$0xff] %v2073
        %3098 = vst [vmem:[%s137 + $0x1c60] sm:$0xff] %v2074
        %3099 = vst [vmem:[%s137 + $0x1c68] sm:$0xff] %v2075
        %3100 = vst [vmem:[%s137 + $0x1c70] sm:$0xff] %v2076
        %3101 = vst [vmem:[%s137 + $0x1c78] sm:$0xff] %v2077
        %3102 = vst [vmem:[%s137 + $0x1c80] sm:$0xff] %v2078
        %3103 = vst [vmem:[%s137 + $0x1c88] sm:$0xff] %v2079
        %3104 = vst [vmem:[%s137 + $0x1c90] sm:$0xff] %v2080
        %3105 = vst [vmem:[%s137 + $0x1c98] sm:$0xff] %v2081
        %3106 = vst [vmem:[%s137 + $0x1ca0] sm:$0xff] %v2082
        %3107 = vst [vmem:[%s137 + $0x1ca8] sm:$0xff] %v2083
        %3108 = vst [vmem:[%s137 + $0x1cb0] sm:$0xff] %v2084
        %3109 = vst [vmem:[%s137 + $0x1cb8] sm:$0xff] %v2085
        %3110 = vst [vmem:[%s137 + $0x1cc0] sm:$0xff] %v2086
        %3111 = vst [vmem:[%s137 + $0x1cc8] sm:$0xff] %v2087
        %3112 = vst [vmem:[%s137 + $0x1cd0] sm:$0xff] %v2088
        %3113 = vst [vmem:[%s137 + $0x1cd8] sm:$0xff] %v2089
        %3114 = vst [vmem:[%s137 + $0x1ce0] sm:$0xff] %v2090
        %3115 = vst [vmem:[%s137 + $0x1ce8] sm:$0xff] %v2091
        %3116 = vst [vmem:[%s137 + $0x1cf0] sm:$0xff] %v2092
        %3117 = vst [vmem:[%s137 + $0x1cf8] sm:$0xff] %v2093
        %3118 = vst [vmem:[%s137 + $0x1d00] sm:$0xff] %v2094
        %3119 = vst [vmem:[%s137 + $0x1d08] sm:$0xff] %v2095
        %3120 = vst [vmem:[%s137 + $0x1d10] sm:$0xff] %v2096
        %3121 = vst [vmem:[%s137 + $0x1d18] sm:$0xff] %v2097
        %3122 = vst [vmem:[%s137 + $0x1d20] sm:$0xff] %v2098
        %3123 = vst [vmem:[%s137 + $0x1d28] sm:$0xff] %v2099
        %3124 = vst [vmem:[%s137 + $0x1d30] sm:$0xff] %v2100
        %3125 = vst [vmem:[%s137 + $0x1d38] sm:$0xff] %v2101
        %3126 = vst [vmem:[%s137 + $0x1d40] sm:$0xff] %v2102
        %3127 = vst [vmem:[%s137 + $0x1d48] sm:$0xff] %v2103
        %3128 = vst [vmem:[%s137 + $0x1d50] sm:$0xff] %v2104
        %3129 = vst [vmem:[%s137 + $0x1d58] sm:$0xff] %v2105
        %3130 = vst [vmem:[%s137 + $0x1d60] sm:$0xff] %v2106
        %3131 = vst [vmem:[%s137 + $0x1d68] sm:$0xff] %v2107
        %3132 = vst [vmem:[%s137 + $0x1d70] sm:$0xff] %v2108
        %3133 = vst [vmem:[%s137 + $0x1d78] sm:$0xff] %v2109
        %3134 = vst [vmem:[%s137 + $0x1d80] sm:$0xff] %v2110
        %3135 = vst [vmem:[%s137 + $0x1d88] sm:$0xff] %v2111
        %3136 = vst [vmem:[%s137 + $0x1d90] sm:$0xff] %v2112
        %3137 = vst [vmem:[%s137 + $0x1d98] sm:$0xff] %v2113
        %3138 = vst [vmem:[%s137 + $0x1da0] sm:$0xff] %v2114
        %3139 = vst [vmem:[%s137 + $0x1da8] sm:$0xff] %v2115
        %3140 = vst [vmem:[%s137 + $0x1db0] sm:$0xff] %v2116
        %3141 = vst [vmem:[%s137 + $0x1db8] sm:$0xff] %v2117
        %3142 = vst [vmem:[%s137 + $0x1dc0] sm:$0xff] %v2118
        %3143 = vst [vmem:[%s137 + $0x1dc8] sm:$0xff] %v2119
        %3144 = vst [vmem:[%s137 + $0x1dd0] sm:$0xff] %v2120
        %3145 = vst [vmem:[%s137 + $0x1dd8] sm:$0xff] %v2121
        %3146 = vst [vmem:[%s137 + $0x1de0] sm:$0xff] %v2122
        %3147 = vst [vmem:[%s137 + $0x1de8] sm:$0xff] %v2123
        %3148 = vst [vmem:[%s137 + $0x1df0] sm:$0xff] %v2124
        %3149 = vst [vmem:[%s137 + $0x1df8] sm:$0xff] %v2125
        %3150 = vst [vmem:[%s137 + $0x1e00] sm:$0xff] %v2126
        %3151 = vst [vmem:[%s137 + $0x1e08] sm:$0xff] %v2127
        %3152 = vst [vmem:[%s137 + $0x1e10] sm:$0xff] %v2128
        %3153 = vst [vmem:[%s137 + $0x1e18] sm:$0xff] %v2129
        %3154 = vst [vmem:[%s137 + $0x1e20] sm:$0xff] %v2130
        %3155 = vst [vmem:[%s137 + $0x1e28] sm:$0xff] %v2131
        %3156 = vst [vmem:[%s137 + $0x1e30] sm:$0xff] %v2132
        %3157 = vst [vmem:[%s137 + $0x1e38] sm:$0xff] %v2133
        %3158 = vst [vmem:[%s137 + $0x1e40] sm:$0xff] %v2134
        %3159 = vst [vmem:[%s137 + $0x1e48] sm:$0xff] %v2135
        %3160 = vst [vmem:[%s137 + $0x1e50] sm:$0xff] %v2136
        %3161 = vst [vmem:[%s137 + $0x1e58] sm:$0xff] %v2137
        %3162 = vst [vmem:[%s137 + $0x1e60] sm:$0xff] %v2138
        %3163 = vst [vmem:[%s137 + $0x1e68] sm:$0xff] %v2139
        %3164 = vst [vmem:[%s137 + $0x1e70] sm:$0xff] %v2140
        %3165 = vst [vmem:[%s137 + $0x1e78] sm:$0xff] %v2141
        %3166 = vst [vmem:[%s137 + $0x1e80] sm:$0xff] %v2142
        %3167 = vst [vmem:[%s137 + $0x1e88] sm:$0xff] %v2143
        %3168 = vst [vmem:[%s137 + $0x1e90] sm:$0xff] %v2144
        %3169 = vst [vmem:[%s137 + $0x1e98] sm:$0xff] %v2145
        %3170 = vst [vmem:[%s137 + $0x1ea0] sm:$0xff] %v2146
        %3171 = vst [vmem:[%s137 + $0x1ea8] sm:$0xff] %v2147
        %3172 = vst [vmem:[%s137 + $0x1eb0] sm:$0xff] %v2148
        %3173 = vst [vmem:[%s137 + $0x1eb8] sm:$0xff] %v2149
        %3174 = vst [vmem:[%s137 + $0x1ec0] sm:$0xff] %v2150
        %3175 = vst [vmem:[%s137 + $0x1ec8] sm:$0xff] %v2151
        %3176 = vst [vmem:[%s137 + $0x1ed0] sm:$0xff] %v2152
        %3177 = vst [vmem:[%s137 + $0x1ed8] sm:$0xff] %v2153
        %3178 = vst [vmem:[%s137 + $0x1ee0] sm:$0xff] %v2154
        %3179 = vst [vmem:[%s137 + $0x1ee8] sm:$0xff] %v2155
        %3180 = vst [vmem:[%s137 + $0x1ef0] sm:$0xff] %v2156
        %3181 = vst [vmem:[%s137 + $0x1ef8] sm:$0xff] %v2157
        %3182 = vst [vmem:[%s137 + $0x1f00] sm:$0xff] %v2158
        %3183 = vst [vmem:[%s137 + $0x1f08] sm:$0xff] %v2159
        %3184 = vst [vmem:[%s137 + $0x1f10] sm:$0xff] %v2160
        %3185 = vst [vmem:[%s137 + $0x1f18] sm:$0xff] %v2161
        %3186 = vst [vmem:[%s137 + $0x1f20] sm:$0xff] %v2162
        %3187 = vst [vmem:[%s137 + $0x1f28] sm:$0xff] %v2163
        %3188 = vst [vmem:[%s137 + $0x1f30] sm:$0xff] %v2164
        %3189 = vst [vmem:[%s137 + $0x1f38] sm:$0xff] %v2165
        %3190 = vst [vmem:[%s137 + $0x1f40] sm:$0xff] %v2166
        %3191 = vst [vmem:[%s137 + $0x1f48] sm:$0xff] %v2167
        %3192 = vst [vmem:[%s137 + $0x1f50] sm:$0xff] %v2168
        %3193 = vst [vmem:[%s137 + $0x1f58] sm:$0xff] %v2169
        %3194 = vst [vmem:[%s137 + $0x1f60] sm:$0xff] %v2170
        %3195 = vst [vmem:[%s137 + $0x1f68] sm:$0xff] %v2171
        %3196 = vst [vmem:[%s137 + $0x1f70] sm:$0xff] %v2172
        %3197 = vst [vmem:[%s137 + $0x1f78] sm:$0xff] %v2173
        %3198 = vst [vmem:[%s137 + $0x1f80] sm:$0xff] %v2174
        %3199 = vst [vmem:[%s137 + $0x1f88] sm:$0xff] %v2175
        %3200 = vst [vmem:[%s137 + $0x1f90] sm:$0xff] %v2176
        %3201 = vst [vmem:[%s137 + $0x1f98] sm:$0xff] %v2177
        %3202 = vst [vmem:[%s137 + $0x1fa0] sm:$0xff] %v2178
        %3203 = vst [vmem:[%s137 + $0x1fa8] sm:$0xff] %v2179
        %3204 = vst [vmem:[%s137 + $0x1fb0] sm:$0xff] %v2180
        %3205 = vst [vmem:[%s137 + $0x1fb8] sm:$0xff] %v2181
        %3206 = vst [vmem:[%s137 + $0x1fc0] sm:$0xff] %v2182
        %3207 = vst [vmem:[%s137 + $0x1fc8] sm:$0xff] %v2183
        %3208 = vst [vmem:[%s137 + $0x1fd0] sm:$0xff] %v2184
        %3209 = vst [vmem:[%s137 + $0x1fd8] sm:$0xff] %v2185
        %3210 = vst [vmem:[%s137 + $0x1fe0] sm:$0xff] %v2186
        %3211 = vst [vmem:[%s137 + $0x1fe8] sm:$0xff] %v2187
        %3212 = vst [vmem:[%s137 + $0x1ff0] sm:$0xff] %v2188
        %3213 = vst [vmem:[%s137 + $0x1ff8] sm:$0xff] %v2189
        %s3214 = sand.u32 %s54, 1
        %s3215 = scalar_lea.sflag [#allocation6], %s3214
        %s3216 = sand.u32 %s54, 1
        %s3217 = smul.addr %s3216, 8192
        %s3218 = scalar_lea.vmem [#allocation7], %s3217
        // Predicated region
        $region29: #{tpu_custom_call.1} parent=23 // pred_check
          %p3219 = pneg %p64
        $region30: #{tpu_custom_call.1} parent=23 // pred_check_branch
          %3221 = sbr.rel (%p3219) target = $region32
        $region31: #{tpu_custom_call.1} parent=23 // pred_region
          %s3222 = smul.u32 128, %s20
          %s3224 = ssub.s32 131072, 131072
          %3225 = vsyncadd %s3215, %s3224
          %s3226 = smul.addr %s3222, 8
          %s3227 = smul.addr %s3226, 128
          %s3228 = scalar_lea.hbm %s2, %s3227
          %s3229 = sshll.u32 %s3218, 4
          %s3230 = int_to_ptr.vmem [resolvable:$true] %s3229
          %3235 = dma.vmem_to_hbm [thread:$0]  %s3230, 131072, %s3228, %s3215, 1024, 1024, 64
        $region32: #{tpu_custom_call.1} parent=23 // pred_fallthru
          _
      $region24: #{tpu_custom_call.1} parent=5 // pred_fallthru
        _
      %p3236 = scmp.le.s32.totalorder 2, %s15
      // Predicated region
      $region33: #{tpu_custom_call.1} parent=5 // pred_check
        %p3237 = pneg %p3236
      $region34: #{tpu_custom_call.1} parent=5 // pred_check_branch
        %3239 = sbr.rel (%p3237) target = $region36
      $region35: #{tpu_custom_call.1} parent=5 // pred_region
        %s3240 = ssub.s32 %s15, 2
        // Predicated region
        $region37: #{tpu_custom_call.1} parent=35 // pred_check
          %p3241 = pneg %p70
        $region38: #{tpu_custom_call.1} parent=35 // pred_check_branch
          %3243 = sbr.rel (%p3241) target = $region40
        $region39: #{tpu_custom_call.1} parent=35 // pred_region
          %s3244 = sand.u32 %s55, 1
          %s3245 = scalar_lea.sflag [#allocation6], %s3244
          %s3246 = sand.u32 %s55, 1
          %s3247 = smul.addr %s3246, 8192
          %s3248 = scalar_lea.vmem [#allocation7], %s3247
          %3249 = dma.done %s3245, 131072
        $region40: #{tpu_custom_call.1} parent=35 // pred_fallthru
          _
      $region36: #{tpu_custom_call.1} parent=5 // pred_fallthru
        _
    $region6: #{tpu_custom_call.1} parent=1 // loop_footer
      %s19 = sadd.s32 1, %s15
    $region7: #{tpu_custom_call.1} parent=1 // loop_footer_branch
      %14 = sbr.rel target = $region3
    $region8: #{tpu_custom_call.1} parent=1 // loop_exit
      _
    %3250 = vsyncpa [#allocation5], 1
    %s3251 = scalar_lea.sflag [#allocation5], 1
    %3252 = vsyncpa %s3251, 1
    %3253 = vsyncpa [#allocation6], 1
    %s3254 = scalar_lea.sflag [#allocation6], 1
    %3255 = vsyncpa %s3254, 1

</llo_original>
